<compile_context>
chip_gen: v5e
topology: v5e:2x2
jax: 0.10.0
libtpu: 0.0.40
codegen_flags: <defaults>
</compile_context>

<pallas_src>
import functools

import jax
import jax.numpy as jnp
from jax.experimental import pallas as pl
from jax.experimental.pallas import tpu as pltpu


# ----------------------------------------------------------------------------
# Config (mirrors the fields the module reads off `cfg`)
# ----------------------------------------------------------------------------
IN_CHANNELS = 32
DEPTH = 4                  # cfg.depth
HIDDEN = 64                # cfg.hidden_channels
OUT_CHANNELS = 32          # cfg.out_channels
SKIPS = (2,)               # cfg.skips
LEAKY_SLOPE = 0.01         # nn.LeakyReLU default (cfg.layer_activation='leaky_relu')
# cfg.activation = 'identity'  -> out_layer is identity


def _round_up(x, m):
    return ((x + m - 1) // m) * m


def _layer_dims(in_channels, depth, hidden, out_channels, skips):
    """Per-layer (fan_in, fan_out), exactly as FeatureEmbedding.__init__."""
    skips = set(skips)
    # Module quirk guards:
    #  * a skip on the final layer would make it output `hidden` instead of
    #    `out_channels` (the skip branch wins in __init__);
    #  * a skip at layer 0 would make forward() concat into a layer built for
    #    `in_channels` (shape error in PyTorch) -> disallow it here too.
    assert depth == 0 or 0 not in skips, "skip at layer 0 is not supported"
    assert depth == 0 or (depth - 1) not in skips or depth == 1, (
        "skip index on the final layer changes the output width")
    dims = []
    for i in range(depth):
        if i == 0:
            dims.append((in_channels, hidden))
        elif i in skips:
            dims.append((hidden + in_channels, hidden))
        elif i == depth - 1:
            dims.append((hidden, out_channels))
        else:
            dims.append((hidden, hidden))
    return dims


# ----------------------------------------------------------------------------
# Pallas kernel: full MLP forward for one tile of rows.
#
# refs = (x_ref, <per-layer (W_i, b_i) refs>, o_ref[, concat_scratch])
#   x_ref : (tile, C_in)  input dtype (f32)      -- natural row-major layout
#   W_i   : (fan_out, fan_in) bf16 (skip layers keep the unsplit fan_in)
#   b_i   : (fan_out, 1)  f32
#   o_ref : (tile, C_out) output dtype           -- natural row-major layout
#   concat_scratch : (C_in + hidden, tile) bf16 VMEM (only if a skip exists)
#
# Internally everything is rows-on-lanes: (channels, tile), tile % 128 == 0.
# ----------------------------------------------------------------------------
def _mlp_kernel(*refs, layer_is_skip, leaky_slope, c_in):
    has_skip = any(layer_is_skip)
    x_ref = refs[0]
    if has_skip:
        concat_ref = refs[-1]
        o_ref = refs[-2]
        p = refs[1:-2]
    else:
        concat_ref = None
        o_ref = refs[-1]
        p = refs[1:-1]

    # (tile, C_in) -> (C_in, tile): in-kernel transpose rides the XLU slot,
    # removing the wrapper-side HBM round trip.  Cast to bf16 for the MXU.
    x0_f32 = jnp.transpose(x_ref[...].astype(jnp.float32))     # (C_in, tile)
    x0_mm = x0_f32.astype(jnp.bfloat16)

    if has_skip:
        # x0 part of the fused skip concat -- written once per tile.
        concat_ref[0:c_in, :] = x0_mm

    h_mm = x0_mm
    h = None
    n_layers = len(layer_is_skip)
    idx = 0
    for i, is_skip in enumerate(layer_is_skip):
        w = p[idx][...]                        # (fan_out, fan_in) bf16
        b = p[idx + 1][...]                    # (fan_out, 1)      f32
        idx += 2
        if is_skip:
            # Fused concat([x0, h]) via sublane-offset store + single K=96 dot.
            concat_ref[c_in:, :] = h_mm
            acc = jnp.dot(w, concat_ref[...],
                          preferred_element_type=jnp.float32)
        else:
            acc = jnp.dot(w, h_mm, preferred_element_type=jnp.float32)

        h = acc + b                            # bias add in f32 (VPU)
        if i < n_layers - 1:
            # layer_activation = leaky_relu: single vmax (+ mul) per element.
            h = jnp.maximum(h, leaky_slope * h)
        h_mm = h.astype(jnp.bfloat16)          # next MXU input

    # out_layer = identity.  Transpose back to row-major and store.
    o_ref[...] = jnp.transpose(h).astype(o_ref.dtype)


def feature_embedding_forward(x, params, *, depth=DEPTH, skips=SKIPS,
                              out_channels=OUT_CHANNELS, tile_n=1024,
                              mxu_dtype=jnp.bfloat16):
    """x: [..., C_in] -> [..., out_channels] (or x unchanged if depth == 0)."""
    if depth == 0:
        return x

    skips = set(skips)
    assert 0 not in skips, "skip at layer 0 is not supported"

    orig_shape = x.shape
    c_in = orig_shape[-1]
    xf = x.reshape(-1, c_in)
    n = xf.shape[0]

    # Row tile: multiple of 128 (lane-dense internal layout), no larger than
    # tile_n, and capped so the grid keeps >= 2 "parallel" steps (keeps both
    # v7x TensorCores busy; on v5e/v6e the cap is harmless).
    half_rows = _round_up(max(1, (n + 1) // 2), 128)
    tile = max(128, min((int(tile_n) // 128) * 128, half_rows))
    n_pad = _round_up(n, tile)
    if n_pad != n:
        # Only the untransposed (N, C_in) array is padded (zeros -> padded
        # rows compute harmlessly and are sliced away below).
        xf = jnp.pad(xf, ((0, n_pad - n), (0, 0)))

    # Build flat inputs + specs.  Weights stay (out, in); skip-layer weights
    # stay UNSPLIT (the kernel does one fused K = c_in + hidden contraction).
    flat_inputs = [xf]
    in_specs = [pl.BlockSpec((tile, c_in), lambda i: (i, 0))]
    layer_is_skip = []
    concat_rows = None
    total_flops = 0
    for i, (w, b) in enumerate(params):
        w = jnp.asarray(w, jnp.float32)                       # (fan_out, fan_in)
        fan_out, fan_in = w.shape
        b2 = jnp.asarray(b, jnp.float32).reshape(-1, 1)       # (fan_out, 1)
        total_flops += 2 * n_pad * fan_in * fan_out

        w_c = w.astype(mxu_dtype)
        flat_inputs += [w_c, b2]
        # Constant index maps -> fetched once, VMEM-resident across the grid.
        in_specs += [pl.BlockSpec(w_c.shape, lambda i: (0, 0)),
                     pl.BlockSpec(b2.shape, lambda i: (0, 0))]

        is_skip = i in skips
        layer_is_skip.append(is_skip)
        if is_skip:
            concat_rows = fan_in                               # c_in + hidden

    scratch_shapes = []
    if concat_rows is not None:
        scratch_shapes.append(pltpu.VMEM((concat_rows, tile), mxu_dtype))

    out_spec = pl.BlockSpec((tile, out_channels), lambda i: (i, 0))
    grid = (n_pad // tile,)

    bytes_accessed = (sum(int(a.size) * a.dtype.itemsize for a in flat_inputs)
                      + n_pad * out_channels * jnp.dtype(x.dtype).itemsize)
    cost = pl.CostEstimate(flops=total_flops, transcendentals=0,
                           bytes_accessed=bytes_accessed)

    kernel = functools.partial(_mlp_kernel,
                               layer_is_skip=tuple(layer_is_skip),
                               leaky_slope=LEAKY_SLOPE,
                               c_in=c_in)

    out_padded = pl.pallas_call(
        kernel,
        out_shape=jax.ShapeDtypeStruct((n_pad, out_channels), x.dtype),
        grid_spec=pltpu.PrefetchScalarGridSpec(
            num_scalar_prefetch=0,
            grid=grid,
            in_specs=in_specs,
            out_specs=out_spec,
            scratch_shapes=scratch_shapes,
        ),
        compiler_params=pltpu.CompilerParams(
            dimension_semantics=("parallel",),
        ),
        cost_estimate=cost,
    )(*flat_inputs)

    out = out_padded[:n] if n_pad != n else out_padded        # (n, out_channels)
    return out.reshape(*orig_shape[:-1], out_channels)


# ----------------------------------------------------------------------------
# Pure-JAX f32 reference (mirrors the PyTorch forward) for correctness checks.
# ----------------------------------------------------------------------------
def _reference_forward(x, params, *, depth=DEPTH, skips=SKIPS):
    x0 = x
    h = x
    for i in range(depth):
        if i in skips:
            h = jnp.concatenate([x0, h], axis=-1)
        w, b = params[i]
        h = h @ w.T + b
        if i < depth - 1:
            h = jnp.where(h > 0, h, LEAKY_SLOPE * h)
    return h


def _init_params(key, dims):
    """Deterministic PyTorch-Linear-style init: U(-1/sqrt(fan_in), 1/sqrt(fan_in))."""
    params = []
    for (fan_in, fan_out) in dims:
        key, kw, kb = jax.random.split(key, 3)
        bound = 1.0 / jnp.sqrt(jnp.float32(fan_in))
        w = jax.random.uniform(kw, (fan_out, fan_in), jnp.float32, -bound, bound)
        b = jax.random.uniform(kb, (fan_out,), jnp.float32, -bound, bound)
        params.append((w, b))
    return params


if __name__ == "__main__":
    key = jax.random.PRNGKey(0)
    kx, kp, kx2 = jax.random.split(key, 3)

    dims = _layer_dims(IN_CHANNELS, DEPTH, HIDDEN, OUT_CHANNELS, SKIPS)
    params = _init_params(kp, dims)

    # Case 1: batch=2, 1024 rays, IN_CHANNELS features -> N=2048 rows,
    # tile=1024 rows, grid of 2 parallel steps (both v7x TCs busy).
    x = jax.random.normal(kx, (2, 1024, IN_CHANNELS), jnp.float32)
    out = jax.block_until_ready(feature_embedding_forward(x, params))
    ref = _reference_forward(x, params)
    assert out.shape == (2, 1024, OUT_CHANNELS), out.shape
    err = float(jnp.max(jnp.abs(out - ref)))
    # bf16 MXU inputs (f32 accumulation) -> relaxed tolerance vs f32 reference.
    assert err < 5e-2, err

    # Case 2: ragged row count (exercises the padding + min-tile path).
    x2 = jax.random.normal(kx2, (3, 50, IN_CHANNELS), jnp.float32)
    out2 = jax.block_until_ready(feature_embedding_forward(x2, params))
    ref2 = _reference_forward(x2, params)
    assert out2.shape == (3, 50, OUT_CHANNELS), out2.shape
    err2 = float(jnp.max(jnp.abs(out2 - ref2)))
    assert err2 < 5e-2, err2

    print("KERNEL_OK")
</pallas_src>

<mosaic_0001>
module attributes {stable_mosaic.version = 11 : i64} {
  func.func @_mlp_kernel(%arg0: i32, %arg1: memref<1024x32xf32, #tpu.memory_space<vmem>>, %arg2: memref<64x32xbf16, #tpu.memory_space<vmem>>, %arg3: memref<64x1xf32, #tpu.memory_space<vmem>>, %arg4: memref<64x64xbf16, #tpu.memory_space<vmem>>, %arg5: memref<64x1xf32, #tpu.memory_space<vmem>>, %arg6: memref<64x96xbf16, #tpu.memory_space<vmem>>, %arg7: memref<64x1xf32, #tpu.memory_space<vmem>>, %arg8: memref<32x64xbf16, #tpu.memory_space<vmem>>, %arg9: memref<32x1xf32, #tpu.memory_space<vmem>>, %arg10: memref<1024x32xf32, #tpu.memory_space<vmem>>, %arg11: memref<96x1024xbf16, #tpu.memory_space<vmem>>) attributes {dimension_semantics = [#tpu.dimension_semantics<parallel>], iteration_bounds = array<i64: 2>, scalar_prefetch = 0 : i64, scratch_operands = 1 : i64, tpu.core_type = #tpu.core_type<tc>, window_params = [{transform_indices = @transform_0, window_bounds = array<i64: 1024, 32>}, {pipeline_mode = #tpu.pipeline_mode<synchronous>, transform_indices = @transform_1, window_bounds = array<i64: 64, 32>}, {pipeline_mode = #tpu.pipeline_mode<synchronous>, transform_indices = @transform_2, window_bounds = array<i64: 64, 1>}, {pipeline_mode = #tpu.pipeline_mode<synchronous>, transform_indices = @transform_3, window_bounds = array<i64: 64, 64>}, {pipeline_mode = #tpu.pipeline_mode<synchronous>, transform_indices = @transform_4, window_bounds = array<i64: 64, 1>}, {pipeline_mode = #tpu.pipeline_mode<synchronous>, transform_indices = @transform_5, window_bounds = array<i64: 64, 96>}, {pipeline_mode = #tpu.pipeline_mode<synchronous>, transform_indices = @transform_6, window_bounds = array<i64: 64, 1>}, {pipeline_mode = #tpu.pipeline_mode<synchronous>, transform_indices = @transform_7, window_bounds = array<i64: 32, 64>}, {pipeline_mode = #tpu.pipeline_mode<synchronous>, transform_indices = @transform_8, window_bounds = array<i64: 32, 1>}, {transform_indices = @transform_9, window_bounds = array<i64: 1024, 32>}]} {
    %c0 = arith.constant 0 : index
    %c0_0 = arith.constant 0 : index
    %0 = vector.load %arg1[%c0, %c0_0] : memref<1024x32xf32, #tpu.memory_space<vmem>>, vector<1024x32xf32>
    %1 = tpu.transpose %0, [1, 0] : vector<1024x32xf32> -> vector<32x1024xf32>
    %2 = arith.truncf %1 : vector<32x1024xf32> to vector<32x1024xbf16>
    %c0_1 = arith.constant 0 : index
    %c0_2 = arith.constant 0 : index
    %3 = vector.load %arg11[%c0_1, %c0_2] : memref<96x1024xbf16, #tpu.memory_space<vmem>>, vector<32x1024xbf16>
    tpu.vector_store %arg11[%c0_1, %c0_2], %2 {strides = array<i32>} : memref<96x1024xbf16, #tpu.memory_space<vmem>>, vector<32x1024xbf16>,
    %c0_3 = arith.constant 0 : index
    %c0_4 = arith.constant 0 : index
    %4 = vector.load %arg2[%c0_3, %c0_4] : memref<64x32xbf16, #tpu.memory_space<vmem>>, vector<64x32xbf16>
    %c0_5 = arith.constant 0 : index
    %c0_6 = arith.constant 0 : index
    %5 = vector.load %arg3[%c0_5, %c0_6] : memref<64x1xf32, #tpu.memory_space<vmem>>, vector<64x1xf32>
    %cst = arith.constant dense<0.000000e+00> : vector<64x1024xf32>
    %6 = tpu.matmul %4, %2, %cst {dimension_numbers = #tpu.dot_dimension_numbers<[1], [0], [0], [1], [0, 0, 1, 1], [], []>} : vector<64x32xbf16>, vector<32x1024xbf16>, vector<64x1024xf32> -> vector<64x1024xf32>
    %7 = vector.broadcast %5 : vector<64x1xf32> to vector<64x1024xf32>
    %8 = arith.addf %6, %7 : vector<64x1024xf32>
    %cst_7 = arith.constant 0.00999999977 : f32
    %9 = vector.broadcast %cst_7 : f32 to vector<64x1024xf32>
    %10 = arith.mulf %9, %8 : vector<64x1024xf32>
    %11 = arith.maximumf %8, %10 : vector<64x1024xf32>
    %12 = arith.truncf %11 : vector<64x1024xf32> to vector<64x1024xbf16>
    %c0_8 = arith.constant 0 : index
    %c0_9 = arith.constant 0 : index
    %13 = vector.load %arg4[%c0_8, %c0_9] : memref<64x64xbf16, #tpu.memory_space<vmem>>, vector<64x64xbf16>
    %c0_10 = arith.constant 0 : index
    %c0_11 = arith.constant 0 : index
    %14 = vector.load %arg5[%c0_10, %c0_11] : memref<64x1xf32, #tpu.memory_space<vmem>>, vector<64x1xf32>
    %cst_12 = arith.constant dense<0.000000e+00> : vector<64x1024xf32>
    %15 = tpu.matmul %13, %12, %cst_12 {dimension_numbers = #tpu.dot_dimension_numbers<[1], [0], [0], [1], [0, 0, 1, 1], [], []>} : vector<64x64xbf16>, vector<64x1024xbf16>, vector<64x1024xf32> -> vector<64x1024xf32>
    %16 = vector.broadcast %14 : vector<64x1xf32> to vector<64x1024xf32>
    %17 = arith.addf %15, %16 : vector<64x1024xf32>
    %cst_13 = arith.constant 0.00999999977 : f32
    %18 = vector.broadcast %cst_13 : f32 to vector<64x1024xf32>
    %19 = arith.mulf %18, %17 : vector<64x1024xf32>
    %20 = arith.maximumf %17, %19 : vector<64x1024xf32>
    %21 = arith.truncf %20 : vector<64x1024xf32> to vector<64x1024xbf16>
    %c0_14 = arith.constant 0 : index
    %c0_15 = arith.constant 0 : index
    %22 = vector.load %arg6[%c0_14, %c0_15] : memref<64x96xbf16, #tpu.memory_space<vmem>>, vector<64x96xbf16>
    %c0_16 = arith.constant 0 : index
    %c0_17 = arith.constant 0 : index
    %23 = vector.load %arg7[%c0_16, %c0_17] : memref<64x1xf32, #tpu.memory_space<vmem>>, vector<64x1xf32>
    %c32 = arith.constant 32 : index
    %c0_18 = arith.constant 0 : index
    %24 = vector.load %arg11[%c32, %c0_18] : memref<96x1024xbf16, #tpu.memory_space<vmem>>, vector<64x1024xbf16>
    tpu.vector_store %arg11[%c32, %c0_18], %21 {strides = array<i32>} : memref<96x1024xbf16, #tpu.memory_space<vmem>>, vector<64x1024xbf16>,
    %c0_19 = arith.constant 0 : index
    %c0_20 = arith.constant 0 : index
    %25 = vector.load %arg11[%c0_19, %c0_20] : memref<96x1024xbf16, #tpu.memory_space<vmem>>, vector<96x1024xbf16>
    %cst_21 = arith.constant dense<0.000000e+00> : vector<64x1024xf32>
    %26 = tpu.matmul %22, %25, %cst_21 {dimension_numbers = #tpu.dot_dimension_numbers<[1], [0], [0], [1], [0, 0, 1, 1], [], []>} : vector<64x96xbf16>, vector<96x1024xbf16>, vector<64x1024xf32> -> vector<64x1024xf32>
    %27 = vector.broadcast %23 : vector<64x1xf32> to vector<64x1024xf32>
    %28 = arith.addf %26, %27 : vector<64x1024xf32>
    %cst_22 = arith.constant 0.00999999977 : f32
    %29 = vector.broadcast %cst_22 : f32 to vector<64x1024xf32>
    %30 = arith.mulf %29, %28 : vector<64x1024xf32>
    %31 = arith.maximumf %28, %30 : vector<64x1024xf32>
    %32 = arith.truncf %31 : vector<64x1024xf32> to vector<64x1024xbf16>
    %c0_23 = arith.constant 0 : index
    %c0_24 = arith.constant 0 : index
    %33 = vector.load %arg8[%c0_23, %c0_24] : memref<32x64xbf16, #tpu.memory_space<vmem>>, vector<32x64xbf16>
    %c0_25 = arith.constant 0 : index
    %c0_26 = arith.constant 0 : index
    %34 = vector.load %arg9[%c0_25, %c0_26] : memref<32x1xf32, #tpu.memory_space<vmem>>, vector<32x1xf32>
    %cst_27 = arith.constant dense<0.000000e+00> : vector<32x1024xf32>
    %35 = tpu.matmul %33, %32, %cst_27 {dimension_numbers = #tpu.dot_dimension_numbers<[1], [0], [0], [1], [0, 0, 1, 1], [], []>} : vector<32x64xbf16>, vector<64x1024xbf16>, vector<32x1024xf32> -> vector<32x1024xf32>
    %36 = vector.broadcast %34 : vector<32x1xf32> to vector<32x1024xf32>
    %37 = arith.addf %35, %36 : vector<32x1024xf32>
    %38 = tpu.transpose %37, [1, 0] : vector<32x1024xf32> -> vector<1024x32xf32>
    %c0_28 = arith.constant 0 : index
    %c0_29 = arith.constant 0 : index
    %39 = vector.load %arg10[%c0_28, %c0_29] : memref<1024x32xf32, #tpu.memory_space<vmem>>, vector<1024x32xf32>
    tpu.vector_store %arg10[%c0_28, %c0_29], %38 {strides = array<i32>} : memref<1024x32xf32, #tpu.memory_space<vmem>>, vector<1024x32xf32>,
    return
  }
  func.func @transform_0(%arg0: i32) -> (i32, i32) {
    %c0_i32 = arith.constant 0 : i32
    %c0_i32_0 = arith.constant 0 : i32
    return %arg0, %c0_i32 : i32, i32
  }
  func.func @transform_1(%arg0: i32) -> (i32, i32) {
    %c0_i32 = arith.constant 0 : i32
    %c0_i32_0 = arith.constant 0 : i32
    %c0_i32_1 = arith.constant 0 : i32
    return %c0_i32, %c0_i32_0 : i32, i32
  }
  func.func @transform_2(%arg0: i32) -> (i32, i32) {
    %c0_i32 = arith.constant 0 : i32
    %c0_i32_0 = arith.constant 0 : i32
    %c0_i32_1 = arith.constant 0 : i32
    return %c0_i32, %c0_i32_0 : i32, i32
  }
  func.func @transform_3(%arg0: i32) -> (i32, i32) {
    %c0_i32 = arith.constant 0 : i32
    %c0_i32_0 = arith.constant 0 : i32
    %c0_i32_1 = arith.constant 0 : i32
    return %c0_i32, %c0_i32_0 : i32, i32
  }
  func.func @transform_4(%arg0: i32) -> (i32, i32) {
    %c0_i32 = arith.constant 0 : i32
    %c0_i32_0 = arith.constant 0 : i32
    %c0_i32_1 = arith.constant 0 : i32
    return %c0_i32, %c0_i32_0 : i32, i32
  }
  func.func @transform_5(%arg0: i32) -> (i32, i32) {
    %c0_i32 = arith.constant 0 : i32
    %c0_i32_0 = arith.constant 0 : i32
    %c0_i32_1 = arith.constant 0 : i32
    return %c0_i32, %c0_i32_0 : i32, i32
  }
  func.func @transform_6(%arg0: i32) -> (i32, i32) {
    %c0_i32 = arith.constant 0 : i32
    %c0_i32_0 = arith.constant 0 : i32
    %c0_i32_1 = arith.constant 0 : i32
    return %c0_i32, %c0_i32_0 : i32, i32
  }
  func.func @transform_7(%arg0: i32) -> (i32, i32) {
    %c0_i32 = arith.constant 0 : i32
    %c0_i32_0 = arith.constant 0 : i32
    %c0_i32_1 = arith.constant 0 : i32
    return %c0_i32, %c0_i32_0 : i32, i32
  }
  func.func @transform_8(%arg0: i32) -> (i32, i32) {
    %c0_i32 = arith.constant 0 : i32
    %c0_i32_0 = arith.constant 0 : i32
    %c0_i32_1 = arith.constant 0 : i32
    return %c0_i32, %c0_i32_0 : i32, i32
  }
  func.func @transform_9(%arg0: i32) -> (i32, i32) {
    %c0_i32 = arith.constant 0 : i32
    %c0_i32_0 = arith.constant 0 : i32
    return %arg0, %c0_i32 : i32, i32
  }
}

</mosaic_0001>

<llo_original>
// kernel: tpu_custom_call.1
$region0: #{tpu_custom_call.1}
  #allocation0 [shape = 'u32[]', space=smem, size = 0x4, offset = 0x4, fixed_abs, tag = 'smem constant byte address 0x4 - core index']
  #allocation1 [shape = 'u32[72,128]{1,0:T(1,128)}', space=vmem, size = 0x9000, scoped, tag = 'internal scratch']
  #allocation2 [shape = 'bf16[96,1024]{1,0:T(8,128)(2,1)}', space=vmem, size = 0x30000, scoped, tag = 'scratch operand']
  %s0 = inlined_call_operand.vmem [shape: f32[2048,32], index: 0, kind: input, shape index: {}]
  %s1 = inlined_call_operand.vmem [shape: bf16[64,32], index: 1, kind: input, shape index: {}]
  %s2 = inlined_call_operand.vmem [shape: f32[64,1], index: 2, kind: input, shape index: {}]
  %s3 = inlined_call_operand.vmem [shape: bf16[64,64], index: 3, kind: input, shape index: {}]
  %s4 = inlined_call_operand.vmem [shape: f32[64,1], index: 4, kind: input, shape index: {}]
  %s5 = inlined_call_operand.vmem [shape: bf16[64,96], index: 5, kind: input, shape index: {}]
  %s6 = inlined_call_operand.vmem [shape: f32[64,1], index: 6, kind: input, shape index: {}]
  %s7 = inlined_call_operand.vmem [shape: bf16[32,64], index: 7, kind: input, shape index: {}]
  %s8 = inlined_call_operand.vmem [shape: f32[32,1], index: 8, kind: input, shape index: {}]
  %s9 = inlined_call_operand.vmem [shape: f32[2048,32], index: 9, kind: output, shape index: {}]
  %s10 = sld [smem:[#allocation0]]
  $region69: #{tpu_custom_call.1} parent=0
    _
  %s12 = ssub.s32 1, %s10
  %s13 = scalar_select 0, %s12, %s10
  loop: start=0, step=1, limit=4
  $region2: #{tpu_custom_call.1} parent=0 // loop_pre_header
    _
  $region3: #{tpu_custom_call.1} parent=0 // loop_header
    %s15 = sphi 0, %s19
    %p16 = scmp.ge.s32.totalorder %s15, 4
    %s25 = sphi 0, %s27
    %s28 = sphi 0, %s25
    %s29 = sphi 0, %s28
    %s45 = sphi 0, %s29
    %s49 = sphi 0, %s49
    %s51 = sphi 0, %s49
    %s52 = sphi 0, %s51
    %s66 = sphi 0, %s52
    %s70 = sphi 0, %s70
    %s72 = sphi 0, %s70
    %s73 = sphi 0, %s72
    %s87 = sphi 0, %s73
    %s91 = sphi 0, %s91
    %s93 = sphi 0, %s91
    %s94 = sphi 0, %s93
    %s108 = sphi 0, %s94
    %s112 = sphi 0, %s112
    %s114 = sphi 0, %s112
    %s115 = sphi 0, %s114
    %s129 = sphi 0, %s115
    %s133 = sphi 0, %s133
    %s135 = sphi 0, %s133
    %s136 = sphi 0, %s135
    %s150 = sphi 0, %s136
    %s154 = sphi 0, %s154
    %s156 = sphi 0, %s154
    %s157 = sphi 0, %s156
    %s171 = sphi 0, %s157
    %s175 = sphi 0, %s175
    %s177 = sphi 0, %s175
    %s178 = sphi 0, %s177
    %s192 = sphi 0, %s178
    %s196 = sphi 0, %s196
    %s198 = sphi 0, %s196
    %s199 = sphi 0, %s198
    %s213 = sphi 0, %s199
    %s219 = sphi 0, %s221
    %s222 = sphi 0, %s219
    %s223 = sphi 0, %s222
    %s239 = sphi 0, %s223
  $region4: #{tpu_custom_call.1} parent=0 // loop_header_branch
    %18 = sbr.rel (%p16) target = $region8
  $region5: #{tpu_custom_call.1} parent=0 // loop_body
    %s20 = ssub.s32 %s15, 1
    %s21 = ssub.s32 %s15, 2
    %s22 = sadd.s32 %s15, 1
    %s23 = ssub.s32 %s15, %s22
    %p24 = scmp.eq.s32.totalorder %s23, 0
    %s26 = sadd.s32 %s25, 1
    %s27 = scalar_select %p24, %s25, %s26
    %p30 = pneg %p24
    %p31 = scmp.eq.s32.totalorder %s15, 1
    %p32 = por %p30, %p31
    %p33 = scmp.ne.s32.totalorder %s25, %s28
    %p34 = scmp.eq.s32.totalorder %s15, 0
    %p35 = por %p33, %p34
    %p36 = scmp.ne.s32.totalorder %s25, %s28
    %p37 = scmp.eq.s32.totalorder %s20, 1
    %p38 = por %p36, %p37
    %p39 = scmp.ne.s32.totalorder %s28, %s29
    %p40 = scmp.eq.s32.totalorder %s20, 0
    %p41 = por %p39, %p40
    %p42 = scmp.ne.s32.totalorder %s28, %s29
    %p43 = scmp.eq.s32.totalorder %s21, 1
    %p44 = por %p42, %p43
    %p46 = scmp.ne.s32.totalorder %s29, %s45
    %p47 = scmp.eq.s32.totalorder %s21, 0
    %p48 = por %p46, %p47
    %s50 = sadd.s32 %s49, 1
    %p53 = scmp.eq.s32.totalorder %s15, 1
    %p54 = scmp.ne.s32.totalorder %s49, %s51
    %p55 = scmp.eq.s32.totalorder %s15, 0
    %p56 = por %p54, %p55
    %p57 = scmp.ne.s32.totalorder %s49, %s51
    %p58 = scmp.eq.s32.totalorder %s20, 1
    %p59 = por %p57, %p58
    %p60 = scmp.ne.s32.totalorder %s51, %s52
    %p61 = scmp.eq.s32.totalorder %s20, 0
    %p62 = por %p60, %p61
    %p63 = scmp.ne.s32.totalorder %s51, %s52
    %p64 = scmp.eq.s32.totalorder %s21, 1
    %p65 = por %p63, %p64
    %p67 = scmp.ne.s32.totalorder %s52, %s66
    %p68 = scmp.eq.s32.totalorder %s21, 0
    %p69 = por %p67, %p68
    %s71 = sadd.s32 %s70, 1
    %p74 = scmp.eq.s32.totalorder %s15, 1
    %p75 = scmp.ne.s32.totalorder %s70, %s72
    %p76 = scmp.eq.s32.totalorder %s15, 0
    %p77 = por %p75, %p76
    %p78 = scmp.ne.s32.totalorder %s70, %s72
    %p79 = scmp.eq.s32.totalorder %s20, 1
    %p80 = por %p78, %p79
    %p81 = scmp.ne.s32.totalorder %s72, %s73
    %p82 = scmp.eq.s32.totalorder %s20, 0
    %p83 = por %p81, %p82
    %p84 = scmp.ne.s32.totalorder %s72, %s73
    %p85 = scmp.eq.s32.totalorder %s21, 1
    %p86 = por %p84, %p85
    %p88 = scmp.ne.s32.totalorder %s73, %s87
    %p89 = scmp.eq.s32.totalorder %s21, 0
    %p90 = por %p88, %p89
    %s92 = sadd.s32 %s91, 1
    %p95 = scmp.eq.s32.totalorder %s15, 1
    %p96 = scmp.ne.s32.totalorder %s91, %s93
    %p97 = scmp.eq.s32.totalorder %s15, 0
    %p98 = por %p96, %p97
    %p99 = scmp.ne.s32.totalorder %s91, %s93
    %p100 = scmp.eq.s32.totalorder %s20, 1
    %p101 = por %p99, %p100
    %p102 = scmp.ne.s32.totalorder %s93, %s94
    %p103 = scmp.eq.s32.totalorder %s20, 0
    %p104 = por %p102, %p103
    %p105 = scmp.ne.s32.totalorder %s93, %s94
    %p106 = scmp.eq.s32.totalorder %s21, 1
    %p107 = por %p105, %p106
    %p109 = scmp.ne.s32.totalorder %s94, %s108
    %p110 = scmp.eq.s32.totalorder %s21, 0
    %p111 = por %p109, %p110
    %s113 = sadd.s32 %s112, 1
    %p116 = scmp.eq.s32.totalorder %s15, 1
    %p117 = scmp.ne.s32.totalorder %s112, %s114
    %p118 = scmp.eq.s32.totalorder %s15, 0
    %p119 = por %p117, %p118
    %p120 = scmp.ne.s32.totalorder %s112, %s114
    %p121 = scmp.eq.s32.totalorder %s20, 1
    %p122 = por %p120, %p121
    %p123 = scmp.ne.s32.totalorder %s114, %s115
    %p124 = scmp.eq.s32.totalorder %s20, 0
    %p125 = por %p123, %p124
    %p126 = scmp.ne.s32.totalorder %s114, %s115
    %p127 = scmp.eq.s32.totalorder %s21, 1
    %p128 = por %p126, %p127
    %p130 = scmp.ne.s32.totalorder %s115, %s129
    %p131 = scmp.eq.s32.totalorder %s21, 0
    %p132 = por %p130, %p131
    %s134 = sadd.s32 %s133, 1
    %p137 = scmp.eq.s32.totalorder %s15, 1
    %p138 = scmp.ne.s32.totalorder %s133, %s135
    %p139 = scmp.eq.s32.totalorder %s15, 0
    %p140 = por %p138, %p139
    %p141 = scmp.ne.s32.totalorder %s133, %s135
    %p142 = scmp.eq.s32.totalorder %s20, 1
    %p143 = por %p141, %p142
    %p144 = scmp.ne.s32.totalorder %s135, %s136
    %p145 = scmp.eq.s32.totalorder %s20, 0
    %p146 = por %p144, %p145
    %p147 = scmp.ne.s32.totalorder %s135, %s136
    %p148 = scmp.eq.s32.totalorder %s21, 1
    %p149 = por %p147, %p148
    %p151 = scmp.ne.s32.totalorder %s136, %s150
    %p152 = scmp.eq.s32.totalorder %s21, 0
    %p153 = por %p151, %p152
    %s155 = sadd.s32 %s154, 1
    %p158 = scmp.eq.s32.totalorder %s15, 1
    %p159 = scmp.ne.s32.totalorder %s154, %s156
    %p160 = scmp.eq.s32.totalorder %s15, 0
    %p161 = por %p159, %p160
    %p162 = scmp.ne.s32.totalorder %s154, %s156
    %p163 = scmp.eq.s32.totalorder %s20, 1
    %p164 = por %p162, %p163
    %p165 = scmp.ne.s32.totalorder %s156, %s157
    %p166 = scmp.eq.s32.totalorder %s20, 0
    %p167 = por %p165, %p166
    %p168 = scmp.ne.s32.totalorder %s156, %s157
    %p169 = scmp.eq.s32.totalorder %s21, 1
    %p170 = por %p168, %p169
    %p172 = scmp.ne.s32.totalorder %s157, %s171
    %p173 = scmp.eq.s32.totalorder %s21, 0
    %p174 = por %p172, %p173
    %s176 = sadd.s32 %s175, 1
    %p179 = scmp.eq.s32.totalorder %s15, 1
    %p180 = scmp.ne.s32.totalorder %s175, %s177
    %p181 = scmp.eq.s32.totalorder %s15, 0
    %p182 = por %p180, %p181
    %p183 = scmp.ne.s32.totalorder %s175, %s177
    %p184 = scmp.eq.s32.totalorder %s20, 1
    %p185 = por %p183, %p184
    %p186 = scmp.ne.s32.totalorder %s177, %s178
    %p187 = scmp.eq.s32.totalorder %s20, 0
    %p188 = por %p186, %p187
    %p189 = scmp.ne.s32.totalorder %s177, %s178
    %p190 = scmp.eq.s32.totalorder %s21, 1
    %p191 = por %p189, %p190
    %p193 = scmp.ne.s32.totalorder %s178, %s192
    %p194 = scmp.eq.s32.totalorder %s21, 0
    %p195 = por %p193, %p194
    %s197 = sadd.s32 %s196, 1
    %p200 = scmp.eq.s32.totalorder %s15, 1
    %p201 = scmp.ne.s32.totalorder %s196, %s198
    %p202 = scmp.eq.s32.totalorder %s15, 0
    %p203 = por %p201, %p202
    %p204 = scmp.ne.s32.totalorder %s196, %s198
    %p205 = scmp.eq.s32.totalorder %s20, 1
    %p206 = por %p204, %p205
    %p207 = scmp.ne.s32.totalorder %s198, %s199
    %p208 = scmp.eq.s32.totalorder %s20, 0
    %p209 = por %p207, %p208
    %p210 = scmp.ne.s32.totalorder %s198, %s199
    %p211 = scmp.eq.s32.totalorder %s21, 1
    %p212 = por %p210, %p211
    %p214 = scmp.ne.s32.totalorder %s199, %s213
    %p215 = scmp.eq.s32.totalorder %s21, 0
    %p216 = por %p214, %p215
    %s217 = ssub.s32 %s15, %s22
    %p218 = scmp.eq.s32.totalorder %s217, 0
    %s220 = sadd.s32 %s219, 1
    %s221 = scalar_select %p218, %s219, %s220
    %p224 = pneg %p218
    %p225 = scmp.eq.s32.totalorder %s15, 1
    %p226 = por %p224, %p225
    %p227 = scmp.ne.s32.totalorder %s219, %s222
    %p228 = scmp.eq.s32.totalorder %s15, 0
    %p229 = por %p227, %p228
    %p230 = scmp.ne.s32.totalorder %s219, %s222
    %p231 = scmp.eq.s32.totalorder %s20, 1
    %p232 = por %p230, %p231
    %p233 = scmp.ne.s32.totalorder %s222, %s223
    %p234 = scmp.eq.s32.totalorder %s20, 0
    %p235 = por %p233, %p234
    %p236 = scmp.ne.s32.totalorder %s222, %s223
    %p237 = scmp.eq.s32.totalorder %s21, 1
    %p238 = por %p236, %p237
    %p240 = scmp.ne.s32.totalorder %s223, %s239
    %p241 = scmp.eq.s32.totalorder %s21, 0
    %p242 = por %p240, %p241
    %p243 = scmp.le.s32.totalorder 1, %s15
    %p244 = scmp.lt.s32.totalorder %s15, 3
    %p245 = pnand %p243, %p244
    %p246 = pneg %p245
    // Predicated region
    $region9: #{tpu_custom_call.1} parent=5 // pred_check
      _
    $region10: #{tpu_custom_call.1} parent=5 // pred_check_branch
      %248 = sbr.rel (%p245) target = $region12
    $region11: #{tpu_custom_call.1} parent=5 // pred_region
      %s249 = ssub.s32 %s15, 1
      // Predicated region
      $region13: #{tpu_custom_call.1} parent=11 // pred_check
        %p250 = pneg %p62
      $region14: #{tpu_custom_call.1} parent=11 // pred_check_branch
        %252 = sbr.rel (%p250) target = $region16
      $region15: #{tpu_custom_call.1} parent=11 // pred_region
        _
      $region16: #{tpu_custom_call.1} parent=11 // pred_fallthru
        _
      // Predicated region
      $region17: #{tpu_custom_call.1} parent=11 // pred_check
        %p253 = pneg %p83
      $region18: #{tpu_custom_call.1} parent=11 // pred_check_branch
        %255 = sbr.rel (%p253) target = $region20
      $region19: #{tpu_custom_call.1} parent=11 // pred_region
        _
      $region20: #{tpu_custom_call.1} parent=11 // pred_fallthru
        _
      // Predicated region
      $region21: #{tpu_custom_call.1} parent=11 // pred_check
        %p256 = pneg %p104
      $region22: #{tpu_custom_call.1} parent=11 // pred_check_branch
        %258 = sbr.rel (%p256) target = $region24
      $region23: #{tpu_custom_call.1} parent=11 // pred_region
        _
      $region24: #{tpu_custom_call.1} parent=11 // pred_fallthru
        _
      // Predicated region
      $region25: #{tpu_custom_call.1} parent=11 // pred_check
        %p259 = pneg %p125
      $region26: #{tpu_custom_call.1} parent=11 // pred_check_branch
        %261 = sbr.rel (%p259) target = $region28
      $region27: #{tpu_custom_call.1} parent=11 // pred_region
        _
      $region28: #{tpu_custom_call.1} parent=11 // pred_fallthru
        _
      // Predicated region
      $region29: #{tpu_custom_call.1} parent=11 // pred_check
        %p262 = pneg %p146
      $region30: #{tpu_custom_call.1} parent=11 // pred_check_branch
        %264 = sbr.rel (%p262) target = $region32
      $region31: #{tpu_custom_call.1} parent=11 // pred_region
        _
      $region32: #{tpu_custom_call.1} parent=11 // pred_fallthru
        _
      // Predicated region
      $region33: #{tpu_custom_call.1} parent=11 // pred_check
        %p265 = pneg %p167
      $region34: #{tpu_custom_call.1} parent=11 // pred_check_branch
        %267 = sbr.rel (%p265) target = $region36
      $region35: #{tpu_custom_call.1} parent=11 // pred_region
        _
      $region36: #{tpu_custom_call.1} parent=11 // pred_fallthru
        _
      // Predicated region
      $region37: #{tpu_custom_call.1} parent=11 // pred_check
        %p268 = pneg %p188
      $region38: #{tpu_custom_call.1} parent=11 // pred_check_branch
        %270 = sbr.rel (%p268) target = $region40
      $region39: #{tpu_custom_call.1} parent=11 // pred_region
        _
      $region40: #{tpu_custom_call.1} parent=11 // pred_fallthru
        _
      // Predicated region
      $region41: #{tpu_custom_call.1} parent=11 // pred_check
        %p271 = pneg %p209
      $region42: #{tpu_custom_call.1} parent=11 // pred_check_branch
        %273 = sbr.rel (%p271) target = $region44
      $region43: #{tpu_custom_call.1} parent=11 // pred_region
        _
      $region44: #{tpu_custom_call.1} parent=11 // pred_fallthru
        _
    $region12: #{tpu_custom_call.1} parent=5 // pred_fallthru
      _
    %p274 = scmp.lt.s32.totalorder %s15, 2
    // Predicated region
    $region45: #{tpu_custom_call.1} parent=5 // pred_check
      %p275 = pneg %p274
    $region46: #{tpu_custom_call.1} parent=5 // pred_check_branch
      %277 = sbr.rel (%p275) target = $region48
    $region47: #{tpu_custom_call.1} parent=5 // pred_region
      // Predicated region
      $region49: #{tpu_custom_call.1} parent=47 // pred_check
        %p278 = pneg %p35
      $region50: #{tpu_custom_call.1} parent=47 // pred_check_branch
        %280 = sbr.rel (%p278) target = $region52
      $region51: #{tpu_custom_call.1} parent=47 // pred_region
        %s281 = smul.u32 128, %s15
        %p282 = scmp.lt.s32.totalorder %s281, 255
        %s283 = scalar_select %p282, %s281, 255
        %s284 = smul.addr %s283, 8
        %s285 = scalar_lea.vmem %s0, %s284
        %s286 = smul.u32 128, %s15
      $region52: #{tpu_custom_call.1} parent=47 // pred_fallthru
        _
    $region48: #{tpu_custom_call.1} parent=5 // pred_fallthru
      _
    %p287 = scmp.le.s32.totalorder 1, %s15
    %p288 = scmp.lt.s32.totalorder %s15, 3
    %p289 = pnand %p287, %p288
    %p290 = pneg %p289
    // Predicated region
    $region53: #{tpu_custom_call.1} parent=5 // pred_check
      _
    $region54: #{tpu_custom_call.1} parent=5 // pred_check_branch
      %292 = sbr.rel (%p289) target = $region56
    $region55: #{tpu_custom_call.1} parent=5 // pred_region
      %s293 = ssub.s32 %s15, 1
      %s294 = smul.u32 128, %s20
      %p295 = scmp.lt.s32.totalorder %s294, 255
      %s296 = scalar_select %p295, %s294, 255
      %s297 = smul.addr %s296, 8
      %s298 = scalar_lea.vmem %s0, %s297
      %p299 = pneg %p41
      %p300 = pneg %p38
      %p301 = pneg %p62
      %p302 = pneg %p59
      %p303 = pneg %p83
      %p304 = pneg %p80
      %p305 = pneg %p104
      %p306 = pneg %p101
      %p307 = pneg %p125
      %p308 = pneg %p122
      %p309 = pneg %p146
      %p310 = pneg %p143
      %p311 = pneg %p167
      %p312 = pneg %p164
      %p313 = pneg %p188
      %p314 = pneg %p185
      %p315 = pneg %p209
      %p316 = pneg %p206
      %p317 = pneg %p235
      %p318 = pneg %p232
      %s319 = smul.u32 128, %s20
      %p320 = scmp.lt.s32.totalorder %s319, 255
      %s321 = scalar_select %p320, %s319, 255
      %s322 = smul.addr %s321, 8
      %s323 = scalar_lea.vmem %s9, %s322
      %s324 = smul.u32 128, %s20
      %p325 = scmp.lt.s32.totalorder %s324, 255
      %s326 = scalar_select %p325, %s324, 255
      %s327 = smul.addr %s326, 8
      %s328 = scalar_lea.vmem %s0, %s327
      %s329 = smul.u32 128, %s20
      %s330 = smul.u32 128, %s20
      %p331 = scmp.lt.s32.totalorder %s330, 255
      %s332 = scalar_select %p331, %s330, 255
      %s333 = smul.addr %s332, 8
      %s334 = scalar_lea.vmem %s9, %s333
      %s335 = smul.u32 128, %s20
      %v337 = vld [vmem:[%s328] sm:$0xff]
      %v338 = vld [vmem:[%s328 + $0x8] sm:$0xff]
      %v339 = vld [vmem:[%s328 + $0x10] sm:$0xff]
      %v340 = vld [vmem:[%s328 + $0x18] sm:$0xff]
      %v341 = vld [vmem:[%s328 + $0x20] sm:$0xff]
      %v342 = vld [vmem:[%s328 + $0x28] sm:$0xff]
      %v343 = vld [vmem:[%s328 + $0x30] sm:$0xff]
      %v344 = vld [vmem:[%s328 + $0x38] sm:$0xff]
      %v345 = vld [vmem:[%s328 + $0x40] sm:$0xff]
      %v346 = vld [vmem:[%s328 + $0x48] sm:$0xff]
      %v347 = vld [vmem:[%s328 + $0x50] sm:$0xff]
      %v348 = vld [vmem:[%s328 + $0x58] sm:$0xff]
      %v349 = vld [vmem:[%s328 + $0x60] sm:$0xff]
      %v350 = vld [vmem:[%s328 + $0x68] sm:$0xff]
      %v351 = vld [vmem:[%s328 + $0x70] sm:$0xff]
      %v352 = vld [vmem:[%s328 + $0x78] sm:$0xff]
      %v353 = vld [vmem:[%s328 + $0x80] sm:$0xff]
      %v354 = vld [vmem:[%s328 + $0x88] sm:$0xff]
      %v355 = vld [vmem:[%s328 + $0x90] sm:$0xff]
      %v356 = vld [vmem:[%s328 + $0x98] sm:$0xff]
      %v357 = vld [vmem:[%s328 + $0xa0] sm:$0xff]
      %v358 = vld [vmem:[%s328 + $0xa8] sm:$0xff]
      %v359 = vld [vmem:[%s328 + $0xb0] sm:$0xff]
      %v360 = vld [vmem:[%s328 + $0xb8] sm:$0xff]
      %v361 = vld [vmem:[%s328 + $0xc0] sm:$0xff]
      %v362 = vld [vmem:[%s328 + $0xc8] sm:$0xff]
      %v363 = vld [vmem:[%s328 + $0xd0] sm:$0xff]
      %v364 = vld [vmem:[%s328 + $0xd8] sm:$0xff]
      %v365 = vld [vmem:[%s328 + $0xe0] sm:$0xff]
      %v366 = vld [vmem:[%s328 + $0xe8] sm:$0xff]
      %v367 = vld [vmem:[%s328 + $0xf0] sm:$0xff]
      %v368 = vld [vmem:[%s328 + $0xf8] sm:$0xff]
      %v369 = vld [vmem:[%s328 + $0x100] sm:$0xff]
      %v370 = vld [vmem:[%s328 + $0x108] sm:$0xff]
      %v371 = vld [vmem:[%s328 + $0x110] sm:$0xff]
      %v372 = vld [vmem:[%s328 + $0x118] sm:$0xff]
      %v373 = vld [vmem:[%s328 + $0x120] sm:$0xff]
      %v374 = vld [vmem:[%s328 + $0x128] sm:$0xff]
      %v375 = vld [vmem:[%s328 + $0x130] sm:$0xff]
      %v376 = vld [vmem:[%s328 + $0x138] sm:$0xff]
      %v377 = vld [vmem:[%s328 + $0x140] sm:$0xff]
      %v378 = vld [vmem:[%s328 + $0x148] sm:$0xff]
      %v379 = vld [vmem:[%s328 + $0x150] sm:$0xff]
      %v380 = vld [vmem:[%s328 + $0x158] sm:$0xff]
      %v381 = vld [vmem:[%s328 + $0x160] sm:$0xff]
      %v382 = vld [vmem:[%s328 + $0x168] sm:$0xff]
      %v383 = vld [vmem:[%s328 + $0x170] sm:$0xff]
      %v384 = vld [vmem:[%s328 + $0x178] sm:$0xff]
      %v385 = vld [vmem:[%s328 + $0x180] sm:$0xff]
      %v386 = vld [vmem:[%s328 + $0x188] sm:$0xff]
      %v387 = vld [vmem:[%s328 + $0x190] sm:$0xff]
      %v388 = vld [vmem:[%s328 + $0x198] sm:$0xff]
      %v389 = vld [vmem:[%s328 + $0x1a0] sm:$0xff]
      %v390 = vld [vmem:[%s328 + $0x1a8] sm:$0xff]
      %v391 = vld [vmem:[%s328 + $0x1b0] sm:$0xff]
      %v392 = vld [vmem:[%s328 + $0x1b8] sm:$0xff]
      %v393 = vld [vmem:[%s328 + $0x1c0] sm:$0xff]
      %v394 = vld [vmem:[%s328 + $0x1c8] sm:$0xff]
      %v395 = vld [vmem:[%s328 + $0x1d0] sm:$0xff]
      %v396 = vld [vmem:[%s328 + $0x1d8] sm:$0xff]
      %v397 = vld [vmem:[%s328 + $0x1e0] sm:$0xff]
      %v398 = vld [vmem:[%s328 + $0x1e8] sm:$0xff]
      %v399 = vld [vmem:[%s328 + $0x1f0] sm:$0xff]
      %v400 = vld [vmem:[%s328 + $0x1f8] sm:$0xff]
      %v401 = vld [vmem:[%s328 + $0x200] sm:$0xff]
      %v402 = vld [vmem:[%s328 + $0x208] sm:$0xff]
      %v403 = vld [vmem:[%s328 + $0x210] sm:$0xff]
      %v404 = vld [vmem:[%s328 + $0x218] sm:$0xff]
      %v405 = vld [vmem:[%s328 + $0x220] sm:$0xff]
      %v406 = vld [vmem:[%s328 + $0x228] sm:$0xff]
      %v407 = vld [vmem:[%s328 + $0x230] sm:$0xff]
      %v408 = vld [vmem:[%s328 + $0x238] sm:$0xff]
      %v409 = vld [vmem:[%s328 + $0x240] sm:$0xff]
      %v410 = vld [vmem:[%s328 + $0x248] sm:$0xff]
      %v411 = vld [vmem:[%s328 + $0x250] sm:$0xff]
      %v412 = vld [vmem:[%s328 + $0x258] sm:$0xff]
      %v413 = vld [vmem:[%s328 + $0x260] sm:$0xff]
      %v414 = vld [vmem:[%s328 + $0x268] sm:$0xff]
      %v415 = vld [vmem:[%s328 + $0x270] sm:$0xff]
      %v416 = vld [vmem:[%s328 + $0x278] sm:$0xff]
      %v417 = vld [vmem:[%s328 + $0x280] sm:$0xff]
      %v418 = vld [vmem:[%s328 + $0x288] sm:$0xff]
      %v419 = vld [vmem:[%s328 + $0x290] sm:$0xff]
      %v420 = vld [vmem:[%s328 + $0x298] sm:$0xff]
      %v421 = vld [vmem:[%s328 + $0x2a0] sm:$0xff]
      %v422 = vld [vmem:[%s328 + $0x2a8] sm:$0xff]
      %v423 = vld [vmem:[%s328 + $0x2b0] sm:$0xff]
      %v424 = vld [vmem:[%s328 + $0x2b8] sm:$0xff]
      %v425 = vld [vmem:[%s328 + $0x2c0] sm:$0xff]
      %v426 = vld [vmem:[%s328 + $0x2c8] sm:$0xff]
      %v427 = vld [vmem:[%s328 + $0x2d0] sm:$0xff]
      %v428 = vld [vmem:[%s328 + $0x2d8] sm:$0xff]
      %v429 = vld [vmem:[%s328 + $0x2e0] sm:$0xff]
      %v430 = vld [vmem:[%s328 + $0x2e8] sm:$0xff]
      %v431 = vld [vmem:[%s328 + $0x2f0] sm:$0xff]
      %v432 = vld [vmem:[%s328 + $0x2f8] sm:$0xff]
      %v433 = vld [vmem:[%s328 + $0x300] sm:$0xff]
      %v434 = vld [vmem:[%s328 + $0x308] sm:$0xff]
      %v435 = vld [vmem:[%s328 + $0x310] sm:$0xff]
      %v436 = vld [vmem:[%s328 + $0x318] sm:$0xff]
      %v437 = vld [vmem:[%s328 + $0x320] sm:$0xff]
      %v438 = vld [vmem:[%s328 + $0x328] sm:$0xff]
      %v439 = vld [vmem:[%s328 + $0x330] sm:$0xff]
      %v440 = vld [vmem:[%s328 + $0x338] sm:$0xff]
      %v441 = vld [vmem:[%s328 + $0x340] sm:$0xff]
      %v442 = vld [vmem:[%s328 + $0x348] sm:$0xff]
      %v443 = vld [vmem:[%s328 + $0x350] sm:$0xff]
      %v444 = vld [vmem:[%s328 + $0x358] sm:$0xff]
      %v445 = vld [vmem:[%s328 + $0x360] sm:$0xff]
      %v446 = vld [vmem:[%s328 + $0x368] sm:$0xff]
      %v447 = vld [vmem:[%s328 + $0x370] sm:$0xff]
      %v448 = vld [vmem:[%s328 + $0x378] sm:$0xff]
      %v449 = vld [vmem:[%s328 + $0x380] sm:$0xff]
      %v450 = vld [vmem:[%s328 + $0x388] sm:$0xff]
      %v451 = vld [vmem:[%s328 + $0x390] sm:$0xff]
      %v452 = vld [vmem:[%s328 + $0x398] sm:$0xff]
      %v453 = vld [vmem:[%s328 + $0x3a0] sm:$0xff]
      %v454 = vld [vmem:[%s328 + $0x3a8] sm:$0xff]
      %v455 = vld [vmem:[%s328 + $0x3b0] sm:$0xff]
      %v456 = vld [vmem:[%s328 + $0x3b8] sm:$0xff]
      %v457 = vld [vmem:[%s328 + $0x3c0] sm:$0xff]
      %v458 = vld [vmem:[%s328 + $0x3c8] sm:$0xff]
      %v459 = vld [vmem:[%s328 + $0x3d0] sm:$0xff]
      %v460 = vld [vmem:[%s328 + $0x3d8] sm:$0xff]
      %v461 = vld [vmem:[%s328 + $0x3e0] sm:$0xff]
      %v462 = vld [vmem:[%s328 + $0x3e8] sm:$0xff]
      %v463 = vld [vmem:[%s328 + $0x3f0] sm:$0xff]
      %v464 = vld [vmem:[%s328 + $0x3f8] sm:$0xff]
      %465 = vxpose.xlu0.b32.start [1/16] %v337, 128
      %466 = vxpose.xlu0.b32.cont [2/16] %v338, 128
      %467 = vxpose.xlu0.b32.cont [3/16] %v339, 128
      %468 = vxpose.xlu0.b32.cont [4/16] %v340, 128
      %469 = vxpose.xlu0.b32.cont [5/16] %v341, 128
      %470 = vxpose.xlu0.b32.cont [6/16] %v342, 128
      %471 = vxpose.xlu0.b32.cont [7/16] %v343, 128
      %472 = vxpose.xlu0.b32.cont [8/16] %v344, 128
      %473 = vxpose.xlu0.b32.cont [9/16] %v345, 128
      %474 = vxpose.xlu0.b32.cont [10/16] %v346, 128
      %475 = vxpose.xlu0.b32.cont [11/16] %v347, 128
      %476 = vxpose.xlu0.b32.cont [12/16] %v348, 128
      %477 = vxpose.xlu0.b32.cont [13/16] %v349, 128
      %478 = vxpose.xlu0.b32.cont [14/16] %v350, 128
      %479 = vxpose.xlu0.b32.cont [15/16] %v351, 128
      %480 = vxpose.xlu0.b32.end [16/16] %v352, 128
      %v481 = vpop.trf.xlu0
      %v482 = vpop.trf.xlu0
      %v483 = vpop.trf.xlu0
      %v484 = vpop.trf.xlu0
      %v485 = vpop.trf.xlu0
      %v486 = vpop.trf.xlu0
      %v487 = vpop.trf.xlu0
      %v488 = vpop.trf.xlu0
      %v489 = vpop.trf.xlu0
      %v490 = vpop.trf.xlu0
      %v491 = vpop.trf.xlu0
      %v492 = vpop.trf.xlu0
      %v493 = vpop.trf.xlu0
      %v494 = vpop.trf.xlu0
      %v495 = vpop.trf.xlu0
      %v496 = vpop.trf.xlu0
      %497 = vxpose.xlu0.b32.start [1/16] %v353, 128
      %498 = vxpose.xlu0.b32.cont [2/16] %v354, 128
      %499 = vxpose.xlu0.b32.cont [3/16] %v355, 128
      %500 = vxpose.xlu0.b32.cont [4/16] %v356, 128
      %501 = vxpose.xlu0.b32.cont [5/16] %v357, 128
      %502 = vxpose.xlu0.b32.cont [6/16] %v358, 128
      %503 = vxpose.xlu0.b32.cont [7/16] %v359, 128
      %504 = vxpose.xlu0.b32.cont [8/16] %v360, 128
      %505 = vxpose.xlu0.b32.cont [9/16] %v361, 128
      %506 = vxpose.xlu0.b32.cont [10/16] %v362, 128
      %507 = vxpose.xlu0.b32.cont [11/16] %v363, 128
      %508 = vxpose.xlu0.b32.cont [12/16] %v364, 128
      %509 = vxpose.xlu0.b32.cont [13/16] %v365, 128
      %510 = vxpose.xlu0.b32.cont [14/16] %v366, 128
      %511 = vxpose.xlu0.b32.cont [15/16] %v367, 128
      %512 = vxpose.xlu0.b32.end [16/16] %v368, 128
      %v513 = vpop.trf.xlu0
      %v514 = vpop.trf.xlu0
      %v515 = vpop.trf.xlu0
      %v516 = vpop.trf.xlu0
      %v517 = vpop.trf.xlu0
      %v518 = vpop.trf.xlu0
      %v519 = vpop.trf.xlu0
      %v520 = vpop.trf.xlu0
      %v521 = vpop.trf.xlu0
      %v522 = vpop.trf.xlu0
      %v523 = vpop.trf.xlu0
      %v524 = vpop.trf.xlu0
      %v525 = vpop.trf.xlu0
      %v526 = vpop.trf.xlu0
      %v527 = vpop.trf.xlu0
      %v528 = vpop.trf.xlu0
      %529 = vxpose.xlu0.b32.start [1/16] %v369, 128
      %530 = vxpose.xlu0.b32.cont [2/16] %v370, 128
      %531 = vxpose.xlu0.b32.cont [3/16] %v371, 128
      %532 = vxpose.xlu0.b32.cont [4/16] %v372, 128
      %533 = vxpose.xlu0.b32.cont [5/16] %v373, 128
      %534 = vxpose.xlu0.b32.cont [6/16] %v374, 128
      %535 = vxpose.xlu0.b32.cont [7/16] %v375, 128
      %536 = vxpose.xlu0.b32.cont [8/16] %v376, 128
      %537 = vxpose.xlu0.b32.cont [9/16] %v377, 128
      %538 = vxpose.xlu0.b32.cont [10/16] %v378, 128
      %539 = vxpose.xlu0.b32.cont [11/16] %v379, 128
      %540 = vxpose.xlu0.b32.cont [12/16] %v380, 128
      %541 = vxpose.xlu0.b32.cont [13/16] %v381, 128
      %542 = vxpose.xlu0.b32.cont [14/16] %v382, 128
      %543 = vxpose.xlu0.b32.cont [15/16] %v383, 128
      %544 = vxpose.xlu0.b32.end [16/16] %v384, 128
      %v545 = vpop.trf.xlu0
      %v546 = vpop.trf.xlu0
      %v547 = vpop.trf.xlu0
      %v548 = vpop.trf.xlu0
      %v549 = vpop.trf.xlu0
      %v550 = vpop.trf.xlu0
      %v551 = vpop.trf.xlu0
      %v552 = vpop.trf.xlu0
      %v553 = vpop.trf.xlu0
      %v554 = vpop.trf.xlu0
      %v555 = vpop.trf.xlu0
      %v556 = vpop.trf.xlu0
      %v557 = vpop.trf.xlu0
      %v558 = vpop.trf.xlu0
      %v559 = vpop.trf.xlu0
      %v560 = vpop.trf.xlu0
      %561 = vxpose.xlu0.b32.start [1/16] %v385, 128
      %562 = vxpose.xlu0.b32.cont [2/16] %v386, 128
      %563 = vxpose.xlu0.b32.cont [3/16] %v387, 128
      %564 = vxpose.xlu0.b32.cont [4/16] %v388, 128
      %565 = vxpose.xlu0.b32.cont [5/16] %v389, 128
      %566 = vxpose.xlu0.b32.cont [6/16] %v390, 128
      %567 = vxpose.xlu0.b32.cont [7/16] %v391, 128
      %568 = vxpose.xlu0.b32.cont [8/16] %v392, 128
      %569 = vxpose.xlu0.b32.cont [9/16] %v393, 128
      %570 = vxpose.xlu0.b32.cont [10/16] %v394, 128
      %571 = vxpose.xlu0.b32.cont [11/16] %v395, 128
      %572 = vxpose.xlu0.b32.cont [12/16] %v396, 128
      %573 = vxpose.xlu0.b32.cont [13/16] %v397, 128
      %574 = vxpose.xlu0.b32.cont [14/16] %v398, 128
      %575 = vxpose.xlu0.b32.cont [15/16] %v399, 128
      %576 = vxpose.xlu0.b32.end [16/16] %v400, 128
      %v577 = vpop.trf.xlu0
      %v578 = vpop.trf.xlu0
      %v579 = vpop.trf.xlu0
      %v580 = vpop.trf.xlu0
      %v581 = vpop.trf.xlu0
      %v582 = vpop.trf.xlu0
      %v583 = vpop.trf.xlu0
      %v584 = vpop.trf.xlu0
      %v585 = vpop.trf.xlu0
      %v586 = vpop.trf.xlu0
      %v587 = vpop.trf.xlu0
      %v588 = vpop.trf.xlu0
      %v589 = vpop.trf.xlu0
      %v590 = vpop.trf.xlu0
      %v591 = vpop.trf.xlu0
      %v592 = vpop.trf.xlu0
      %593 = vxpose.xlu0.b32.start [1/16] %v401, 128
      %594 = vxpose.xlu0.b32.cont [2/16] %v402, 128
      %595 = vxpose.xlu0.b32.cont [3/16] %v403, 128
      %596 = vxpose.xlu0.b32.cont [4/16] %v404, 128
      %597 = vxpose.xlu0.b32.cont [5/16] %v405, 128
      %598 = vxpose.xlu0.b32.cont [6/16] %v406, 128
      %599 = vxpose.xlu0.b32.cont [7/16] %v407, 128
      %600 = vxpose.xlu0.b32.cont [8/16] %v408, 128
      %601 = vxpose.xlu0.b32.cont [9/16] %v409, 128
      %602 = vxpose.xlu0.b32.cont [10/16] %v410, 128
      %603 = vxpose.xlu0.b32.cont [11/16] %v411, 128
      %604 = vxpose.xlu0.b32.cont [12/16] %v412, 128
      %605 = vxpose.xlu0.b32.cont [13/16] %v413, 128
      %606 = vxpose.xlu0.b32.cont [14/16] %v414, 128
      %607 = vxpose.xlu0.b32.cont [15/16] %v415, 128
      %608 = vxpose.xlu0.b32.end [16/16] %v416, 128
      %v609 = vpop.trf.xlu0
      %v610 = vpop.trf.xlu0
      %v611 = vpop.trf.xlu0
      %v612 = vpop.trf.xlu0
      %v613 = vpop.trf.xlu0
      %v614 = vpop.trf.xlu0
      %v615 = vpop.trf.xlu0
      %v616 = vpop.trf.xlu0
      %v617 = vpop.trf.xlu0
      %v618 = vpop.trf.xlu0
      %v619 = vpop.trf.xlu0
      %v620 = vpop.trf.xlu0
      %v621 = vpop.trf.xlu0
      %v622 = vpop.trf.xlu0
      %v623 = vpop.trf.xlu0
      %v624 = vpop.trf.xlu0
      %625 = vxpose.xlu0.b32.start [1/16] %v417, 128
      %626 = vxpose.xlu0.b32.cont [2/16] %v418, 128
      %627 = vxpose.xlu0.b32.cont [3/16] %v419, 128
      %628 = vxpose.xlu0.b32.cont [4/16] %v420, 128
      %629 = vxpose.xlu0.b32.cont [5/16] %v421, 128
      %630 = vxpose.xlu0.b32.cont [6/16] %v422, 128
      %631 = vxpose.xlu0.b32.cont [7/16] %v423, 128
      %632 = vxpose.xlu0.b32.cont [8/16] %v424, 128
      %633 = vxpose.xlu0.b32.cont [9/16] %v425, 128
      %634 = vxpose.xlu0.b32.cont [10/16] %v426, 128
      %635 = vxpose.xlu0.b32.cont [11/16] %v427, 128
      %636 = vxpose.xlu0.b32.cont [12/16] %v428, 128
      %637 = vxpose.xlu0.b32.cont [13/16] %v429, 128
      %638 = vxpose.xlu0.b32.cont [14/16] %v430, 128
      %639 = vxpose.xlu0.b32.cont [15/16] %v431, 128
      %640 = vxpose.xlu0.b32.end [16/16] %v432, 128
      %v641 = vpop.trf.xlu0
      %v642 = vpop.trf.xlu0
      %v643 = vpop.trf.xlu0
      %v644 = vpop.trf.xlu0
      %v645 = vpop.trf.xlu0
      %v646 = vpop.trf.xlu0
      %v647 = vpop.trf.xlu0
      %v648 = vpop.trf.xlu0
      %v649 = vpop.trf.xlu0
      %v650 = vpop.trf.xlu0
      %v651 = vpop.trf.xlu0
      %v652 = vpop.trf.xlu0
      %v653 = vpop.trf.xlu0
      %v654 = vpop.trf.xlu0
      %v655 = vpop.trf.xlu0
      %v656 = vpop.trf.xlu0
      %657 = vxpose.xlu0.b32.start [1/16] %v433, 128
      %658 = vxpose.xlu0.b32.cont [2/16] %v434, 128
      %659 = vxpose.xlu0.b32.cont [3/16] %v435, 128
      %660 = vxpose.xlu0.b32.cont [4/16] %v436, 128
      %661 = vxpose.xlu0.b32.cont [5/16] %v437, 128
      %662 = vxpose.xlu0.b32.cont [6/16] %v438, 128
      %663 = vxpose.xlu0.b32.cont [7/16] %v439, 128
      %664 = vxpose.xlu0.b32.cont [8/16] %v440, 128
      %665 = vxpose.xlu0.b32.cont [9/16] %v441, 128
      %666 = vxpose.xlu0.b32.cont [10/16] %v442, 128
      %667 = vxpose.xlu0.b32.cont [11/16] %v443, 128
      %668 = vxpose.xlu0.b32.cont [12/16] %v444, 128
      %669 = vxpose.xlu0.b32.cont [13/16] %v445, 128
      %670 = vxpose.xlu0.b32.cont [14/16] %v446, 128
      %671 = vxpose.xlu0.b32.cont [15/16] %v447, 128
      %672 = vxpose.xlu0.b32.end [16/16] %v448, 128
      %v673 = vpop.trf.xlu0
      %v674 = vpop.trf.xlu0
      %v675 = vpop.trf.xlu0
      %v676 = vpop.trf.xlu0
      %v677 = vpop.trf.xlu0
      %v678 = vpop.trf.xlu0
      %v679 = vpop.trf.xlu0
      %v680 = vpop.trf.xlu0
      %v681 = vpop.trf.xlu0
      %v682 = vpop.trf.xlu0
      %v683 = vpop.trf.xlu0
      %v684 = vpop.trf.xlu0
      %v685 = vpop.trf.xlu0
      %v686 = vpop.trf.xlu0
      %v687 = vpop.trf.xlu0
      %v688 = vpop.trf.xlu0
      %689 = vxpose.xlu0.b32.start [1/16] %v449, 128
      %690 = vxpose.xlu0.b32.cont [2/16] %v450, 128
      %691 = vxpose.xlu0.b32.cont [3/16] %v451, 128
      %692 = vxpose.xlu0.b32.cont [4/16] %v452, 128
      %693 = vxpose.xlu0.b32.cont [5/16] %v453, 128
      %694 = vxpose.xlu0.b32.cont [6/16] %v454, 128
      %695 = vxpose.xlu0.b32.cont [7/16] %v455, 128
      %696 = vxpose.xlu0.b32.cont [8/16] %v456, 128
      %697 = vxpose.xlu0.b32.cont [9/16] %v457, 128
      %698 = vxpose.xlu0.b32.cont [10/16] %v458, 128
      %699 = vxpose.xlu0.b32.cont [11/16] %v459, 128
      %700 = vxpose.xlu0.b32.cont [12/16] %v460, 128
      %701 = vxpose.xlu0.b32.cont [13/16] %v461, 128
      %702 = vxpose.xlu0.b32.cont [14/16] %v462, 128
      %703 = vxpose.xlu0.b32.cont [15/16] %v463, 128
      %704 = vxpose.xlu0.b32.end [16/16] %v464, 128
      %v705 = vpop.trf.xlu0
      %v706 = vpop.trf.xlu0
      %v707 = vpop.trf.xlu0
      %v708 = vpop.trf.xlu0
      %v709 = vpop.trf.xlu0
      %v710 = vpop.trf.xlu0
      %v711 = vpop.trf.xlu0
      %v712 = vpop.trf.xlu0
      %v713 = vpop.trf.xlu0
      %v714 = vpop.trf.xlu0
      %v715 = vpop.trf.xlu0
      %v716 = vpop.trf.xlu0
      %v717 = vpop.trf.xlu0
      %v718 = vpop.trf.xlu0
      %v719 = vpop.trf.xlu0
      %v720 = vpop.trf.xlu0
      %v721 = vpack.c.bf16 %v513, %v481
      %v722 = vpack.c.bf16 %v577, %v545
      %v723 = vpack.c.bf16 %v641, %v609
      %v724 = vpack.c.bf16 %v705, %v673
      %v725 = vpack.c.bf16 %v514, %v482
      %v726 = vpack.c.bf16 %v578, %v546
      %v727 = vpack.c.bf16 %v642, %v610
      %v728 = vpack.c.bf16 %v706, %v674
      %v729 = vpack.c.bf16 %v515, %v483
      %v730 = vpack.c.bf16 %v579, %v547
      %v731 = vpack.c.bf16 %v643, %v611
      %v732 = vpack.c.bf16 %v707, %v675
      %v733 = vpack.c.bf16 %v516, %v484
      %v734 = vpack.c.bf16 %v580, %v548
      %v735 = vpack.c.bf16 %v644, %v612
      %v736 = vpack.c.bf16 %v708, %v676
      %737 = vst [vmem:[#allocation2] sm:$0xff] %v721
      %738 = vst [vmem:[#allocation2 + $0x8] sm:$0xff] %v722
      %739 = vst [vmem:[#allocation2 + $0x10] sm:$0xff] %v723
      %740 = vst [vmem:[#allocation2 + $0x18] sm:$0xff] %v724
      %741 = vst [vmem:[#allocation2 + $0x20] sm:$0xff] %v725
      %742 = vst [vmem:[#allocation2 + $0x28] sm:$0xff] %v726
      %743 = vst [vmem:[#allocation2 + $0x30] sm:$0xff] %v727
      %744 = vst [vmem:[#allocation2 + $0x38] sm:$0xff] %v728
      %745 = vst [vmem:[#allocation2 + $0x40] sm:$0xff] %v729
      %746 = vst [vmem:[#allocation2 + $0x48] sm:$0xff] %v730
      %747 = vst [vmem:[#allocation2 + $0x50] sm:$0xff] %v731
      %748 = vst [vmem:[#allocation2 + $0x58] sm:$0xff] %v732
      %749 = vst [vmem:[#allocation2 + $0x60] sm:$0xff] %v733
      %750 = vst [vmem:[#allocation2 + $0x68] sm:$0xff] %v734
      %751 = vst [vmem:[#allocation2 + $0x70] sm:$0xff] %v735
      %752 = vst [vmem:[#allocation2 + $0x78] sm:$0xff] %v736
      %v753 = vld [vmem:[%s1] sm:$0xf]
      %v754 = vld [vmem:[%s1 + $0x4] sm:$0xf]
      %v755 = vld [vmem:[%s1 + $0x8] sm:$0xf]
      %v756 = vld [vmem:[%s1 + $0xc] sm:$0xf]
      %v757 = vld [vmem:[%s1 + $0x10] sm:$0xf]
      %v758 = vld [vmem:[%s1 + $0x14] sm:$0xf]
      %v759 = vld [vmem:[%s1 + $0x18] sm:$0xf]
      %v760 = vld [vmem:[%s1 + $0x1c] sm:$0xf]
      %v761 = vld [vmem:[%s2] sm:$0xff]
      %v762 = vld [vmem:[%s2 + $0x8] sm:$0xff]
      %v763 = vld [vmem:[%s2 + $0x10] sm:$0xff]
      %v764 = vld [vmem:[%s2 + $0x18] sm:$0xff]
      %v765 = vld [vmem:[%s2 + $0x20] sm:$0xff]
      %v766 = vld [vmem:[%s2 + $0x28] sm:$0xff]
      %v767 = vld [vmem:[%s2 + $0x30] sm:$0xff]
      %v768 = vld [vmem:[%s2 + $0x38] sm:$0xff]
      %770 = vset.pattern.permute.xlu0 0
      %771 = vperm.xlu0 %770, %v761
      %v772 = vpop.permute.xlu0 %771
      %775 = vset.pattern.permute.xlu0 0
      %776 = vperm.xlu0 %775, %v762
      %v777 = vpop.permute.xlu0 %776
      %780 = vset.pattern.permute.xlu0 0
      %781 = vperm.xlu0 %780, %v763
      %v782 = vpop.permute.xlu0 %781
      %785 = vset.pattern.permute.xlu0 0
      %786 = vperm.xlu0 %785, %v764
      %v787 = vpop.permute.xlu0 %786
      %790 = vset.pattern.permute.xlu0 0
      %791 = vperm.xlu0 %790, %v765
      %v792 = vpop.permute.xlu0 %791
      %795 = vset.pattern.permute.xlu0 0
      %796 = vperm.xlu0 %795, %v766
      %v797 = vpop.permute.xlu0 %796
      %800 = vset.pattern.permute.xlu0 0
      %801 = vperm.xlu0 %800, %v767
      %v802 = vpop.permute.xlu0 %801
      %805 = vset.pattern.permute.xlu0 0
      %806 = vperm.xlu0 %805, %v768
      %v807 = vpop.permute.xlu0 %806
      %v817 = vunpack.c.l.b16 %v753
      %v818 = vunpack.c.l.b16 %v754
      %v819 = vunpack.c.l.b16 %v755
      %v820 = vunpack.c.l.b16 %v756
      %v821 = vunpack.c.l.b16 %v757
      %v822 = vunpack.c.l.b16 %v758
      %v823 = vunpack.c.l.b16 %v759
      %v824 = vunpack.c.l.b16 %v760
      %v825 = vpack.c.b16 %v818, %v817
      %v826 = vpack.c.b16 %v820, %v819
      %v827 = vpack.c.b16 %v822, %v821
      %v828 = vpack.c.b16 %v824, %v823
      %v845 = vunpack.c.l.b16 %v721
      %v846 = vunpack.c.h.b16 %v721
      %v847 = vunpack.c.l.b16 %v722
      %v848 = vunpack.c.h.b16 %v722
      %v849 = vunpack.c.l.b16 %v723
      %v850 = vunpack.c.h.b16 %v723
      %v851 = vunpack.c.l.b16 %v724
      %v852 = vunpack.c.h.b16 %v724
      %v853 = vunpack.c.l.b16 %v725
      %v854 = vunpack.c.h.b16 %v725
      %v855 = vunpack.c.l.b16 %v726
      %v856 = vunpack.c.h.b16 %v726
      %v857 = vunpack.c.l.b16 %v727
      %v858 = vunpack.c.h.b16 %v727
      %v859 = vunpack.c.l.b16 %v728
      %v860 = vunpack.c.h.b16 %v728
      %v861 = vunpack.c.l.b16 %v729
      %v862 = vunpack.c.h.b16 %v729
      %v863 = vunpack.c.l.b16 %v730
      %v864 = vunpack.c.h.b16 %v730
      %v865 = vunpack.c.l.b16 %v731
      %v866 = vunpack.c.h.b16 %v731
      %v867 = vunpack.c.l.b16 %v732
      %v868 = vunpack.c.h.b16 %v732
      %v869 = vunpack.c.l.b16 %v733
      %v870 = vunpack.c.h.b16 %v733
      %v871 = vunpack.c.l.b16 %v734
      %v872 = vunpack.c.h.b16 %v734
      %v873 = vunpack.c.l.b16 %v735
      %v874 = vunpack.c.h.b16 %v735
      %v875 = vunpack.c.l.b16 %v736
      %v876 = vunpack.c.h.b16 %v736
      %v877 = vpack.c.b16 %v853, %v845
      %v878 = vpack.c.b16 %v854, %v846
      %v879 = vpack.c.b16 %v855, %v847
      %v880 = vpack.c.b16 %v856, %v848
      %v881 = vpack.c.b16 %v857, %v849
      %v882 = vpack.c.b16 %v858, %v850
      %v883 = vpack.c.b16 %v859, %v851
      %v884 = vpack.c.b16 %v860, %v852
      %v885 = vpack.c.b16 %v869, %v861
      %v886 = vpack.c.b16 %v870, %v862
      %v887 = vpack.c.b16 %v871, %v863
      %v888 = vpack.c.b16 %v872, %v864
      %v889 = vpack.c.b16 %v873, %v865
      %v890 = vpack.c.b16 %v874, %v866
      %v891 = vpack.c.b16 %v875, %v867
      %v892 = vpack.c.b16 %v876, %v868
      %vm909 = vcmask 261120
      %v911 = vsel %vm909, %v825, 0
      %v914 = vsel %vm909, %v826, 0
      %v917 = vsel %vm909, %v827, 0
      %v920 = vsel %vm909, %v828, 0
      %922 = vmatpush.bf16.msra.mxu0 0
      %923 = vmatpush.bf16.msra.mxu0 0
      %924 = vmatpush.bf16.msra.mxu0 0
      %925 = vmatpush.bf16.msra.mxu0 0
      %926 = vmatpush.bf16.msra.mxu0 0
      %927 = vmatpush.bf16.msra.mxu0 0
      %928 = vmatpush.bf16.msra.mxu0 %v885
      %929 = vmatpush.bf16.msra.mxu0 %v877
      %930 = vmatmul.bf16.gmra.mxu0 %v911
      %v931 = vpop.f32.mrf.mxu0
      %v932 = vadd.f32 %v772, %v931
      %v933 = vpop.f32.mrf.mxu0
      %v934 = vadd.f32 %v777, %v933
      %935 = vmatmul.bf16.gmra.mxu0 %v914
      %v936 = vpop.f32.mrf.mxu0
      %v937 = vadd.f32 %v782, %v936
      %v938 = vpop.f32.mrf.mxu0
      %v939 = vadd.f32 %v787, %v938
      %940 = vmatmul.bf16.gmra.mxu0 %v917
      %v941 = vpop.f32.mrf.mxu0
      %v942 = vadd.f32 %v792, %v941
      %v943 = vpop.f32.mrf.mxu0
      %v944 = vadd.f32 %v797, %v943
      %945 = vmatmul.bf16.gmra.mxu0 %v920
      %v946 = vpop.f32.mrf.mxu0
      %v947 = vadd.f32 %v802, %v946
      %v948 = vpop.f32.mrf.mxu0
      %v949 = vadd.f32 %v807, %v948
      %950 = vdwg.mxu0
      %951 = vmatpush.bf16.msra.mxu0 0
      %952 = vmatpush.bf16.msra.mxu0 0
      %953 = vmatpush.bf16.msra.mxu0 0
      %954 = vmatpush.bf16.msra.mxu0 0
      %955 = vmatpush.bf16.msra.mxu0 0
      %956 = vmatpush.bf16.msra.mxu0 0
      %957 = vmatpush.bf16.msra.mxu0 %v886
      %958 = vmatpush.bf16.msra.mxu0 %v878
      %959 = vmatmul.bf16.gmra.mxu0 %v911
      %v960 = vpop.f32.mrf.mxu0
      %v961 = vadd.f32 %v772, %v960
      %v962 = vpop.f32.mrf.mxu0
      %v963 = vadd.f32 %v777, %v962
      %964 = vmatmul.bf16.gmra.mxu0 %v914
      %v965 = vpop.f32.mrf.mxu0
      %v966 = vadd.f32 %v782, %v965
      %v967 = vpop.f32.mrf.mxu0
      %v968 = vadd.f32 %v787, %v967
      %969 = vmatmul.bf16.gmra.mxu0 %v917
      %v970 = vpop.f32.mrf.mxu0
      %v971 = vadd.f32 %v792, %v970
      %v972 = vpop.f32.mrf.mxu0
      %v973 = vadd.f32 %v797, %v972
      %974 = vmatmul.bf16.gmra.mxu0 %v920
      %v975 = vpop.f32.mrf.mxu0
      %v976 = vadd.f32 %v802, %v975
      %v977 = vpop.f32.mrf.mxu0
      %v978 = vadd.f32 %v807, %v977
      %979 = vdwg.mxu0
      %980 = vmatpush.bf16.msra.mxu0 0
      %981 = vmatpush.bf16.msra.mxu0 0
      %982 = vmatpush.bf16.msra.mxu0 0
      %983 = vmatpush.bf16.msra.mxu0 0
      %984 = vmatpush.bf16.msra.mxu0 0
      %985 = vmatpush.bf16.msra.mxu0 0
      %986 = vmatpush.bf16.msra.mxu0 %v887
      %987 = vmatpush.bf16.msra.mxu0 %v879
      %988 = vmatmul.bf16.gmra.mxu0 %v911
      %v989 = vpop.f32.mrf.mxu0
      %v990 = vadd.f32 %v772, %v989
      %v991 = vpop.f32.mrf.mxu0
      %v992 = vadd.f32 %v777, %v991
      %993 = vmatmul.bf16.gmra.mxu0 %v914
      %v994 = vpop.f32.mrf.mxu0
      %v995 = vadd.f32 %v782, %v994
      %v996 = vpop.f32.mrf.mxu0
      %v997 = vadd.f32 %v787, %v996
      %998 = vmatmul.bf16.gmra.mxu0 %v917
      %v999 = vpop.f32.mrf.mxu0
      %v1000 = vadd.f32 %v792, %v999
      %v1001 = vpop.f32.mrf.mxu0
      %v1002 = vadd.f32 %v797, %v1001
      %1003 = vmatmul.bf16.gmra.mxu0 %v920
      %v1004 = vpop.f32.mrf.mxu0
      %v1005 = vadd.f32 %v802, %v1004
      %v1006 = vpop.f32.mrf.mxu0
      %v1007 = vadd.f32 %v807, %v1006
      %1008 = vdwg.mxu0
      %1009 = vmatpush.bf16.msra.mxu0 0
      %1010 = vmatpush.bf16.msra.mxu0 0
      %1011 = vmatpush.bf16.msra.mxu0 0
      %1012 = vmatpush.bf16.msra.mxu0 0
      %1013 = vmatpush.bf16.msra.mxu0 0
      %1014 = vmatpush.bf16.msra.mxu0 0
      %1015 = vmatpush.bf16.msra.mxu0 %v888
      %1016 = vmatpush.bf16.msra.mxu0 %v880
      %1017 = vmatmul.bf16.gmra.mxu0 %v911
      %v1018 = vpop.f32.mrf.mxu0
      %v1019 = vadd.f32 %v772, %v1018
      %v1020 = vpop.f32.mrf.mxu0
      %v1021 = vadd.f32 %v777, %v1020
      %1022 = vmatmul.bf16.gmra.mxu0 %v914
      %v1023 = vpop.f32.mrf.mxu0
      %v1024 = vadd.f32 %v782, %v1023
      %v1025 = vpop.f32.mrf.mxu0
      %v1026 = vadd.f32 %v787, %v1025
      %1027 = vmatmul.bf16.gmra.mxu0 %v917
      %v1028 = vpop.f32.mrf.mxu0
      %v1029 = vadd.f32 %v792, %v1028
      %v1030 = vpop.f32.mrf.mxu0
      %v1031 = vadd.f32 %v797, %v1030
      %1032 = vmatmul.bf16.gmra.mxu0 %v920
      %v1033 = vpop.f32.mrf.mxu0
      %v1034 = vadd.f32 %v802, %v1033
      %v1035 = vpop.f32.mrf.mxu0
      %v1036 = vadd.f32 %v807, %v1035
      %1037 = vdwg.mxu0
      %1038 = vmatpush.bf16.msra.mxu0 0
      %1039 = vmatpush.bf16.msra.mxu0 0
      %1040 = vmatpush.bf16.msra.mxu0 0
      %1041 = vmatpush.bf16.msra.mxu0 0
      %1042 = vmatpush.bf16.msra.mxu0 0
      %1043 = vmatpush.bf16.msra.mxu0 0
      %1044 = vmatpush.bf16.msra.mxu0 %v889
      %1045 = vmatpush.bf16.msra.mxu0 %v881
      %1046 = vmatmul.bf16.gmra.mxu0 %v911
      %v1047 = vpop.f32.mrf.mxu0
      %v1048 = vadd.f32 %v772, %v1047
      %v1049 = vpop.f32.mrf.mxu0
      %v1050 = vadd.f32 %v777, %v1049
      %1051 = vmatmul.bf16.gmra.mxu0 %v914
      %v1052 = vpop.f32.mrf.mxu0
      %v1053 = vadd.f32 %v782, %v1052
      %v1054 = vpop.f32.mrf.mxu0
      %v1055 = vadd.f32 %v787, %v1054
      %1056 = vmatmul.bf16.gmra.mxu0 %v917
      %v1057 = vpop.f32.mrf.mxu0
      %v1058 = vadd.f32 %v792, %v1057
      %v1059 = vpop.f32.mrf.mxu0
      %v1060 = vadd.f32 %v797, %v1059
      %1061 = vmatmul.bf16.gmra.mxu0 %v920
      %v1062 = vpop.f32.mrf.mxu0
      %v1063 = vadd.f32 %v802, %v1062
      %v1064 = vpop.f32.mrf.mxu0
      %v1065 = vadd.f32 %v807, %v1064
      %1066 = vdwg.mxu0
      %1067 = vmatpush.bf16.msra.mxu0 0
      %1068 = vmatpush.bf16.msra.mxu0 0
      %1069 = vmatpush.bf16.msra.mxu0 0
      %1070 = vmatpush.bf16.msra.mxu0 0
      %1071 = vmatpush.bf16.msra.mxu0 0
      %1072 = vmatpush.bf16.msra.mxu0 0
      %1073 = vmatpush.bf16.msra.mxu0 %v890
      %1074 = vmatpush.bf16.msra.mxu0 %v882
      %1075 = vmatmul.bf16.gmra.mxu0 %v911
      %v1076 = vpop.f32.mrf.mxu0
      %v1077 = vadd.f32 %v772, %v1076
      %v1078 = vpop.f32.mrf.mxu0
      %v1079 = vadd.f32 %v777, %v1078
      %1080 = vmatmul.bf16.gmra.mxu0 %v914
      %v1081 = vpop.f32.mrf.mxu0
      %v1082 = vadd.f32 %v782, %v1081
      %v1083 = vpop.f32.mrf.mxu0
      %v1084 = vadd.f32 %v787, %v1083
      %1085 = vmatmul.bf16.gmra.mxu0 %v917
      %v1086 = vpop.f32.mrf.mxu0
      %v1087 = vadd.f32 %v792, %v1086
      %v1088 = vpop.f32.mrf.mxu0
      %v1089 = vadd.f32 %v797, %v1088
      %1090 = vmatmul.bf16.gmra.mxu0 %v920
      %v1091 = vpop.f32.mrf.mxu0
      %v1092 = vadd.f32 %v802, %v1091
      %v1093 = vpop.f32.mrf.mxu0
      %v1094 = vadd.f32 %v807, %v1093
      %1095 = vdwg.mxu0
      %1096 = vmatpush.bf16.msra.mxu0 0
      %1097 = vmatpush.bf16.msra.mxu0 0
      %1098 = vmatpush.bf16.msra.mxu0 0
      %1099 = vmatpush.bf16.msra.mxu0 0
      %1100 = vmatpush.bf16.msra.mxu0 0
      %1101 = vmatpush.bf16.msra.mxu0 0
      %1102 = vmatpush.bf16.msra.mxu0 %v891
      %1103 = vmatpush.bf16.msra.mxu0 %v883
      %1104 = vmatmul.bf16.gmra.mxu0 %v911
      %v1105 = vpop.f32.mrf.mxu0
      %v1106 = vadd.f32 %v772, %v1105
      %v1107 = vpop.f32.mrf.mxu0
      %v1108 = vadd.f32 %v777, %v1107
      %1109 = vmatmul.bf16.gmra.mxu0 %v914
      %v1110 = vpop.f32.mrf.mxu0
      %v1111 = vadd.f32 %v782, %v1110
      %v1112 = vpop.f32.mrf.mxu0
      %v1113 = vadd.f32 %v787, %v1112
      %1114 = vmatmul.bf16.gmra.mxu0 %v917
      %v1115 = vpop.f32.mrf.mxu0
      %v1116 = vadd.f32 %v792, %v1115
      %v1117 = vpop.f32.mrf.mxu0
      %v1118 = vadd.f32 %v797, %v1117
      %1119 = vmatmul.bf16.gmra.mxu0 %v920
      %v1120 = vpop.f32.mrf.mxu0
      %v1121 = vadd.f32 %v802, %v1120
      %v1122 = vpop.f32.mrf.mxu0
      %v1123 = vadd.f32 %v807, %v1122
      %1124 = vdwg.mxu0
      %1125 = vmatpush.bf16.msra.mxu0 0
      %1126 = vmatpush.bf16.msra.mxu0 0
      %1127 = vmatpush.bf16.msra.mxu0 0
      %1128 = vmatpush.bf16.msra.mxu0 0
      %1129 = vmatpush.bf16.msra.mxu0 0
      %1130 = vmatpush.bf16.msra.mxu0 0
      %1131 = vmatpush.bf16.msra.mxu0 %v892
      %1132 = vmatpush.bf16.msra.mxu0 %v884
      %1133 = vmatmul.bf16.gmra.mxu0 %v911
      %v1134 = vpop.f32.mrf.mxu0
      %v1135 = vadd.f32 %v772, %v1134
      %v1136 = vpop.f32.mrf.mxu0
      %v1137 = vadd.f32 %v777, %v1136
      %1138 = vmatmul.bf16.gmra.mxu0 %v914
      %v1139 = vpop.f32.mrf.mxu0
      %v1140 = vadd.f32 %v782, %v1139
      %v1141 = vpop.f32.mrf.mxu0
      %v1142 = vadd.f32 %v787, %v1141
      %1143 = vmatmul.bf16.gmra.mxu0 %v917
      %v1144 = vpop.f32.mrf.mxu0
      %v1145 = vadd.f32 %v792, %v1144
      %v1146 = vpop.f32.mrf.mxu0
      %v1147 = vadd.f32 %v797, %v1146
      %1148 = vmatmul.bf16.gmra.mxu0 %v920
      %v1149 = vpop.f32.mrf.mxu0
      %v1150 = vadd.f32 %v802, %v1149
      %v1151 = vpop.f32.mrf.mxu0
      %v1152 = vadd.f32 %v807, %v1151
      %1153 = vdwg.mxu0
      %v1154 = vmul.f32 %v932, 0.01
      %v1155 = vmul.f32 %v961, 0.01
      %v1156 = vmul.f32 %v990, 0.01
      %v1157 = vmul.f32 %v1019, 0.01
      %v1158 = vmul.f32 %v1048, 0.01
      %v1159 = vmul.f32 %v1077, 0.01
      %v1160 = vmul.f32 %v1106, 0.01
      %v1161 = vmul.f32 %v1135, 0.01
      %v1162 = vmul.f32 %v934, 0.01
      %v1163 = vmul.f32 %v963, 0.01
      %v1164 = vmul.f32 %v992, 0.01
      %v1165 = vmul.f32 %v1021, 0.01
      %v1166 = vmul.f32 %v1050, 0.01
      %v1167 = vmul.f32 %v1079, 0.01
      %v1168 = vmul.f32 %v1108, 0.01
      %v1169 = vmul.f32 %v1137, 0.01
      %v1170 = vmul.f32 %v937, 0.01
      %v1171 = vmul.f32 %v966, 0.01
      %v1172 = vmul.f32 %v995, 0.01
      %v1173 = vmul.f32 %v1024, 0.01
      %v1174 = vmul.f32 %v1053, 0.01
      %v1175 = vmul.f32 %v1082, 0.01
      %v1176 = vmul.f32 %v1111, 0.01
      %v1177 = vmul.f32 %v1140, 0.01
      %v1178 = vmul.f32 %v939, 0.01
      %v1179 = vmul.f32 %v968, 0.01
      %v1180 = vmul.f32 %v997, 0.01
      %v1181 = vmul.f32 %v1026, 0.01
      %v1182 = vmul.f32 %v1055, 0.01
      %v1183 = vmul.f32 %v1084, 0.01
      %v1184 = vmul.f32 %v1113, 0.01
      %v1185 = vmul.f32 %v1142, 0.01
      %v1186 = vmul.f32 %v942, 0.01
      %v1187 = vmul.f32 %v971, 0.01
      %v1188 = vmul.f32 %v1000, 0.01
      %v1189 = vmul.f32 %v1029, 0.01
      %v1190 = vmul.f32 %v1058, 0.01
      %v1191 = vmul.f32 %v1087, 0.01
      %v1192 = vmul.f32 %v1116, 0.01
      %v1193 = vmul.f32 %v1145, 0.01
      %v1194 = vmul.f32 %v944, 0.01
      %v1195 = vmul.f32 %v973, 0.01
      %v1196 = vmul.f32 %v1002, 0.01
      %v1197 = vmul.f32 %v1031, 0.01
      %v1198 = vmul.f32 %v1060, 0.01
      %v1199 = vmul.f32 %v1089, 0.01
      %v1200 = vmul.f32 %v1118, 0.01
      %v1201 = vmul.f32 %v1147, 0.01
      %v1202 = vmul.f32 %v947, 0.01
      %v1203 = vmul.f32 %v976, 0.01
      %v1204 = vmul.f32 %v1005, 0.01
      %v1205 = vmul.f32 %v1034, 0.01
      %v1206 = vmul.f32 %v1063, 0.01
      %v1207 = vmul.f32 %v1092, 0.01
      %v1208 = vmul.f32 %v1121, 0.01
      %v1209 = vmul.f32 %v1150, 0.01
      %v1210 = vmul.f32 %v949, 0.01
      %v1211 = vmul.f32 %v978, 0.01
      %v1212 = vmul.f32 %v1007, 0.01
      %v1213 = vmul.f32 %v1036, 0.01
      %v1214 = vmul.f32 %v1065, 0.01
      %v1215 = vmul.f32 %v1094, 0.01
      %v1216 = vmul.f32 %v1123, 0.01
      %v1217 = vmul.f32 %v1152, 0.01
      %v1218 = vmax.f32 %v932, %v1154
      %v1219 = vmax.f32 %v961, %v1155
      %v1220 = vmax.f32 %v990, %v1156
      %v1221 = vmax.f32 %v1019, %v1157
      %v1222 = vmax.f32 %v1048, %v1158
      %v1223 = vmax.f32 %v1077, %v1159
      %v1224 = vmax.f32 %v1106, %v1160
      %v1225 = vmax.f32 %v1135, %v1161
      %v1226 = vmax.f32 %v934, %v1162
      %v1227 = vmax.f32 %v963, %v1163
      %v1228 = vmax.f32 %v992, %v1164
      %v1229 = vmax.f32 %v1021, %v1165
      %v1230 = vmax.f32 %v1050, %v1166
      %v1231 = vmax.f32 %v1079, %v1167
      %v1232 = vmax.f32 %v1108, %v1168
      %v1233 = vmax.f32 %v1137, %v1169
      %v1234 = vmax.f32 %v937, %v1170
      %v1235 = vmax.f32 %v966, %v1171
      %v1236 = vmax.f32 %v995, %v1172
      %v1237 = vmax.f32 %v1024, %v1173
      %v1238 = vmax.f32 %v1053, %v1174
      %v1239 = vmax.f32 %v1082, %v1175
      %v1240 = vmax.f32 %v1111, %v1176
      %v1241 = vmax.f32 %v1140, %v1177
      %v1242 = vmax.f32 %v939, %v1178
      %v1243 = vmax.f32 %v968, %v1179
      %v1244 = vmax.f32 %v997, %v1180
      %v1245 = vmax.f32 %v1026, %v1181
      %v1246 = vmax.f32 %v1055, %v1182
      %v1247 = vmax.f32 %v1084, %v1183
      %v1248 = vmax.f32 %v1113, %v1184
      %v1249 = vmax.f32 %v1142, %v1185
      %v1250 = vmax.f32 %v942, %v1186
      %v1251 = vmax.f32 %v971, %v1187
      %v1252 = vmax.f32 %v1000, %v1188
      %v1253 = vmax.f32 %v1029, %v1189
      %v1254 = vmax.f32 %v1058, %v1190
      %v1255 = vmax.f32 %v1087, %v1191
      %v1256 = vmax.f32 %v1116, %v1192
      %v1257 = vmax.f32 %v1145, %v1193
      %v1258 = vmax.f32 %v944, %v1194
      %v1259 = vmax.f32 %v973, %v1195
      %v1260 = vmax.f32 %v1002, %v1196
      %v1261 = vmax.f32 %v1031, %v1197
      %v1262 = vmax.f32 %v1060, %v1198
      %v1263 = vmax.f32 %v1089, %v1199
      %v1264 = vmax.f32 %v1118, %v1200
      %v1265 = vmax.f32 %v1147, %v1201
      %v1266 = vmax.f32 %v947, %v1202
      %v1267 = vmax.f32 %v976, %v1203
      %v1268 = vmax.f32 %v1005, %v1204
      %v1269 = vmax.f32 %v1034, %v1205
      %v1270 = vmax.f32 %v1063, %v1206
      %v1271 = vmax.f32 %v1092, %v1207
      %v1272 = vmax.f32 %v1121, %v1208
      %v1273 = vmax.f32 %v1150, %v1209
      %v1274 = vmax.f32 %v949, %v1210
      %v1275 = vmax.f32 %v978, %v1211
      %v1276 = vmax.f32 %v1007, %v1212
      %v1277 = vmax.f32 %v1036, %v1213
      %v1278 = vmax.f32 %v1065, %v1214
      %v1279 = vmax.f32 %v1094, %v1215
      %v1280 = vmax.f32 %v1123, %v1216
      %v1281 = vmax.f32 %v1152, %v1217
      %v1282 = vpack.c.bf16 %v1226, %v1218
      %v1283 = vpack.c.bf16 %v1227, %v1219
      %v1284 = vpack.c.bf16 %v1228, %v1220
      %v1285 = vpack.c.bf16 %v1229, %v1221
      %v1286 = vpack.c.bf16 %v1230, %v1222
      %v1287 = vpack.c.bf16 %v1231, %v1223
      %v1288 = vpack.c.bf16 %v1232, %v1224
      %v1289 = vpack.c.bf16 %v1233, %v1225
      %v1290 = vpack.c.bf16 %v1242, %v1234
      %v1291 = vpack.c.bf16 %v1243, %v1235
      %v1292 = vpack.c.bf16 %v1244, %v1236
      %v1293 = vpack.c.bf16 %v1245, %v1237
      %v1294 = vpack.c.bf16 %v1246, %v1238
      %v1295 = vpack.c.bf16 %v1247, %v1239
      %v1296 = vpack.c.bf16 %v1248, %v1240
      %v1297 = vpack.c.bf16 %v1249, %v1241
      %v1298 = vpack.c.bf16 %v1258, %v1250
      %v1299 = vpack.c.bf16 %v1259, %v1251
      %v1300 = vpack.c.bf16 %v1260, %v1252
      %v1301 = vpack.c.bf16 %v1261, %v1253
      %v1302 = vpack.c.bf16 %v1262, %v1254
      %v1303 = vpack.c.bf16 %v1263, %v1255
      %v1304 = vpack.c.bf16 %v1264, %v1256
      %v1305 = vpack.c.bf16 %v1265, %v1257
      %v1306 = vpack.c.bf16 %v1274, %v1266
      %v1307 = vpack.c.bf16 %v1275, %v1267
      %v1308 = vpack.c.bf16 %v1276, %v1268
      %v1309 = vpack.c.bf16 %v1277, %v1269
      %v1310 = vpack.c.bf16 %v1278, %v1270
      %v1311 = vpack.c.bf16 %v1279, %v1271
      %v1312 = vpack.c.bf16 %v1280, %v1272
      %v1313 = vpack.c.bf16 %v1281, %v1273
      %v1314 = vld [vmem:[%s3] sm:$0xf]
      %v1315 = vld [vmem:[%s3 + $0x4] sm:$0xf]
      %v1316 = vld [vmem:[%s3 + $0x8] sm:$0xf]
      %v1317 = vld [vmem:[%s3 + $0xc] sm:$0xf]
      %v1318 = vld [vmem:[%s3 + $0x10] sm:$0xf]
      %v1319 = vld [vmem:[%s3 + $0x14] sm:$0xf]
      %v1320 = vld [vmem:[%s3 + $0x18] sm:$0xf]
      %v1321 = vld [vmem:[%s3 + $0x1c] sm:$0xf]
      %v1322 = vld [vmem:[%s4] sm:$0xff]
      %v1323 = vld [vmem:[%s4 + $0x8] sm:$0xff]
      %v1324 = vld [vmem:[%s4 + $0x10] sm:$0xff]
      %v1325 = vld [vmem:[%s4 + $0x18] sm:$0xff]
      %v1326 = vld [vmem:[%s4 + $0x20] sm:$0xff]
      %v1327 = vld [vmem:[%s4 + $0x28] sm:$0xff]
      %v1328 = vld [vmem:[%s4 + $0x30] sm:$0xff]
      %v1329 = vld [vmem:[%s4 + $0x38] sm:$0xff]
      %1331 = vset.pattern.permute.xlu0 0
      %1332 = vperm.xlu0 %1331, %v1322
      %v1333 = vpop.permute.xlu0 %1332
      %1336 = vset.pattern.permute.xlu0 0
      %1337 = vperm.xlu0 %1336, %v1323
      %v1338 = vpop.permute.xlu0 %1337
      %1341 = vset.pattern.permute.xlu0 0
      %1342 = vperm.xlu0 %1341, %v1324
      %v1343 = vpop.permute.xlu0 %1342
      %1346 = vset.pattern.permute.xlu0 0
      %1347 = vperm.xlu0 %1346, %v1325
      %v1348 = vpop.permute.xlu0 %1347
      %1351 = vset.pattern.permute.xlu0 0
      %1352 = vperm.xlu0 %1351, %v1326
      %v1353 = vpop.permute.xlu0 %1352
      %1356 = vset.pattern.permute.xlu0 0
      %1357 = vperm.xlu0 %1356, %v1327
      %v1358 = vpop.permute.xlu0 %1357
      %1361 = vset.pattern.permute.xlu0 0
      %1362 = vperm.xlu0 %1361, %v1328
      %v1363 = vpop.permute.xlu0 %1362
      %1366 = vset.pattern.permute.xlu0 0
      %1367 = vperm.xlu0 %1366, %v1329
      %v1368 = vpop.permute.xlu0 %1367
      %v1378 = vunpack.c.l.b16 %v1314
      %v1379 = vunpack.c.l.b16 %v1315
      %v1380 = vunpack.c.l.b16 %v1316
      %v1381 = vunpack.c.l.b16 %v1317
      %v1382 = vunpack.c.l.b16 %v1318
      %v1383 = vunpack.c.l.b16 %v1319
      %v1384 = vunpack.c.l.b16 %v1320
      %v1385 = vunpack.c.l.b16 %v1321
      %v1386 = vpack.c.b16 %v1379, %v1378
      %v1387 = vpack.c.b16 %v1381, %v1380
      %v1388 = vpack.c.b16 %v1383, %v1382
      %v1389 = vpack.c.b16 %v1385, %v1384
      %vm1390 = vcmask 523264
      %v1392 = vsel %vm1390, %v1386, 0
      %v1395 = vsel %vm1390, %v1387, 0
      %v1398 = vsel %vm1390, %v1388, 0
      %v1401 = vsel %vm1390, %v1389, 0
      %1403 = vmatpush.bf16.msra.mxu0 0
      %1404 = vmatpush.bf16.msra.mxu0 0
      %1405 = vmatpush.bf16.msra.mxu0 0
      %1406 = vmatpush.bf16.msra.mxu0 0
      %1407 = vmatpush.bf16.msra.mxu0 %v1306
      %1408 = vmatpush.bf16.msra.mxu0 %v1298
      %1409 = vmatpush.bf16.msra.mxu0 %v1290
      %1410 = vmatpush.bf16.msra.mxu0 %v1282
      %1411 = vmatmul.bf16.gmra.mxu0 %v1392
      %v1412 = vpop.f32.mrf.mxu0
      %v1413 = vadd.f32 %v1333, %v1412
      %v1414 = vpop.f32.mrf.mxu0
      %v1415 = vadd.f32 %v1338, %v1414
      %1416 = vmatmul.bf16.gmra.mxu0 %v1395
      %v1417 = vpop.f32.mrf.mxu0
      %v1418 = vadd.f32 %v1343, %v1417
      %v1419 = vpop.f32.mrf.mxu0
      %v1420 = vadd.f32 %v1348, %v1419
      %1421 = vmatmul.bf16.gmra.mxu0 %v1398
      %v1422 = vpop.f32.mrf.mxu0
      %v1423 = vadd.f32 %v1353, %v1422
      %v1424 = vpop.f32.mrf.mxu0
      %v1425 = vadd.f32 %v1358, %v1424
      %1426 = vmatmul.bf16.gmra.mxu0 %v1401
      %v1427 = vpop.f32.mrf.mxu0
      %v1428 = vadd.f32 %v1363, %v1427
      %v1429 = vpop.f32.mrf.mxu0
      %v1430 = vadd.f32 %v1368, %v1429
      %1431 = vdwg.mxu0
      %1432 = vmatpush.bf16.msra.mxu0 0
      %1433 = vmatpush.bf16.msra.mxu0 0
      %1434 = vmatpush.bf16.msra.mxu0 0
      %1435 = vmatpush.bf16.msra.mxu0 0
      %1436 = vmatpush.bf16.msra.mxu0 %v1307
      %1437 = vmatpush.bf16.msra.mxu0 %v1299
      %1438 = vmatpush.bf16.msra.mxu0 %v1291
      %1439 = vmatpush.bf16.msra.mxu0 %v1283
      %1440 = vmatmul.bf16.gmra.mxu0 %v1392
      %v1441 = vpop.f32.mrf.mxu0
      %v1442 = vadd.f32 %v1333, %v1441
      %v1443 = vpop.f32.mrf.mxu0
      %v1444 = vadd.f32 %v1338, %v1443
      %1445 = vmatmul.bf16.gmra.mxu0 %v1395
      %v1446 = vpop.f32.mrf.mxu0
      %v1447 = vadd.f32 %v1343, %v1446
      %v1448 = vpop.f32.mrf.mxu0
      %v1449 = vadd.f32 %v1348, %v1448
      %1450 = vmatmul.bf16.gmra.mxu0 %v1398
      %v1451 = vpop.f32.mrf.mxu0
      %v1452 = vadd.f32 %v1353, %v1451
      %v1453 = vpop.f32.mrf.mxu0
      %v1454 = vadd.f32 %v1358, %v1453
      %1455 = vmatmul.bf16.gmra.mxu0 %v1401
      %v1456 = vpop.f32.mrf.mxu0
      %v1457 = vadd.f32 %v1363, %v1456
      %v1458 = vpop.f32.mrf.mxu0
      %v1459 = vadd.f32 %v1368, %v1458
      %1460 = vdwg.mxu0
      %1461 = vmatpush.bf16.msra.mxu0 0
      %1462 = vmatpush.bf16.msra.mxu0 0
      %1463 = vmatpush.bf16.msra.mxu0 0
      %1464 = vmatpush.bf16.msra.mxu0 0
      %1465 = vmatpush.bf16.msra.mxu0 %v1308
      %1466 = vmatpush.bf16.msra.mxu0 %v1300
      %1467 = vmatpush.bf16.msra.mxu0 %v1292
      %1468 = vmatpush.bf16.msra.mxu0 %v1284
      %1469 = vmatmul.bf16.gmra.mxu0 %v1392
      %v1470 = vpop.f32.mrf.mxu0
      %v1471 = vadd.f32 %v1333, %v1470
      %v1472 = vpop.f32.mrf.mxu0
      %v1473 = vadd.f32 %v1338, %v1472
      %1474 = vmatmul.bf16.gmra.mxu0 %v1395
      %v1475 = vpop.f32.mrf.mxu0
      %v1476 = vadd.f32 %v1343, %v1475
      %v1477 = vpop.f32.mrf.mxu0
      %v1478 = vadd.f32 %v1348, %v1477
      %1479 = vmatmul.bf16.gmra.mxu0 %v1398
      %v1480 = vpop.f32.mrf.mxu0
      %v1481 = vadd.f32 %v1353, %v1480
      %v1482 = vpop.f32.mrf.mxu0
      %v1483 = vadd.f32 %v1358, %v1482
      %1484 = vmatmul.bf16.gmra.mxu0 %v1401
      %v1485 = vpop.f32.mrf.mxu0
      %v1486 = vadd.f32 %v1363, %v1485
      %v1487 = vpop.f32.mrf.mxu0
      %v1488 = vadd.f32 %v1368, %v1487
      %1489 = vdwg.mxu0
      %1490 = vmatpush.bf16.msra.mxu0 0
      %1491 = vmatpush.bf16.msra.mxu0 0
      %1492 = vmatpush.bf16.msra.mxu0 0
      %1493 = vmatpush.bf16.msra.mxu0 0
      %1494 = vmatpush.bf16.msra.mxu0 %v1309
      %1495 = vmatpush.bf16.msra.mxu0 %v1301
      %1496 = vmatpush.bf16.msra.mxu0 %v1293
      %1497 = vmatpush.bf16.msra.mxu0 %v1285
      %1498 = vmatmul.bf16.gmra.mxu0 %v1392
      %v1499 = vpop.f32.mrf.mxu0
      %v1500 = vadd.f32 %v1333, %v1499
      %v1501 = vpop.f32.mrf.mxu0
      %v1502 = vadd.f32 %v1338, %v1501
      %1503 = vmatmul.bf16.gmra.mxu0 %v1395
      %v1504 = vpop.f32.mrf.mxu0
      %v1505 = vadd.f32 %v1343, %v1504
      %v1506 = vpop.f32.mrf.mxu0
      %v1507 = vadd.f32 %v1348, %v1506
      %1508 = vmatmul.bf16.gmra.mxu0 %v1398
      %v1509 = vpop.f32.mrf.mxu0
      %v1510 = vadd.f32 %v1353, %v1509
      %v1511 = vpop.f32.mrf.mxu0
      %v1512 = vadd.f32 %v1358, %v1511
      %1513 = vmatmul.bf16.gmra.mxu0 %v1401
      %v1514 = vpop.f32.mrf.mxu0
      %v1515 = vadd.f32 %v1363, %v1514
      %v1516 = vpop.f32.mrf.mxu0
      %v1517 = vadd.f32 %v1368, %v1516
      %1518 = vdwg.mxu0
      %1519 = vmatpush.bf16.msra.mxu0 0
      %1520 = vmatpush.bf16.msra.mxu0 0
      %1521 = vmatpush.bf16.msra.mxu0 0
      %1522 = vmatpush.bf16.msra.mxu0 0
      %1523 = vmatpush.bf16.msra.mxu0 %v1310
      %1524 = vmatpush.bf16.msra.mxu0 %v1302
      %1525 = vmatpush.bf16.msra.mxu0 %v1294
      %1526 = vmatpush.bf16.msra.mxu0 %v1286
      %1527 = vmatmul.bf16.gmra.mxu0 %v1392
      %v1528 = vpop.f32.mrf.mxu0
      %v1529 = vadd.f32 %v1333, %v1528
      %v1530 = vpop.f32.mrf.mxu0
      %v1531 = vadd.f32 %v1338, %v1530
      %1532 = vmatmul.bf16.gmra.mxu0 %v1395
      %v1533 = vpop.f32.mrf.mxu0
      %v1534 = vadd.f32 %v1343, %v1533
      %v1535 = vpop.f32.mrf.mxu0
      %v1536 = vadd.f32 %v1348, %v1535
      %1537 = vmatmul.bf16.gmra.mxu0 %v1398
      %v1538 = vpop.f32.mrf.mxu0
      %v1539 = vadd.f32 %v1353, %v1538
      %v1540 = vpop.f32.mrf.mxu0
      %v1541 = vadd.f32 %v1358, %v1540
      %1542 = vmatmul.bf16.gmra.mxu0 %v1401
      %v1543 = vpop.f32.mrf.mxu0
      %v1544 = vadd.f32 %v1363, %v1543
      %v1545 = vpop.f32.mrf.mxu0
      %v1546 = vadd.f32 %v1368, %v1545
      %1547 = vdwg.mxu0
      %1548 = vmatpush.bf16.msra.mxu0 0
      %1549 = vmatpush.bf16.msra.mxu0 0
      %1550 = vmatpush.bf16.msra.mxu0 0
      %1551 = vmatpush.bf16.msra.mxu0 0
      %1552 = vmatpush.bf16.msra.mxu0 %v1311
      %1553 = vmatpush.bf16.msra.mxu0 %v1303
      %1554 = vmatpush.bf16.msra.mxu0 %v1295
      %1555 = vmatpush.bf16.msra.mxu0 %v1287
      %1556 = vmatmul.bf16.gmra.mxu0 %v1392
      %v1557 = vpop.f32.mrf.mxu0
      %v1558 = vadd.f32 %v1333, %v1557
      %v1559 = vpop.f32.mrf.mxu0
      %v1560 = vadd.f32 %v1338, %v1559
      %1561 = vmatmul.bf16.gmra.mxu0 %v1395
      %v1562 = vpop.f32.mrf.mxu0
      %v1563 = vadd.f32 %v1343, %v1562
      %v1564 = vpop.f32.mrf.mxu0
      %v1565 = vadd.f32 %v1348, %v1564
      %1566 = vmatmul.bf16.gmra.mxu0 %v1398
      %v1567 = vpop.f32.mrf.mxu0
      %v1568 = vadd.f32 %v1353, %v1567
      %v1569 = vpop.f32.mrf.mxu0
      %v1570 = vadd.f32 %v1358, %v1569
      %1571 = vmatmul.bf16.gmra.mxu0 %v1401
      %v1572 = vpop.f32.mrf.mxu0
      %v1573 = vadd.f32 %v1363, %v1572
      %v1574 = vpop.f32.mrf.mxu0
      %v1575 = vadd.f32 %v1368, %v1574
      %1576 = vdwg.mxu0
      %1577 = vmatpush.bf16.msra.mxu0 0
      %1578 = vmatpush.bf16.msra.mxu0 0
      %1579 = vmatpush.bf16.msra.mxu0 0
      %1580 = vmatpush.bf16.msra.mxu0 0
      %1581 = vmatpush.bf16.msra.mxu0 %v1312
      %1582 = vmatpush.bf16.msra.mxu0 %v1304
      %1583 = vmatpush.bf16.msra.mxu0 %v1296
      %1584 = vmatpush.bf16.msra.mxu0 %v1288
      %1585 = vmatmul.bf16.gmra.mxu0 %v1392
      %v1586 = vpop.f32.mrf.mxu0
      %v1587 = vadd.f32 %v1333, %v1586
      %v1588 = vpop.f32.mrf.mxu0
      %v1589 = vadd.f32 %v1338, %v1588
      %1590 = vmatmul.bf16.gmra.mxu0 %v1395
      %v1591 = vpop.f32.mrf.mxu0
      %v1592 = vadd.f32 %v1343, %v1591
      %v1593 = vpop.f32.mrf.mxu0
      %v1594 = vadd.f32 %v1348, %v1593
      %1595 = vmatmul.bf16.gmra.mxu0 %v1398
      %v1596 = vpop.f32.mrf.mxu0
      %v1597 = vadd.f32 %v1353, %v1596
      %v1598 = vpop.f32.mrf.mxu0
      %v1599 = vadd.f32 %v1358, %v1598
      %1600 = vmatmul.bf16.gmra.mxu0 %v1401
      %v1601 = vpop.f32.mrf.mxu0
      %v1602 = vadd.f32 %v1363, %v1601
      %v1603 = vpop.f32.mrf.mxu0
      %v1604 = vadd.f32 %v1368, %v1603
      %1605 = vdwg.mxu0
      %1606 = vmatpush.bf16.msra.mxu0 0
      %1607 = vmatpush.bf16.msra.mxu0 0
      %1608 = vmatpush.bf16.msra.mxu0 0
      %1609 = vmatpush.bf16.msra.mxu0 0
      %1610 = vmatpush.bf16.msra.mxu0 %v1313
      %1611 = vmatpush.bf16.msra.mxu0 %v1305
      %1612 = vmatpush.bf16.msra.mxu0 %v1297
      %1613 = vmatpush.bf16.msra.mxu0 %v1289
      %1614 = vmatmul.bf16.gmra.mxu0 %v1392
      %v1615 = vpop.f32.mrf.mxu0
      %v1616 = vadd.f32 %v1333, %v1615
      %v1617 = vpop.f32.mrf.mxu0
      %v1618 = vadd.f32 %v1338, %v1617
      %1619 = vmatmul.bf16.gmra.mxu0 %v1395
      %v1620 = vpop.f32.mrf.mxu0
      %v1621 = vadd.f32 %v1343, %v1620
      %v1622 = vpop.f32.mrf.mxu0
      %v1623 = vadd.f32 %v1348, %v1622
      %1624 = vmatmul.bf16.gmra.mxu0 %v1398
      %v1625 = vpop.f32.mrf.mxu0
      %v1626 = vadd.f32 %v1353, %v1625
      %v1627 = vpop.f32.mrf.mxu0
      %v1628 = vadd.f32 %v1358, %v1627
      %1629 = vmatmul.bf16.gmra.mxu0 %v1401
      %v1630 = vpop.f32.mrf.mxu0
      %v1631 = vadd.f32 %v1363, %v1630
      %v1632 = vpop.f32.mrf.mxu0
      %v1633 = vadd.f32 %v1368, %v1632
      %1634 = vdwg.mxu0
      %v1635 = vmul.f32 %v1413, 0.01
      %v1636 = vmul.f32 %v1442, 0.01
      %v1637 = vmul.f32 %v1471, 0.01
      %v1638 = vmul.f32 %v1500, 0.01
      %v1639 = vmul.f32 %v1529, 0.01
      %v1640 = vmul.f32 %v1558, 0.01
      %v1641 = vmul.f32 %v1587, 0.01
      %v1642 = vmul.f32 %v1616, 0.01
      %v1643 = vmul.f32 %v1415, 0.01
      %v1644 = vmul.f32 %v1444, 0.01
      %v1645 = vmul.f32 %v1473, 0.01
      %v1646 = vmul.f32 %v1502, 0.01
      %v1647 = vmul.f32 %v1531, 0.01
      %v1648 = vmul.f32 %v1560, 0.01
      %v1649 = vmul.f32 %v1589, 0.01
      %v1650 = vmul.f32 %v1618, 0.01
      %v1651 = vmul.f32 %v1418, 0.01
      %v1652 = vmul.f32 %v1447, 0.01
      %v1653 = vmul.f32 %v1476, 0.01
      %v1654 = vmul.f32 %v1505, 0.01
      %v1655 = vmul.f32 %v1534, 0.01
      %v1656 = vmul.f32 %v1563, 0.01
      %v1657 = vmul.f32 %v1592, 0.01
      %v1658 = vmul.f32 %v1621, 0.01
      %v1659 = vmul.f32 %v1420, 0.01
      %v1660 = vmul.f32 %v1449, 0.01
      %v1661 = vmul.f32 %v1478, 0.01
      %v1662 = vmul.f32 %v1507, 0.01
      %v1663 = vmul.f32 %v1536, 0.01
      %v1664 = vmul.f32 %v1565, 0.01
      %v1665 = vmul.f32 %v1594, 0.01
      %v1666 = vmul.f32 %v1623, 0.01
      %v1667 = vmul.f32 %v1423, 0.01
      %v1668 = vmul.f32 %v1452, 0.01
      %v1669 = vmul.f32 %v1481, 0.01
      %v1670 = vmul.f32 %v1510, 0.01
      %v1671 = vmul.f32 %v1539, 0.01
      %v1672 = vmul.f32 %v1568, 0.01
      %v1673 = vmul.f32 %v1597, 0.01
      %v1674 = vmul.f32 %v1626, 0.01
      %v1675 = vmul.f32 %v1425, 0.01
      %v1676 = vmul.f32 %v1454, 0.01
      %v1677 = vmul.f32 %v1483, 0.01
      %v1678 = vmul.f32 %v1512, 0.01
      %v1679 = vmul.f32 %v1541, 0.01
      %v1680 = vmul.f32 %v1570, 0.01
      %v1681 = vmul.f32 %v1599, 0.01
      %v1682 = vmul.f32 %v1628, 0.01
      %v1683 = vmul.f32 %v1428, 0.01
      %v1684 = vmul.f32 %v1457, 0.01
      %v1685 = vmul.f32 %v1486, 0.01
      %v1686 = vmul.f32 %v1515, 0.01
      %v1687 = vmul.f32 %v1544, 0.01
      %v1688 = vmul.f32 %v1573, 0.01
      %v1689 = vmul.f32 %v1602, 0.01
      %v1690 = vmul.f32 %v1631, 0.01
      %v1691 = vmul.f32 %v1430, 0.01
      %v1692 = vmul.f32 %v1459, 0.01
      %v1693 = vmul.f32 %v1488, 0.01
      %v1694 = vmul.f32 %v1517, 0.01
      %v1695 = vmul.f32 %v1546, 0.01
      %v1696 = vmul.f32 %v1575, 0.01
      %v1697 = vmul.f32 %v1604, 0.01
      %v1698 = vmul.f32 %v1633, 0.01
      %v1699 = vmax.f32 %v1413, %v1635
      %v1700 = vmax.f32 %v1442, %v1636
      %v1701 = vmax.f32 %v1471, %v1637
      %v1702 = vmax.f32 %v1500, %v1638
      %v1703 = vmax.f32 %v1529, %v1639
      %v1704 = vmax.f32 %v1558, %v1640
      %v1705 = vmax.f32 %v1587, %v1641
      %v1706 = vmax.f32 %v1616, %v1642
      %v1707 = vmax.f32 %v1415, %v1643
      %v1708 = vmax.f32 %v1444, %v1644
      %v1709 = vmax.f32 %v1473, %v1645
      %v1710 = vmax.f32 %v1502, %v1646
      %v1711 = vmax.f32 %v1531, %v1647
      %v1712 = vmax.f32 %v1560, %v1648
      %v1713 = vmax.f32 %v1589, %v1649
      %v1714 = vmax.f32 %v1618, %v1650
      %v1715 = vmax.f32 %v1418, %v1651
      %v1716 = vmax.f32 %v1447, %v1652
      %v1717 = vmax.f32 %v1476, %v1653
      %v1718 = vmax.f32 %v1505, %v1654
      %v1719 = vmax.f32 %v1534, %v1655
      %v1720 = vmax.f32 %v1563, %v1656
      %v1721 = vmax.f32 %v1592, %v1657
      %v1722 = vmax.f32 %v1621, %v1658
      %v1723 = vmax.f32 %v1420, %v1659
      %v1724 = vmax.f32 %v1449, %v1660
      %v1725 = vmax.f32 %v1478, %v1661
      %v1726 = vmax.f32 %v1507, %v1662
      %v1727 = vmax.f32 %v1536, %v1663
      %v1728 = vmax.f32 %v1565, %v1664
      %v1729 = vmax.f32 %v1594, %v1665
      %v1730 = vmax.f32 %v1623, %v1666
      %v1731 = vmax.f32 %v1423, %v1667
      %v1732 = vmax.f32 %v1452, %v1668
      %v1733 = vmax.f32 %v1481, %v1669
      %v1734 = vmax.f32 %v1510, %v1670
      %v1735 = vmax.f32 %v1539, %v1671
      %v1736 = vmax.f32 %v1568, %v1672
      %v1737 = vmax.f32 %v1597, %v1673
      %v1738 = vmax.f32 %v1626, %v1674
      %v1739 = vmax.f32 %v1425, %v1675
      %v1740 = vmax.f32 %v1454, %v1676
      %v1741 = vmax.f32 %v1483, %v1677
      %v1742 = vmax.f32 %v1512, %v1678
      %v1743 = vmax.f32 %v1541, %v1679
      %v1744 = vmax.f32 %v1570, %v1680
      %v1745 = vmax.f32 %v1599, %v1681
      %v1746 = vmax.f32 %v1628, %v1682
      %v1747 = vmax.f32 %v1428, %v1683
      %v1748 = vmax.f32 %v1457, %v1684
      %v1749 = vmax.f32 %v1486, %v1685
      %v1750 = vmax.f32 %v1515, %v1686
      %v1751 = vmax.f32 %v1544, %v1687
      %v1752 = vmax.f32 %v1573, %v1688
      %v1753 = vmax.f32 %v1602, %v1689
      %v1754 = vmax.f32 %v1631, %v1690
      %v1755 = vmax.f32 %v1430, %v1691
      %v1756 = vmax.f32 %v1459, %v1692
      %v1757 = vmax.f32 %v1488, %v1693
      %v1758 = vmax.f32 %v1517, %v1694
      %v1759 = vmax.f32 %v1546, %v1695
      %v1760 = vmax.f32 %v1575, %v1696
      %v1761 = vmax.f32 %v1604, %v1697
      %v1762 = vmax.f32 %v1633, %v1698
      %v1763 = vpack.c.bf16 %v1700, %v1699
      %v1764 = vpack.c.bf16 %v1702, %v1701
      %v1765 = vpack.c.bf16 %v1704, %v1703
      %v1766 = vpack.c.bf16 %v1706, %v1705
      %v1767 = vpack.c.bf16 %v1708, %v1707
      %v1768 = vpack.c.bf16 %v1710, %v1709
      %v1769 = vpack.c.bf16 %v1712, %v1711
      %v1770 = vpack.c.bf16 %v1714, %v1713
      %v1771 = vpack.c.bf16 %v1716, %v1715
      %v1772 = vpack.c.bf16 %v1718, %v1717
      %v1773 = vpack.c.bf16 %v1720, %v1719
      %v1774 = vpack.c.bf16 %v1722, %v1721
      %v1775 = vpack.c.bf16 %v1724, %v1723
      %v1776 = vpack.c.bf16 %v1726, %v1725
      %v1777 = vpack.c.bf16 %v1728, %v1727
      %v1778 = vpack.c.bf16 %v1730, %v1729
      %v1779 = vpack.c.bf16 %v1732, %v1731
      %v1780 = vpack.c.bf16 %v1734, %v1733
      %v1781 = vpack.c.bf16 %v1736, %v1735
      %v1782 = vpack.c.bf16 %v1738, %v1737
      %v1783 = vpack.c.bf16 %v1740, %v1739
      %v1784 = vpack.c.bf16 %v1742, %v1741
      %v1785 = vpack.c.bf16 %v1744, %v1743
      %v1786 = vpack.c.bf16 %v1746, %v1745
      %v1787 = vpack.c.bf16 %v1748, %v1747
      %v1788 = vpack.c.bf16 %v1750, %v1749
      %v1789 = vpack.c.bf16 %v1752, %v1751
      %v1790 = vpack.c.bf16 %v1754, %v1753
      %v1791 = vpack.c.bf16 %v1756, %v1755
      %v1792 = vpack.c.bf16 %v1758, %v1757
      %v1793 = vpack.c.bf16 %v1760, %v1759
      %v1794 = vpack.c.bf16 %v1762, %v1761
      %v1795 = vld [vmem:[%s5] sm:$0xf]
      %v1796 = vld [vmem:[%s5 + $0x4] sm:$0xf]
      %v1797 = vld [vmem:[%s5 + $0x8] sm:$0xf]
      %v1798 = vld [vmem:[%s5 + $0xc] sm:$0xf]
      %v1799 = vld [vmem:[%s5 + $0x10] sm:$0xf]
      %v1800 = vld [vmem:[%s5 + $0x14] sm:$0xf]
      %v1801 = vld [vmem:[%s5 + $0x18] sm:$0xf]
      %v1802 = vld [vmem:[%s5 + $0x1c] sm:$0xf]
      %v1803 = vld [vmem:[%s6] sm:$0xff]
      %v1804 = vld [vmem:[%s6 + $0x8] sm:$0xff]
      %v1805 = vld [vmem:[%s6 + $0x10] sm:$0xff]
      %v1806 = vld [vmem:[%s6 + $0x18] sm:$0xff]
      %v1807 = vld [vmem:[%s6 + $0x20] sm:$0xff]
      %v1808 = vld [vmem:[%s6 + $0x28] sm:$0xff]
      %v1809 = vld [vmem:[%s6 + $0x30] sm:$0xff]
      %v1810 = vld [vmem:[%s6 + $0x38] sm:$0xff]
      %1811 = vst [vmem:[#allocation2 + $0x80] sm:$0xff] %v1763
      %1812 = vst [vmem:[#allocation2 + $0x88] sm:$0xff] %v1764
      %1813 = vst [vmem:[#allocation2 + $0x90] sm:$0xff] %v1765
      %1814 = vst [vmem:[#allocation2 + $0x98] sm:$0xff] %v1766
      %1815 = vst [vmem:[#allocation2 + $0xa0] sm:$0xff] %v1767
      %1816 = vst [vmem:[#allocation2 + $0xa8] sm:$0xff] %v1768
      %1817 = vst [vmem:[#allocation2 + $0xb0] sm:$0xff] %v1769
      %1818 = vst [vmem:[#allocation2 + $0xb8] sm:$0xff] %v1770
      %1819 = vst [vmem:[#allocation2 + $0xc0] sm:$0xff] %v1771
      %1820 = vst [vmem:[#allocation2 + $0xc8] sm:$0xff] %v1772
      %1821 = vst [vmem:[#allocation2 + $0xd0] sm:$0xff] %v1773
      %1822 = vst [vmem:[#allocation2 + $0xd8] sm:$0xff] %v1774
      %1823 = vst [vmem:[#allocation2 + $0xe0] sm:$0xff] %v1775
      %1824 = vst [vmem:[#allocation2 + $0xe8] sm:$0xff] %v1776
      %1825 = vst [vmem:[#allocation2 + $0xf0] sm:$0xff] %v1777
      %1826 = vst [vmem:[#allocation2 + $0xf8] sm:$0xff] %v1778
      %1827 = vst [vmem:[#allocation2 + $0x100] sm:$0xff] %v1779
      %1828 = vst [vmem:[#allocation2 + $0x108] sm:$0xff] %v1780
      %1829 = vst [vmem:[#allocation2 + $0x110] sm:$0xff] %v1781
      %1830 = vst [vmem:[#allocation2 + $0x118] sm:$0xff] %v1782
      %1831 = vst [vmem:[#allocation2 + $0x120] sm:$0xff] %v1783
      %1832 = vst [vmem:[#allocation2 + $0x128] sm:$0xff] %v1784
      %1833 = vst [vmem:[#allocation2 + $0x130] sm:$0xff] %v1785
      %1834 = vst [vmem:[#allocation2 + $0x138] sm:$0xff] %v1786
      %1835 = vst [vmem:[#allocation2 + $0x140] sm:$0xff] %v1787
      %1836 = vst [vmem:[#allocation2 + $0x148] sm:$0xff] %v1788
      %1837 = vst [vmem:[#allocation2 + $0x150] sm:$0xff] %v1789
      %1838 = vst [vmem:[#allocation2 + $0x158] sm:$0xff] %v1790
      %1839 = vst [vmem:[#allocation2 + $0x160] sm:$0xff] %v1791
      %1840 = vst [vmem:[#allocation2 + $0x168] sm:$0xff] %v1792
      %1841 = vst [vmem:[#allocation2 + $0x170] sm:$0xff] %v1793
      %1842 = vst [vmem:[#allocation2 + $0x178] sm:$0xff] %v1794
      %v1843 = vld [vmem:[#allocation2] sm:$0xff]
      %v1844 = vld [vmem:[#allocation2 + $0x8] sm:$0xff]
      %v1845 = vld [vmem:[#allocation2 + $0x10] sm:$0xff]
      %v1846 = vld [vmem:[#allocation2 + $0x18] sm:$0xff]
      %v1847 = vld [vmem:[#allocation2 + $0x20] sm:$0xff]
      %v1848 = vld [vmem:[#allocation2 + $0x28] sm:$0xff]
      %v1849 = vld [vmem:[#allocation2 + $0x30] sm:$0xff]
      %v1850 = vld [vmem:[#allocation2 + $0x38] sm:$0xff]
      %v1851 = vld [vmem:[#allocation2 + $0x40] sm:$0xff]
      %v1852 = vld [vmem:[#allocation2 + $0x48] sm:$0xff]
      %v1853 = vld [vmem:[#allocation2 + $0x50] sm:$0xff]
      %v1854 = vld [vmem:[#allocation2 + $0x58] sm:$0xff]
      %v1855 = vld [vmem:[#allocation2 + $0x60] sm:$0xff]
      %v1856 = vld [vmem:[#allocation2 + $0x68] sm:$0xff]
      %v1857 = vld [vmem:[#allocation2 + $0x70] sm:$0xff]
      %v1858 = vld [vmem:[#allocation2 + $0x78] sm:$0xff]
      %v1859 = vld [vmem:[#allocation2 + $0x80] sm:$0xff]
      %v1860 = vld [vmem:[#allocation2 + $0x88] sm:$0xff]
      %v1861 = vld [vmem:[#allocation2 + $0x90] sm:$0xff]
      %v1862 = vld [vmem:[#allocation2 + $0x98] sm:$0xff]
      %v1863 = vld [vmem:[#allocation2 + $0xa0] sm:$0xff]
      %v1864 = vld [vmem:[#allocation2 + $0xa8] sm:$0xff]
      %v1865 = vld [vmem:[#allocation2 + $0xb0] sm:$0xff]
      %v1866 = vld [vmem:[#allocation2 + $0xb8] sm:$0xff]
      %v1867 = vld [vmem:[#allocation2 + $0xc0] sm:$0xff]
      %v1868 = vld [vmem:[#allocation2 + $0xc8] sm:$0xff]
      %v1869 = vld [vmem:[#allocation2 + $0xd0] sm:$0xff]
      %v1870 = vld [vmem:[#allocation2 + $0xd8] sm:$0xff]
      %v1871 = vld [vmem:[#allocation2 + $0xe0] sm:$0xff]
      %v1872 = vld [vmem:[#allocation2 + $0xe8] sm:$0xff]
      %v1873 = vld [vmem:[#allocation2 + $0xf0] sm:$0xff]
      %v1874 = vld [vmem:[#allocation2 + $0xf8] sm:$0xff]
      %v1875 = vld [vmem:[#allocation2 + $0x100] sm:$0xff]
      %v1876 = vld [vmem:[#allocation2 + $0x108] sm:$0xff]
      %v1877 = vld [vmem:[#allocation2 + $0x110] sm:$0xff]
      %v1878 = vld [vmem:[#allocation2 + $0x118] sm:$0xff]
      %v1879 = vld [vmem:[#allocation2 + $0x120] sm:$0xff]
      %v1880 = vld [vmem:[#allocation2 + $0x128] sm:$0xff]
      %v1881 = vld [vmem:[#allocation2 + $0x130] sm:$0xff]
      %v1882 = vld [vmem:[#allocation2 + $0x138] sm:$0xff]
      %v1883 = vld [vmem:[#allocation2 + $0x140] sm:$0xff]
      %v1884 = vld [vmem:[#allocation2 + $0x148] sm:$0xff]
      %v1885 = vld [vmem:[#allocation2 + $0x150] sm:$0xff]
      %v1886 = vld [vmem:[#allocation2 + $0x158] sm:$0xff]
      %v1887 = vld [vmem:[#allocation2 + $0x160] sm:$0xff]
      %v1888 = vld [vmem:[#allocation2 + $0x168] sm:$0xff]
      %v1889 = vld [vmem:[#allocation2 + $0x170] sm:$0xff]
      %v1890 = vld [vmem:[#allocation2 + $0x178] sm:$0xff]
      %1892 = vset.pattern.permute.xlu0 0
      %1893 = vperm.xlu0 %1892, %v1803
      %v1894 = vpop.permute.xlu0 %1893
      %1897 = vset.pattern.permute.xlu0 0
      %1898 = vperm.xlu0 %1897, %v1804
      %v1899 = vpop.permute.xlu0 %1898
      %1902 = vset.pattern.permute.xlu0 0
      %1903 = vperm.xlu0 %1902, %v1805
      %v1904 = vpop.permute.xlu0 %1903
      %1907 = vset.pattern.permute.xlu0 0
      %1908 = vperm.xlu0 %1907, %v1806
      %v1909 = vpop.permute.xlu0 %1908
      %1912 = vset.pattern.permute.xlu0 0
      %1913 = vperm.xlu0 %1912, %v1807
      %v1914 = vpop.permute.xlu0 %1913
      %1917 = vset.pattern.permute.xlu0 0
      %1918 = vperm.xlu0 %1917, %v1808
      %v1919 = vpop.permute.xlu0 %1918
      %1922 = vset.pattern.permute.xlu0 0
      %1923 = vperm.xlu0 %1922, %v1809
      %v1924 = vpop.permute.xlu0 %1923
      %1927 = vset.pattern.permute.xlu0 0
      %1928 = vperm.xlu0 %1927, %v1810
      %v1929 = vpop.permute.xlu0 %1928
      %v1939 = vunpack.c.l.b16 %v1795
      %v1940 = vunpack.c.l.b16 %v1796
      %v1941 = vunpack.c.l.b16 %v1797
      %v1942 = vunpack.c.l.b16 %v1798
      %v1943 = vunpack.c.l.b16 %v1799
      %v1944 = vunpack.c.l.b16 %v1800
      %v1945 = vunpack.c.l.b16 %v1801
      %v1946 = vunpack.c.l.b16 %v1802
      %v1947 = vpack.c.b16 %v1940, %v1939
      %v1948 = vpack.c.b16 %v1942, %v1941
      %v1949 = vpack.c.b16 %v1944, %v1943
      %v1950 = vpack.c.b16 %v1946, %v1945
      %v1999 = vunpack.c.l.b16 %v1843
      %v2000 = vunpack.c.h.b16 %v1843
      %v2001 = vunpack.c.l.b16 %v1844
      %v2002 = vunpack.c.h.b16 %v1844
      %v2003 = vunpack.c.l.b16 %v1845
      %v2004 = vunpack.c.h.b16 %v1845
      %v2005 = vunpack.c.l.b16 %v1846
      %v2006 = vunpack.c.h.b16 %v1846
      %v2007 = vunpack.c.l.b16 %v1847
      %v2008 = vunpack.c.h.b16 %v1847
      %v2009 = vunpack.c.l.b16 %v1848
      %v2010 = vunpack.c.h.b16 %v1848
      %v2011 = vunpack.c.l.b16 %v1849
      %v2012 = vunpack.c.h.b16 %v1849
      %v2013 = vunpack.c.l.b16 %v1850
      %v2014 = vunpack.c.h.b16 %v1850
      %v2015 = vunpack.c.l.b16 %v1851
      %v2016 = vunpack.c.h.b16 %v1851
      %v2017 = vunpack.c.l.b16 %v1852
      %v2018 = vunpack.c.h.b16 %v1852
      %v2019 = vunpack.c.l.b16 %v1853
      %v2020 = vunpack.c.h.b16 %v1853
      %v2021 = vunpack.c.l.b16 %v1854
      %v2022 = vunpack.c.h.b16 %v1854
      %v2023 = vunpack.c.l.b16 %v1855
      %v2024 = vunpack.c.h.b16 %v1855
      %v2025 = vunpack.c.l.b16 %v1856
      %v2026 = vunpack.c.h.b16 %v1856
      %v2027 = vunpack.c.l.b16 %v1857
      %v2028 = vunpack.c.h.b16 %v1857
      %v2029 = vunpack.c.l.b16 %v1858
      %v2030 = vunpack.c.h.b16 %v1858
      %v2031 = vunpack.c.l.b16 %v1859
      %v2032 = vunpack.c.h.b16 %v1859
      %v2033 = vunpack.c.l.b16 %v1860
      %v2034 = vunpack.c.h.b16 %v1860
      %v2035 = vunpack.c.l.b16 %v1861
      %v2036 = vunpack.c.h.b16 %v1861
      %v2037 = vunpack.c.l.b16 %v1862
      %v2038 = vunpack.c.h.b16 %v1862
      %v2039 = vunpack.c.l.b16 %v1863
      %v2040 = vunpack.c.h.b16 %v1863
      %v2041 = vunpack.c.l.b16 %v1864
      %v2042 = vunpack.c.h.b16 %v1864
      %v2043 = vunpack.c.l.b16 %v1865
      %v2044 = vunpack.c.h.b16 %v1865
      %v2045 = vunpack.c.l.b16 %v1866
      %v2046 = vunpack.c.h.b16 %v1866
      %v2047 = vunpack.c.l.b16 %v1867
      %v2048 = vunpack.c.h.b16 %v1867
      %v2049 = vunpack.c.l.b16 %v1868
      %v2050 = vunpack.c.h.b16 %v1868
      %v2051 = vunpack.c.l.b16 %v1869
      %v2052 = vunpack.c.h.b16 %v1869
      %v2053 = vunpack.c.l.b16 %v1870
      %v2054 = vunpack.c.h.b16 %v1870
      %v2055 = vunpack.c.l.b16 %v1871
      %v2056 = vunpack.c.h.b16 %v1871
      %v2057 = vunpack.c.l.b16 %v1872
      %v2058 = vunpack.c.h.b16 %v1872
      %v2059 = vunpack.c.l.b16 %v1873
      %v2060 = vunpack.c.h.b16 %v1873
      %v2061 = vunpack.c.l.b16 %v1874
      %v2062 = vunpack.c.h.b16 %v1874
      %v2063 = vunpack.c.l.b16 %v1875
      %v2064 = vunpack.c.h.b16 %v1875
      %v2065 = vunpack.c.l.b16 %v1876
      %v2066 = vunpack.c.h.b16 %v1876
      %v2067 = vunpack.c.l.b16 %v1877
      %v2068 = vunpack.c.h.b16 %v1877
      %v2069 = vunpack.c.l.b16 %v1878
      %v2070 = vunpack.c.h.b16 %v1878
      %v2071 = vunpack.c.l.b16 %v1879
      %v2072 = vunpack.c.h.b16 %v1879
      %v2073 = vunpack.c.l.b16 %v1880
      %v2074 = vunpack.c.h.b16 %v1880
      %v2075 = vunpack.c.l.b16 %v1881
      %v2076 = vunpack.c.h.b16 %v1881
      %v2077 = vunpack.c.l.b16 %v1882
      %v2078 = vunpack.c.h.b16 %v1882
      %v2079 = vunpack.c.l.b16 %v1883
      %v2080 = vunpack.c.h.b16 %v1883
      %v2081 = vunpack.c.l.b16 %v1884
      %v2082 = vunpack.c.h.b16 %v1884
      %v2083 = vunpack.c.l.b16 %v1885
      %v2084 = vunpack.c.h.b16 %v1885
      %v2085 = vunpack.c.l.b16 %v1886
      %v2086 = vunpack.c.h.b16 %v1886
      %v2087 = vunpack.c.l.b16 %v1887
      %v2088 = vunpack.c.h.b16 %v1887
      %v2089 = vunpack.c.l.b16 %v1888
      %v2090 = vunpack.c.h.b16 %v1888
      %v2091 = vunpack.c.l.b16 %v1889
      %v2092 = vunpack.c.h.b16 %v1889
      %v2093 = vunpack.c.l.b16 %v1890
      %v2094 = vunpack.c.h.b16 %v1890
      %v2095 = vpack.c.b16 %v2007, %v1999
      %v2096 = vpack.c.b16 %v2008, %v2000
      %v2097 = vpack.c.b16 %v2009, %v2001
      %v2098 = vpack.c.b16 %v2010, %v2002
      %v2099 = vpack.c.b16 %v2011, %v2003
      %v2100 = vpack.c.b16 %v2012, %v2004
      %v2101 = vpack.c.b16 %v2013, %v2005
      %v2102 = vpack.c.b16 %v2014, %v2006
      %v2103 = vpack.c.b16 %v2023, %v2015
      %v2104 = vpack.c.b16 %v2024, %v2016
      %v2105 = vpack.c.b16 %v2025, %v2017
      %v2106 = vpack.c.b16 %v2026, %v2018
      %v2107 = vpack.c.b16 %v2027, %v2019
      %v2108 = vpack.c.b16 %v2028, %v2020
      %v2109 = vpack.c.b16 %v2029, %v2021
      %v2110 = vpack.c.b16 %v2030, %v2022
      %v2111 = vpack.c.b16 %v2039, %v2031
      %v2112 = vpack.c.b16 %v2040, %v2032
      %v2113 = vpack.c.b16 %v2041, %v2033
      %v2114 = vpack.c.b16 %v2042, %v2034
      %v2115 = vpack.c.b16 %v2043, %v2035
      %v2116 = vpack.c.b16 %v2044, %v2036
      %v2117 = vpack.c.b16 %v2045, %v2037
      %v2118 = vpack.c.b16 %v2046, %v2038
      %v2119 = vpack.c.b16 %v2055, %v2047
      %v2120 = vpack.c.b16 %v2056, %v2048
      %v2121 = vpack.c.b16 %v2057, %v2049
      %v2122 = vpack.c.b16 %v2058, %v2050
      %v2123 = vpack.c.b16 %v2059, %v2051
      %v2124 = vpack.c.b16 %v2060, %v2052
      %v2125 = vpack.c.b16 %v2061, %v2053
      %v2126 = vpack.c.b16 %v2062, %v2054
      %v2127 = vpack.c.b16 %v2071, %v2063
      %v2128 = vpack.c.b16 %v2072, %v2064
      %v2129 = vpack.c.b16 %v2073, %v2065
      %v2130 = vpack.c.b16 %v2074, %v2066
      %v2131 = vpack.c.b16 %v2075, %v2067
      %v2132 = vpack.c.b16 %v2076, %v2068
      %v2133 = vpack.c.b16 %v2077, %v2069
      %v2134 = vpack.c.b16 %v2078, %v2070
      %v2135 = vpack.c.b16 %v2087, %v2079
      %v2136 = vpack.c.b16 %v2088, %v2080
      %v2137 = vpack.c.b16 %v2089, %v2081
      %v2138 = vpack.c.b16 %v2090, %v2082
      %v2139 = vpack.c.b16 %v2091, %v2083
      %v2140 = vpack.c.b16 %v2092, %v2084
      %v2141 = vpack.c.b16 %v2093, %v2085
      %v2142 = vpack.c.b16 %v2094, %v2086
      %vm2191 = vcmask 785408
      %v2193 = vsel %vm2191, %v1947, 0
      %v2196 = vsel %vm2191, %v1948, 0
      %v2199 = vsel %vm2191, %v1949, 0
      %v2202 = vsel %vm2191, %v1950, 0
      %2204 = vmatpush.bf16.msra.mxu0 0
      %2205 = vmatpush.bf16.msra.mxu0 0
      %2206 = vmatpush.bf16.msra.mxu0 %v2135
      %2207 = vmatpush.bf16.msra.mxu0 %v2127
      %2208 = vmatpush.bf16.msra.mxu0 %v2119
      %2209 = vmatpush.bf16.msra.mxu0 %v2111
      %2210 = vmatpush.bf16.msra.mxu0 %v2103
      %2211 = vmatpush.bf16.msra.mxu0 %v2095
      %2212 = vmatmul.bf16.gmra.mxu0 %v2193
      %v2213 = vpop.f32.mrf.mxu0
      %v2214 = vadd.f32 %v1894, %v2213
      %v2215 = vpop.f32.mrf.mxu0
      %v2216 = vadd.f32 %v1899, %v2215
      %2217 = vmatmul.bf16.gmra.mxu0 %v2196
      %v2218 = vpop.f32.mrf.mxu0
      %v2219 = vadd.f32 %v1904, %v2218
      %v2220 = vpop.f32.mrf.mxu0
      %v2221 = vadd.f32 %v1909, %v2220
      %2222 = vmatmul.bf16.gmra.mxu0 %v2199
      %v2223 = vpop.f32.mrf.mxu0
      %v2224 = vadd.f32 %v1914, %v2223
      %v2225 = vpop.f32.mrf.mxu0
      %v2226 = vadd.f32 %v1919, %v2225
      %2227 = vmatmul.bf16.gmra.mxu0 %v2202
      %v2228 = vpop.f32.mrf.mxu0
      %v2229 = vadd.f32 %v1924, %v2228
      %v2230 = vpop.f32.mrf.mxu0
      %v2231 = vadd.f32 %v1929, %v2230
      %2232 = vdwg.mxu0
      %2233 = vmatpush.bf16.msra.mxu0 0
      %2234 = vmatpush.bf16.msra.mxu0 0
      %2235 = vmatpush.bf16.msra.mxu0 %v2136
      %2236 = vmatpush.bf16.msra.mxu0 %v2128
      %2237 = vmatpush.bf16.msra.mxu0 %v2120
      %2238 = vmatpush.bf16.msra.mxu0 %v2112
      %2239 = vmatpush.bf16.msra.mxu0 %v2104
      %2240 = vmatpush.bf16.msra.mxu0 %v2096
      %2241 = vmatmul.bf16.gmra.mxu0 %v2193
      %v2242 = vpop.f32.mrf.mxu0
      %v2243 = vadd.f32 %v1894, %v2242
      %v2244 = vpop.f32.mrf.mxu0
      %v2245 = vadd.f32 %v1899, %v2244
      %2246 = vmatmul.bf16.gmra.mxu0 %v2196
      %v2247 = vpop.f32.mrf.mxu0
      %v2248 = vadd.f32 %v1904, %v2247
      %v2249 = vpop.f32.mrf.mxu0
      %v2250 = vadd.f32 %v1909, %v2249
      %2251 = vmatmul.bf16.gmra.mxu0 %v2199
      %v2252 = vpop.f32.mrf.mxu0
      %v2253 = vadd.f32 %v1914, %v2252
      %v2254 = vpop.f32.mrf.mxu0
      %v2255 = vadd.f32 %v1919, %v2254
      %2256 = vmatmul.bf16.gmra.mxu0 %v2202
      %v2257 = vpop.f32.mrf.mxu0
      %v2258 = vadd.f32 %v1924, %v2257
      %v2259 = vpop.f32.mrf.mxu0
      %v2260 = vadd.f32 %v1929, %v2259
      %2261 = vdwg.mxu0
      %2262 = vmatpush.bf16.msra.mxu0 0
      %2263 = vmatpush.bf16.msra.mxu0 0
      %2264 = vmatpush.bf16.msra.mxu0 %v2137
      %2265 = vmatpush.bf16.msra.mxu0 %v2129
      %2266 = vmatpush.bf16.msra.mxu0 %v2121
      %2267 = vmatpush.bf16.msra.mxu0 %v2113
      %2268 = vmatpush.bf16.msra.mxu0 %v2105
      %2269 = vmatpush.bf16.msra.mxu0 %v2097
      %2270 = vmatmul.bf16.gmra.mxu0 %v2193
      %v2271 = vpop.f32.mrf.mxu0
      %v2272 = vadd.f32 %v1894, %v2271
      %v2273 = vpop.f32.mrf.mxu0
      %v2274 = vadd.f32 %v1899, %v2273
      %2275 = vmatmul.bf16.gmra.mxu0 %v2196
      %v2276 = vpop.f32.mrf.mxu0
      %v2277 = vadd.f32 %v1904, %v2276
      %v2278 = vpop.f32.mrf.mxu0
      %v2279 = vadd.f32 %v1909, %v2278
      %2280 = vmatmul.bf16.gmra.mxu0 %v2199
      %v2281 = vpop.f32.mrf.mxu0
      %v2282 = vadd.f32 %v1914, %v2281
      %v2283 = vpop.f32.mrf.mxu0
      %v2284 = vadd.f32 %v1919, %v2283
      %2285 = vmatmul.bf16.gmra.mxu0 %v2202
      %v2286 = vpop.f32.mrf.mxu0
      %v2287 = vadd.f32 %v1924, %v2286
      %v2288 = vpop.f32.mrf.mxu0
      %v2289 = vadd.f32 %v1929, %v2288
      %2290 = vdwg.mxu0
      %2291 = vmatpush.bf16.msra.mxu0 0
      %2292 = vmatpush.bf16.msra.mxu0 0
      %2293 = vmatpush.bf16.msra.mxu0 %v2138
      %2294 = vmatpush.bf16.msra.mxu0 %v2130
      %2295 = vmatpush.bf16.msra.mxu0 %v2122
      %2296 = vmatpush.bf16.msra.mxu0 %v2114
      %2297 = vmatpush.bf16.msra.mxu0 %v2106
      %2298 = vmatpush.bf16.msra.mxu0 %v2098
      %2299 = vmatmul.bf16.gmra.mxu0 %v2193
      %v2300 = vpop.f32.mrf.mxu0
      %v2301 = vadd.f32 %v1894, %v2300
      %v2302 = vpop.f32.mrf.mxu0
      %v2303 = vadd.f32 %v1899, %v2302
      %2304 = vmatmul.bf16.gmra.mxu0 %v2196
      %v2305 = vpop.f32.mrf.mxu0
      %v2306 = vadd.f32 %v1904, %v2305
      %v2307 = vpop.f32.mrf.mxu0
      %v2308 = vadd.f32 %v1909, %v2307
      %2309 = vmatmul.bf16.gmra.mxu0 %v2199
      %v2310 = vpop.f32.mrf.mxu0
      %v2311 = vadd.f32 %v1914, %v2310
      %v2312 = vpop.f32.mrf.mxu0
      %v2313 = vadd.f32 %v1919, %v2312
      %2314 = vmatmul.bf16.gmra.mxu0 %v2202
      %v2315 = vpop.f32.mrf.mxu0
      %v2316 = vadd.f32 %v1924, %v2315
      %v2317 = vpop.f32.mrf.mxu0
      %v2318 = vadd.f32 %v1929, %v2317
      %2319 = vdwg.mxu0
      %2320 = vmatpush.bf16.msra.mxu0 0
      %2321 = vmatpush.bf16.msra.mxu0 0
      %2322 = vmatpush.bf16.msra.mxu0 %v2139
      %2323 = vmatpush.bf16.msra.mxu0 %v2131
      %2324 = vmatpush.bf16.msra.mxu0 %v2123
      %2325 = vmatpush.bf16.msra.mxu0 %v2115
      %2326 = vmatpush.bf16.msra.mxu0 %v2107
      %2327 = vmatpush.bf16.msra.mxu0 %v2099
      %2328 = vmatmul.bf16.gmra.mxu0 %v2193
      %v2329 = vpop.f32.mrf.mxu0
      %v2330 = vadd.f32 %v1894, %v2329
      %v2331 = vpop.f32.mrf.mxu0
      %v2332 = vadd.f32 %v1899, %v2331
      %2333 = vmatmul.bf16.gmra.mxu0 %v2196
      %v2334 = vpop.f32.mrf.mxu0
      %v2335 = vadd.f32 %v1904, %v2334
      %v2336 = vpop.f32.mrf.mxu0
      %v2337 = vadd.f32 %v1909, %v2336
      %2338 = vmatmul.bf16.gmra.mxu0 %v2199
      %v2339 = vpop.f32.mrf.mxu0
      %v2340 = vadd.f32 %v1914, %v2339
      %v2341 = vpop.f32.mrf.mxu0
      %v2342 = vadd.f32 %v1919, %v2341
      %2343 = vmatmul.bf16.gmra.mxu0 %v2202
      %v2344 = vpop.f32.mrf.mxu0
      %v2345 = vadd.f32 %v1924, %v2344
      %v2346 = vpop.f32.mrf.mxu0
      %v2347 = vadd.f32 %v1929, %v2346
      %2348 = vdwg.mxu0
      %2349 = vmatpush.bf16.msra.mxu0 0
      %2350 = vmatpush.bf16.msra.mxu0 0
      %2351 = vmatpush.bf16.msra.mxu0 %v2140
      %2352 = vmatpush.bf16.msra.mxu0 %v2132
      %2353 = vmatpush.bf16.msra.mxu0 %v2124
      %2354 = vmatpush.bf16.msra.mxu0 %v2116
      %2355 = vmatpush.bf16.msra.mxu0 %v2108
      %2356 = vmatpush.bf16.msra.mxu0 %v2100
      %2357 = vmatmul.bf16.gmra.mxu0 %v2193
      %v2358 = vpop.f32.mrf.mxu0
      %v2359 = vadd.f32 %v1894, %v2358
      %v2360 = vpop.f32.mrf.mxu0
      %v2361 = vadd.f32 %v1899, %v2360
      %2362 = vmatmul.bf16.gmra.mxu0 %v2196
      %v2363 = vpop.f32.mrf.mxu0
      %v2364 = vadd.f32 %v1904, %v2363
      %v2365 = vpop.f32.mrf.mxu0
      %v2366 = vadd.f32 %v1909, %v2365
      %2367 = vmatmul.bf16.gmra.mxu0 %v2199
      %v2368 = vpop.f32.mrf.mxu0
      %v2369 = vadd.f32 %v1914, %v2368
      %v2370 = vpop.f32.mrf.mxu0
      %v2371 = vadd.f32 %v1919, %v2370
      %2372 = vmatmul.bf16.gmra.mxu0 %v2202
      %v2373 = vpop.f32.mrf.mxu0
      %v2374 = vadd.f32 %v1924, %v2373
      %v2375 = vpop.f32.mrf.mxu0
      %v2376 = vadd.f32 %v1929, %v2375
      %2377 = vdwg.mxu0
      %2378 = vmatpush.bf16.msra.mxu0 0
      %2379 = vmatpush.bf16.msra.mxu0 0
      %2380 = vmatpush.bf16.msra.mxu0 %v2141
      %2381 = vmatpush.bf16.msra.mxu0 %v2133
      %2382 = vmatpush.bf16.msra.mxu0 %v2125
      %2383 = vmatpush.bf16.msra.mxu0 %v2117
      %2384 = vmatpush.bf16.msra.mxu0 %v2109
      %2385 = vmatpush.bf16.msra.mxu0 %v2101
      %2386 = vmatmul.bf16.gmra.mxu0 %v2193
      %v2387 = vpop.f32.mrf.mxu0
      %v2388 = vadd.f32 %v1894, %v2387
      %v2389 = vpop.f32.mrf.mxu0
      %v2390 = vadd.f32 %v1899, %v2389
      %2391 = vmatmul.bf16.gmra.mxu0 %v2196
      %v2392 = vpop.f32.mrf.mxu0
      %v2393 = vadd.f32 %v1904, %v2392
      %v2394 = vpop.f32.mrf.mxu0
      %v2395 = vadd.f32 %v1909, %v2394
      %2396 = vmatmul.bf16.gmra.mxu0 %v2199
      %v2397 = vpop.f32.mrf.mxu0
      %v2398 = vadd.f32 %v1914, %v2397
      %v2399 = vpop.f32.mrf.mxu0
      %v2400 = vadd.f32 %v1919, %v2399
      %2401 = vmatmul.bf16.gmra.mxu0 %v2202
      %v2402 = vpop.f32.mrf.mxu0
      %v2403 = vadd.f32 %v1924, %v2402
      %v2404 = vpop.f32.mrf.mxu0
      %v2405 = vadd.f32 %v1929, %v2404
      %2406 = vdwg.mxu0
      %2407 = vmatpush.bf16.msra.mxu0 0
      %2408 = vmatpush.bf16.msra.mxu0 0
      %2409 = vmatpush.bf16.msra.mxu0 %v2142
      %2410 = vmatpush.bf16.msra.mxu0 %v2134
      %2411 = vmatpush.bf16.msra.mxu0 %v2126
      %2412 = vmatpush.bf16.msra.mxu0 %v2118
      %2413 = vmatpush.bf16.msra.mxu0 %v2110
      %2414 = vmatpush.bf16.msra.mxu0 %v2102
      %2415 = vmatmul.bf16.gmra.mxu0 %v2193
      %v2416 = vpop.f32.mrf.mxu0
      %v2417 = vadd.f32 %v1894, %v2416
      %v2418 = vpop.f32.mrf.mxu0
      %v2419 = vadd.f32 %v1899, %v2418
      %2420 = vmatmul.bf16.gmra.mxu0 %v2196
      %v2421 = vpop.f32.mrf.mxu0
      %v2422 = vadd.f32 %v1904, %v2421
      %v2423 = vpop.f32.mrf.mxu0
      %v2424 = vadd.f32 %v1909, %v2423
      %2425 = vmatmul.bf16.gmra.mxu0 %v2199
      %v2426 = vpop.f32.mrf.mxu0
      %v2427 = vadd.f32 %v1914, %v2426
      %v2428 = vpop.f32.mrf.mxu0
      %v2429 = vadd.f32 %v1919, %v2428
      %2430 = vmatmul.bf16.gmra.mxu0 %v2202
      %v2431 = vpop.f32.mrf.mxu0
      %v2432 = vadd.f32 %v1924, %v2431
      %v2433 = vpop.f32.mrf.mxu0
      %v2434 = vadd.f32 %v1929, %v2433
      %2435 = vdwg.mxu0
      %v2436 = vmul.f32 %v2214, 0.01
      %v2437 = vmul.f32 %v2243, 0.01
      %v2438 = vmul.f32 %v2272, 0.01
      %v2439 = vmul.f32 %v2301, 0.01
      %v2440 = vmul.f32 %v2330, 0.01
      %v2441 = vmul.f32 %v2359, 0.01
      %v2442 = vmul.f32 %v2388, 0.01
      %v2443 = vmul.f32 %v2417, 0.01
      %v2444 = vmul.f32 %v2216, 0.01
      %v2445 = vmul.f32 %v2245, 0.01
      %v2446 = vmul.f32 %v2274, 0.01
      %v2447 = vmul.f32 %v2303, 0.01
      %v2448 = vmul.f32 %v2332, 0.01
      %v2449 = vmul.f32 %v2361, 0.01
      %v2450 = vmul.f32 %v2390, 0.01
      %v2451 = vmul.f32 %v2419, 0.01
      %v2452 = vmul.f32 %v2219, 0.01
      %v2453 = vmul.f32 %v2248, 0.01
      %v2454 = vmul.f32 %v2277, 0.01
      %v2455 = vmul.f32 %v2306, 0.01
      %v2456 = vmul.f32 %v2335, 0.01
      %v2457 = vmul.f32 %v2364, 0.01
      %v2458 = vmul.f32 %v2393, 0.01
      %v2459 = vmul.f32 %v2422, 0.01
      %v2460 = vmul.f32 %v2221, 0.01
      %v2461 = vmul.f32 %v2250, 0.01
      %v2462 = vmul.f32 %v2279, 0.01
      %v2463 = vmul.f32 %v2308, 0.01
      %v2464 = vmul.f32 %v2337, 0.01
      %v2465 = vmul.f32 %v2366, 0.01
      %v2466 = vmul.f32 %v2395, 0.01
      %v2467 = vmul.f32 %v2424, 0.01
      %v2468 = vmul.f32 %v2224, 0.01
      %v2469 = vmul.f32 %v2253, 0.01
      %v2470 = vmul.f32 %v2282, 0.01
      %v2471 = vmul.f32 %v2311, 0.01
      %v2472 = vmul.f32 %v2340, 0.01
      %v2473 = vmul.f32 %v2369, 0.01
      %v2474 = vmul.f32 %v2398, 0.01
      %v2475 = vmul.f32 %v2427, 0.01
      %v2476 = vmul.f32 %v2226, 0.01
      %v2477 = vmul.f32 %v2255, 0.01
      %v2478 = vmul.f32 %v2284, 0.01
      %v2479 = vmul.f32 %v2313, 0.01
      %v2480 = vmul.f32 %v2342, 0.01
      %v2481 = vmul.f32 %v2371, 0.01
      %v2482 = vmul.f32 %v2400, 0.01
      %v2483 = vmul.f32 %v2429, 0.01
      %v2484 = vmul.f32 %v2229, 0.01
      %v2485 = vmul.f32 %v2258, 0.01
      %v2486 = vmul.f32 %v2287, 0.01
      %v2487 = vmul.f32 %v2316, 0.01
      %v2488 = vmul.f32 %v2345, 0.01
      %v2489 = vmul.f32 %v2374, 0.01
      %v2490 = vmul.f32 %v2403, 0.01
      %v2491 = vmul.f32 %v2432, 0.01
      %v2492 = vmul.f32 %v2231, 0.01
      %v2493 = vmul.f32 %v2260, 0.01
      %v2494 = vmul.f32 %v2289, 0.01
      %v2495 = vmul.f32 %v2318, 0.01
      %v2496 = vmul.f32 %v2347, 0.01
      %v2497 = vmul.f32 %v2376, 0.01
      %v2498 = vmul.f32 %v2405, 0.01
      %v2499 = vmul.f32 %v2434, 0.01
      %v2500 = vmax.f32 %v2214, %v2436
      %v2501 = vmax.f32 %v2243, %v2437
      %v2502 = vmax.f32 %v2272, %v2438
      %v2503 = vmax.f32 %v2301, %v2439
      %v2504 = vmax.f32 %v2330, %v2440
      %v2505 = vmax.f32 %v2359, %v2441
      %v2506 = vmax.f32 %v2388, %v2442
      %v2507 = vmax.f32 %v2417, %v2443
      %v2508 = vmax.f32 %v2216, %v2444
      %v2509 = vmax.f32 %v2245, %v2445
      %v2510 = vmax.f32 %v2274, %v2446
      %v2511 = vmax.f32 %v2303, %v2447
      %v2512 = vmax.f32 %v2332, %v2448
      %v2513 = vmax.f32 %v2361, %v2449
      %v2514 = vmax.f32 %v2390, %v2450
      %v2515 = vmax.f32 %v2419, %v2451
      %v2516 = vmax.f32 %v2219, %v2452
      %v2517 = vmax.f32 %v2248, %v2453
      %v2518 = vmax.f32 %v2277, %v2454
      %v2519 = vmax.f32 %v2306, %v2455
      %v2520 = vmax.f32 %v2335, %v2456
      %v2521 = vmax.f32 %v2364, %v2457
      %v2522 = vmax.f32 %v2393, %v2458
      %v2523 = vmax.f32 %v2422, %v2459
      %v2524 = vmax.f32 %v2221, %v2460
      %v2525 = vmax.f32 %v2250, %v2461
      %v2526 = vmax.f32 %v2279, %v2462
      %v2527 = vmax.f32 %v2308, %v2463
      %v2528 = vmax.f32 %v2337, %v2464
      %v2529 = vmax.f32 %v2366, %v2465
      %v2530 = vmax.f32 %v2395, %v2466
      %v2531 = vmax.f32 %v2424, %v2467
      %v2532 = vmax.f32 %v2224, %v2468
      %v2533 = vmax.f32 %v2253, %v2469
      %v2534 = vmax.f32 %v2282, %v2470
      %v2535 = vmax.f32 %v2311, %v2471
      %v2536 = vmax.f32 %v2340, %v2472
      %v2537 = vmax.f32 %v2369, %v2473
      %v2538 = vmax.f32 %v2398, %v2474
      %v2539 = vmax.f32 %v2427, %v2475
      %v2540 = vmax.f32 %v2226, %v2476
      %v2541 = vmax.f32 %v2255, %v2477
      %v2542 = vmax.f32 %v2284, %v2478
      %v2543 = vmax.f32 %v2313, %v2479
      %v2544 = vmax.f32 %v2342, %v2480
      %v2545 = vmax.f32 %v2371, %v2481
      %v2546 = vmax.f32 %v2400, %v2482
      %v2547 = vmax.f32 %v2429, %v2483
      %v2548 = vmax.f32 %v2229, %v2484
      %v2549 = vmax.f32 %v2258, %v2485
      %v2550 = vmax.f32 %v2287, %v2486
      %v2551 = vmax.f32 %v2316, %v2487
      %v2552 = vmax.f32 %v2345, %v2488
      %v2553 = vmax.f32 %v2374, %v2489
      %v2554 = vmax.f32 %v2403, %v2490
      %v2555 = vmax.f32 %v2432, %v2491
      %v2556 = vmax.f32 %v2231, %v2492
      %v2557 = vmax.f32 %v2260, %v2493
      %v2558 = vmax.f32 %v2289, %v2494
      %v2559 = vmax.f32 %v2318, %v2495
      %v2560 = vmax.f32 %v2347, %v2496
      %v2561 = vmax.f32 %v2376, %v2497
      %v2562 = vmax.f32 %v2405, %v2498
      %v2563 = vmax.f32 %v2434, %v2499
      %v2564 = vpack.c.bf16 %v2508, %v2500
      %v2565 = vpack.c.bf16 %v2509, %v2501
      %v2566 = vpack.c.bf16 %v2510, %v2502
      %v2567 = vpack.c.bf16 %v2511, %v2503
      %v2568 = vpack.c.bf16 %v2512, %v2504
      %v2569 = vpack.c.bf16 %v2513, %v2505
      %v2570 = vpack.c.bf16 %v2514, %v2506
      %v2571 = vpack.c.bf16 %v2515, %v2507
      %v2572 = vpack.c.bf16 %v2524, %v2516
      %v2573 = vpack.c.bf16 %v2525, %v2517
      %v2574 = vpack.c.bf16 %v2526, %v2518
      %v2575 = vpack.c.bf16 %v2527, %v2519
      %v2576 = vpack.c.bf16 %v2528, %v2520
      %v2577 = vpack.c.bf16 %v2529, %v2521
      %v2578 = vpack.c.bf16 %v2530, %v2522
      %v2579 = vpack.c.bf16 %v2531, %v2523
      %v2580 = vpack.c.bf16 %v2540, %v2532
      %v2581 = vpack.c.bf16 %v2541, %v2533
      %v2582 = vpack.c.bf16 %v2542, %v2534
      %v2583 = vpack.c.bf16 %v2543, %v2535
      %v2584 = vpack.c.bf16 %v2544, %v2536
      %v2585 = vpack.c.bf16 %v2545, %v2537
      %v2586 = vpack.c.bf16 %v2546, %v2538
      %v2587 = vpack.c.bf16 %v2547, %v2539
      %v2588 = vpack.c.bf16 %v2556, %v2548
      %v2589 = vpack.c.bf16 %v2557, %v2549
      %v2590 = vpack.c.bf16 %v2558, %v2550
      %v2591 = vpack.c.bf16 %v2559, %v2551
      %v2592 = vpack.c.bf16 %v2560, %v2552
      %v2593 = vpack.c.bf16 %v2561, %v2553
      %v2594 = vpack.c.bf16 %v2562, %v2554
      %v2595 = vpack.c.bf16 %v2563, %v2555
      %v2596 = vld [vmem:[%s7] sm:$0xf]
      %v2597 = vld [vmem:[%s7 + $0x4] sm:$0xf]
      %v2598 = vld [vmem:[%s7 + $0x8] sm:$0xf]
      %v2599 = vld [vmem:[%s7 + $0xc] sm:$0xf]
      %v2600 = vld [vmem:[%s8] sm:$0xff]
      %v2601 = vld [vmem:[%s8 + $0x8] sm:$0xff]
      %v2602 = vld [vmem:[%s8 + $0x10] sm:$0xff]
      %v2603 = vld [vmem:[%s8 + $0x18] sm:$0xff]
      %2605 = vset.pattern.permute.xlu0 0
      %2606 = vperm.xlu0 %2605, %v2600
      %v2607 = vpop.permute.xlu0 %2606
      %2610 = vset.pattern.permute.xlu0 0
      %2611 = vperm.xlu0 %2610, %v2601
      %v2612 = vpop.permute.xlu0 %2611
      %2615 = vset.pattern.permute.xlu0 0
      %2616 = vperm.xlu0 %2615, %v2602
      %v2617 = vpop.permute.xlu0 %2616
      %2620 = vset.pattern.permute.xlu0 0
      %2621 = vperm.xlu0 %2620, %v2603
      %v2622 = vpop.permute.xlu0 %2621
      %v2628 = vunpack.c.l.b16 %v2596
      %v2629 = vunpack.c.l.b16 %v2597
      %v2630 = vunpack.c.l.b16 %v2598
      %v2631 = vunpack.c.l.b16 %v2599
      %v2632 = vpack.c.b16 %v2629, %v2628
      %v2633 = vpack.c.b16 %v2631, %v2630
      %v2635 = vsel %vm1390, %v2632, 0
      %v2638 = vsel %vm1390, %v2633, 0
      %2640 = vmatpush.bf16.msra.mxu0 0
      %2641 = vmatpush.bf16.msra.mxu0 0
      %2642 = vmatpush.bf16.msra.mxu0 0
      %2643 = vmatpush.bf16.msra.mxu0 0
      %2644 = vmatpush.bf16.msra.mxu0 %v2588
      %2645 = vmatpush.bf16.msra.mxu0 %v2580
      %2646 = vmatpush.bf16.msra.mxu0 %v2572
      %2647 = vmatpush.bf16.msra.mxu0 %v2564
      %2648 = vmatmul.bf16.gmra.mxu0 %v2635
      %v2649 = vpop.f32.mrf.mxu0
      %v2650 = vadd.f32 %v2607, %v2649
      %v2651 = vpop.f32.mrf.mxu0
      %v2652 = vadd.f32 %v2612, %v2651
      %2653 = vmatmul.bf16.gmra.mxu0 %v2638
      %v2654 = vpop.f32.mrf.mxu0
      %v2655 = vadd.f32 %v2617, %v2654
      %v2656 = vpop.f32.mrf.mxu0
      %v2657 = vadd.f32 %v2622, %v2656
      %2658 = vdwg.mxu0
      %2659 = vmatpush.bf16.msra.mxu0 0
      %2660 = vmatpush.bf16.msra.mxu0 0
      %2661 = vmatpush.bf16.msra.mxu0 0
      %2662 = vmatpush.bf16.msra.mxu0 0
      %2663 = vmatpush.bf16.msra.mxu0 %v2589
      %2664 = vmatpush.bf16.msra.mxu0 %v2581
      %2665 = vmatpush.bf16.msra.mxu0 %v2573
      %2666 = vmatpush.bf16.msra.mxu0 %v2565
      %2667 = vmatmul.bf16.gmra.mxu0 %v2635
      %v2668 = vpop.f32.mrf.mxu0
      %v2669 = vadd.f32 %v2607, %v2668
      %v2670 = vpop.f32.mrf.mxu0
      %v2671 = vadd.f32 %v2612, %v2670
      %2672 = vmatmul.bf16.gmra.mxu0 %v2638
      %v2673 = vpop.f32.mrf.mxu0
      %v2674 = vadd.f32 %v2617, %v2673
      %v2675 = vpop.f32.mrf.mxu0
      %v2676 = vadd.f32 %v2622, %v2675
      %2677 = vdwg.mxu0
      %2678 = vmatpush.bf16.msra.mxu0 0
      %2679 = vmatpush.bf16.msra.mxu0 0
      %2680 = vmatpush.bf16.msra.mxu0 0
      %2681 = vmatpush.bf16.msra.mxu0 0
      %2682 = vmatpush.bf16.msra.mxu0 %v2590
      %2683 = vmatpush.bf16.msra.mxu0 %v2582
      %2684 = vmatpush.bf16.msra.mxu0 %v2574
      %2685 = vmatpush.bf16.msra.mxu0 %v2566
      %2686 = vmatmul.bf16.gmra.mxu0 %v2635
      %v2687 = vpop.f32.mrf.mxu0
      %v2688 = vadd.f32 %v2607, %v2687
      %v2689 = vpop.f32.mrf.mxu0
      %v2690 = vadd.f32 %v2612, %v2689
      %2691 = vmatmul.bf16.gmra.mxu0 %v2638
      %v2692 = vpop.f32.mrf.mxu0
      %v2693 = vadd.f32 %v2617, %v2692
      %v2694 = vpop.f32.mrf.mxu0
      %v2695 = vadd.f32 %v2622, %v2694
      %2696 = vdwg.mxu0
      %2697 = vmatpush.bf16.msra.mxu0 0
      %2698 = vmatpush.bf16.msra.mxu0 0
      %2699 = vmatpush.bf16.msra.mxu0 0
      %2700 = vmatpush.bf16.msra.mxu0 0
      %2701 = vmatpush.bf16.msra.mxu0 %v2591
      %2702 = vmatpush.bf16.msra.mxu0 %v2583
      %2703 = vmatpush.bf16.msra.mxu0 %v2575
      %2704 = vmatpush.bf16.msra.mxu0 %v2567
      %2705 = vmatmul.bf16.gmra.mxu0 %v2635
      %v2706 = vpop.f32.mrf.mxu0
      %v2707 = vadd.f32 %v2607, %v2706
      %v2708 = vpop.f32.mrf.mxu0
      %v2709 = vadd.f32 %v2612, %v2708
      %2710 = vmatmul.bf16.gmra.mxu0 %v2638
      %v2711 = vpop.f32.mrf.mxu0
      %v2712 = vadd.f32 %v2617, %v2711
      %v2713 = vpop.f32.mrf.mxu0
      %v2714 = vadd.f32 %v2622, %v2713
      %2715 = vdwg.mxu0
      %2716 = vmatpush.bf16.msra.mxu0 0
      %2717 = vmatpush.bf16.msra.mxu0 0
      %2718 = vmatpush.bf16.msra.mxu0 0
      %2719 = vmatpush.bf16.msra.mxu0 0
      %2720 = vmatpush.bf16.msra.mxu0 %v2592
      %2721 = vmatpush.bf16.msra.mxu0 %v2584
      %2722 = vmatpush.bf16.msra.mxu0 %v2576
      %2723 = vmatpush.bf16.msra.mxu0 %v2568
      %2724 = vmatmul.bf16.gmra.mxu0 %v2635
      %v2725 = vpop.f32.mrf.mxu0
      %v2726 = vadd.f32 %v2607, %v2725
      %v2727 = vpop.f32.mrf.mxu0
      %v2728 = vadd.f32 %v2612, %v2727
      %2729 = vmatmul.bf16.gmra.mxu0 %v2638
      %v2730 = vpop.f32.mrf.mxu0
      %v2731 = vadd.f32 %v2617, %v2730
      %v2732 = vpop.f32.mrf.mxu0
      %v2733 = vadd.f32 %v2622, %v2732
      %2734 = vdwg.mxu0
      %2735 = vmatpush.bf16.msra.mxu0 0
      %2736 = vmatpush.bf16.msra.mxu0 0
      %2737 = vmatpush.bf16.msra.mxu0 0
      %2738 = vmatpush.bf16.msra.mxu0 0
      %2739 = vmatpush.bf16.msra.mxu0 %v2593
      %2740 = vmatpush.bf16.msra.mxu0 %v2585
      %2741 = vmatpush.bf16.msra.mxu0 %v2577
      %2742 = vmatpush.bf16.msra.mxu0 %v2569
      %2743 = vmatmul.bf16.gmra.mxu0 %v2635
      %v2744 = vpop.f32.mrf.mxu0
      %v2745 = vadd.f32 %v2607, %v2744
      %v2746 = vpop.f32.mrf.mxu0
      %v2747 = vadd.f32 %v2612, %v2746
      %2748 = vmatmul.bf16.gmra.mxu0 %v2638
      %v2749 = vpop.f32.mrf.mxu0
      %v2750 = vadd.f32 %v2617, %v2749
      %v2751 = vpop.f32.mrf.mxu0
      %v2752 = vadd.f32 %v2622, %v2751
      %2753 = vdwg.mxu0
      %2754 = vmatpush.bf16.msra.mxu0 0
      %2755 = vmatpush.bf16.msra.mxu0 0
      %2756 = vmatpush.bf16.msra.mxu0 0
      %2757 = vmatpush.bf16.msra.mxu0 0
      %2758 = vmatpush.bf16.msra.mxu0 %v2594
      %2759 = vmatpush.bf16.msra.mxu0 %v2586
      %2760 = vmatpush.bf16.msra.mxu0 %v2578
      %2761 = vmatpush.bf16.msra.mxu0 %v2570
      %2762 = vmatmul.bf16.gmra.mxu0 %v2635
      %v2763 = vpop.f32.mrf.mxu0
      %v2764 = vadd.f32 %v2607, %v2763
      %v2765 = vpop.f32.mrf.mxu0
      %v2766 = vadd.f32 %v2612, %v2765
      %2767 = vmatmul.bf16.gmra.mxu0 %v2638
      %v2768 = vpop.f32.mrf.mxu0
      %v2769 = vadd.f32 %v2617, %v2768
      %v2770 = vpop.f32.mrf.mxu0
      %v2771 = vadd.f32 %v2622, %v2770
      %2772 = vdwg.mxu0
      %2773 = vmatpush.bf16.msra.mxu0 0
      %2774 = vmatpush.bf16.msra.mxu0 0
      %2775 = vmatpush.bf16.msra.mxu0 0
      %2776 = vmatpush.bf16.msra.mxu0 0
      %2777 = vmatpush.bf16.msra.mxu0 %v2595
      %2778 = vmatpush.bf16.msra.mxu0 %v2587
      %2779 = vmatpush.bf16.msra.mxu0 %v2579
      %2780 = vmatpush.bf16.msra.mxu0 %v2571
      %2781 = vmatmul.bf16.gmra.mxu0 %v2635
      %v2782 = vpop.f32.mrf.mxu0
      %v2783 = vadd.f32 %v2607, %v2782
      %v2784 = vpop.f32.mrf.mxu0
      %v2785 = vadd.f32 %v2612, %v2784
      %2786 = vmatmul.bf16.gmra.mxu0 %v2638
      %v2787 = vpop.f32.mrf.mxu0
      %v2788 = vadd.f32 %v2617, %v2787
      %v2789 = vpop.f32.mrf.mxu0
      %v2790 = vadd.f32 %v2622, %v2789
      %2791 = vdwg.mxu0
      %2792 = vxpose.xlu0.b32.start [1/16] %v2650, 128
      %2793 = vxpose.xlu0.b32.cont [2/16] %v2652, 128
      %2794 = vxpose.xlu0.b32.cont [3/16] %v2655, 128
      %2795 = vxpose.xlu0.b32.cont [4/16] %v2657, 128
      %2796 = vxpose.xlu0.b32.cont [5/16] 0.0, 128
      %2797 = vxpose.xlu0.b32.cont [6/16] 0.0, 128
      %2798 = vxpose.xlu0.b32.cont [7/16] 0.0, 128
      %2799 = vxpose.xlu0.b32.cont [8/16] 0.0, 128
      %2800 = vxpose.xlu0.b32.cont [9/16] 0.0, 128
      %2801 = vxpose.xlu0.b32.cont [10/16] 0.0, 128
      %2802 = vxpose.xlu0.b32.cont [11/16] 0.0, 128
      %2803 = vxpose.xlu0.b32.cont [12/16] 0.0, 128
      %2804 = vxpose.xlu0.b32.cont [13/16] 0.0, 128
      %2805 = vxpose.xlu0.b32.cont [14/16] 0.0, 128
      %2806 = vxpose.xlu0.b32.cont [15/16] 0.0, 128
      %2807 = vxpose.xlu0.b32.end [16/16] 0.0, 128
      %v2808 = vpop.trf.xlu0
      %v2809 = vpop.trf.xlu0
      %v2810 = vpop.trf.xlu0
      %v2811 = vpop.trf.xlu0
      %v2812 = vpop.trf.xlu0
      %v2813 = vpop.trf.xlu0
      %v2814 = vpop.trf.xlu0
      %v2815 = vpop.trf.xlu0
      %v2816 = vpop.trf.xlu0
      %v2817 = vpop.trf.xlu0
      %v2818 = vpop.trf.xlu0
      %v2819 = vpop.trf.xlu0
      %v2820 = vpop.trf.xlu0
      %v2821 = vpop.trf.xlu0
      %v2822 = vpop.trf.xlu0
      %v2823 = vpop.trf.xlu0
      %2824 = vxpose.xlu0.b32.start [1/16] %v2669, 128
      %2825 = vxpose.xlu0.b32.cont [2/16] %v2671, 128
      %2826 = vxpose.xlu0.b32.cont [3/16] %v2674, 128
      %2827 = vxpose.xlu0.b32.cont [4/16] %v2676, 128
      %2828 = vxpose.xlu0.b32.cont [5/16] 0.0, 128
      %2829 = vxpose.xlu0.b32.cont [6/16] 0.0, 128
      %2830 = vxpose.xlu0.b32.cont [7/16] 0.0, 128
      %2831 = vxpose.xlu0.b32.cont [8/16] 0.0, 128
      %2832 = vxpose.xlu0.b32.cont [9/16] 0.0, 128
      %2833 = vxpose.xlu0.b32.cont [10/16] 0.0, 128
      %2834 = vxpose.xlu0.b32.cont [11/16] 0.0, 128
      %2835 = vxpose.xlu0.b32.cont [12/16] 0.0, 128
      %2836 = vxpose.xlu0.b32.cont [13/16] 0.0, 128
      %2837 = vxpose.xlu0.b32.cont [14/16] 0.0, 128
      %2838 = vxpose.xlu0.b32.cont [15/16] 0.0, 128
      %2839 = vxpose.xlu0.b32.end [16/16] 0.0, 128
      %v2840 = vpop.trf.xlu0
      %v2841 = vpop.trf.xlu0
      %v2842 = vpop.trf.xlu0
      %v2843 = vpop.trf.xlu0
      %v2844 = vpop.trf.xlu0
      %v2845 = vpop.trf.xlu0
      %v2846 = vpop.trf.xlu0
      %v2847 = vpop.trf.xlu0
      %v2848 = vpop.trf.xlu0
      %v2849 = vpop.trf.xlu0
      %v2850 = vpop.trf.xlu0
      %v2851 = vpop.trf.xlu0
      %v2852 = vpop.trf.xlu0
      %v2853 = vpop.trf.xlu0
      %v2854 = vpop.trf.xlu0
      %v2855 = vpop.trf.xlu0
      %2856 = vxpose.xlu0.b32.start [1/16] %v2688, 128
      %2857 = vxpose.xlu0.b32.cont [2/16] %v2690, 128
      %2858 = vxpose.xlu0.b32.cont [3/16] %v2693, 128
      %2859 = vxpose.xlu0.b32.cont [4/16] %v2695, 128
      %2860 = vxpose.xlu0.b32.cont [5/16] 0.0, 128
      %2861 = vxpose.xlu0.b32.cont [6/16] 0.0, 128
      %2862 = vxpose.xlu0.b32.cont [7/16] 0.0, 128
      %2863 = vxpose.xlu0.b32.cont [8/16] 0.0, 128
      %2864 = vxpose.xlu0.b32.cont [9/16] 0.0, 128
      %2865 = vxpose.xlu0.b32.cont [10/16] 0.0, 128
      %2866 = vxpose.xlu0.b32.cont [11/16] 0.0, 128
      %2867 = vxpose.xlu0.b32.cont [12/16] 0.0, 128
      %2868 = vxpose.xlu0.b32.cont [13/16] 0.0, 128
      %2869 = vxpose.xlu0.b32.cont [14/16] 0.0, 128
      %2870 = vxpose.xlu0.b32.cont [15/16] 0.0, 128
      %2871 = vxpose.xlu0.b32.end [16/16] 0.0, 128
      %v2872 = vpop.trf.xlu0
      %v2873 = vpop.trf.xlu0
      %v2874 = vpop.trf.xlu0
      %v2875 = vpop.trf.xlu0
      %v2876 = vpop.trf.xlu0
      %v2877 = vpop.trf.xlu0
      %v2878 = vpop.trf.xlu0
      %v2879 = vpop.trf.xlu0
      %v2880 = vpop.trf.xlu0
      %v2881 = vpop.trf.xlu0
      %v2882 = vpop.trf.xlu0
      %v2883 = vpop.trf.xlu0
      %v2884 = vpop.trf.xlu0
      %v2885 = vpop.trf.xlu0
      %v2886 = vpop.trf.xlu0
      %v2887 = vpop.trf.xlu0
      %2888 = vxpose.xlu0.b32.start [1/16] %v2707, 128
      %2889 = vxpose.xlu0.b32.cont [2/16] %v2709, 128
      %2890 = vxpose.xlu0.b32.cont [3/16] %v2712, 128
      %2891 = vxpose.xlu0.b32.cont [4/16] %v2714, 128
      %2892 = vxpose.xlu0.b32.cont [5/16] 0.0, 128
      %2893 = vxpose.xlu0.b32.cont [6/16] 0.0, 128
      %2894 = vxpose.xlu0.b32.cont [7/16] 0.0, 128
      %2895 = vxpose.xlu0.b32.cont [8/16] 0.0, 128
      %2896 = vxpose.xlu0.b32.cont [9/16] 0.0, 128
      %2897 = vxpose.xlu0.b32.cont [10/16] 0.0, 128
      %2898 = vxpose.xlu0.b32.cont [11/16] 0.0, 128
      %2899 = vxpose.xlu0.b32.cont [12/16] 0.0, 128
      %2900 = vxpose.xlu0.b32.cont [13/16] 0.0, 128
      %2901 = vxpose.xlu0.b32.cont [14/16] 0.0, 128
      %2902 = vxpose.xlu0.b32.cont [15/16] 0.0, 128
      %2903 = vxpose.xlu0.b32.end [16/16] 0.0, 128
      %v2904 = vpop.trf.xlu0
      %v2905 = vpop.trf.xlu0
      %v2906 = vpop.trf.xlu0
      %v2907 = vpop.trf.xlu0
      %v2908 = vpop.trf.xlu0
      %v2909 = vpop.trf.xlu0
      %v2910 = vpop.trf.xlu0
      %v2911 = vpop.trf.xlu0
      %v2912 = vpop.trf.xlu0
      %v2913 = vpop.trf.xlu0
      %v2914 = vpop.trf.xlu0
      %v2915 = vpop.trf.xlu0
      %v2916 = vpop.trf.xlu0
      %v2917 = vpop.trf.xlu0
      %v2918 = vpop.trf.xlu0
      %v2919 = vpop.trf.xlu0
      %2920 = vxpose.xlu0.b32.start [1/16] %v2726, 128
      %2921 = vxpose.xlu0.b32.cont [2/16] %v2728, 128
      %2922 = vxpose.xlu0.b32.cont [3/16] %v2731, 128
      %2923 = vxpose.xlu0.b32.cont [4/16] %v2733, 128
      %2924 = vxpose.xlu0.b32.cont [5/16] 0.0, 128
      %2925 = vxpose.xlu0.b32.cont [6/16] 0.0, 128
      %2926 = vxpose.xlu0.b32.cont [7/16] 0.0, 128
      %2927 = vxpose.xlu0.b32.cont [8/16] 0.0, 128
      %2928 = vxpose.xlu0.b32.cont [9/16] 0.0, 128
      %2929 = vxpose.xlu0.b32.cont [10/16] 0.0, 128
      %2930 = vxpose.xlu0.b32.cont [11/16] 0.0, 128
      %2931 = vxpose.xlu0.b32.cont [12/16] 0.0, 128
      %2932 = vxpose.xlu0.b32.cont [13/16] 0.0, 128
      %2933 = vxpose.xlu0.b32.cont [14/16] 0.0, 128
      %2934 = vxpose.xlu0.b32.cont [15/16] 0.0, 128
      %2935 = vxpose.xlu0.b32.end [16/16] 0.0, 128
      %v2936 = vpop.trf.xlu0
      %v2937 = vpop.trf.xlu0
      %v2938 = vpop.trf.xlu0
      %v2939 = vpop.trf.xlu0
      %v2940 = vpop.trf.xlu0
      %v2941 = vpop.trf.xlu0
      %v2942 = vpop.trf.xlu0
      %v2943 = vpop.trf.xlu0
      %v2944 = vpop.trf.xlu0
      %v2945 = vpop.trf.xlu0
      %v2946 = vpop.trf.xlu0
      %v2947 = vpop.trf.xlu0
      %v2948 = vpop.trf.xlu0
      %v2949 = vpop.trf.xlu0
      %v2950 = vpop.trf.xlu0
      %v2951 = vpop.trf.xlu0
      %2952 = vxpose.xlu0.b32.start [1/16] %v2745, 128
      %2953 = vxpose.xlu0.b32.cont [2/16] %v2747, 128
      %2954 = vxpose.xlu0.b32.cont [3/16] %v2750, 128
      %2955 = vxpose.xlu0.b32.cont [4/16] %v2752, 128
      %2956 = vxpose.xlu0.b32.cont [5/16] 0.0, 128
      %2957 = vxpose.xlu0.b32.cont [6/16] 0.0, 128
      %2958 = vxpose.xlu0.b32.cont [7/16] 0.0, 128
      %2959 = vxpose.xlu0.b32.cont [8/16] 0.0, 128
      %2960 = vxpose.xlu0.b32.cont [9/16] 0.0, 128
      %2961 = vxpose.xlu0.b32.cont [10/16] 0.0, 128
      %2962 = vxpose.xlu0.b32.cont [11/16] 0.0, 128
      %2963 = vxpose.xlu0.b32.cont [12/16] 0.0, 128
      %2964 = vxpose.xlu0.b32.cont [13/16] 0.0, 128
      %2965 = vxpose.xlu0.b32.cont [14/16] 0.0, 128
      %2966 = vxpose.xlu0.b32.cont [15/16] 0.0, 128
      %2967 = vxpose.xlu0.b32.end [16/16] 0.0, 128
      %v2968 = vpop.trf.xlu0
      %v2969 = vpop.trf.xlu0
      %v2970 = vpop.trf.xlu0
      %v2971 = vpop.trf.xlu0
      %v2972 = vpop.trf.xlu0
      %v2973 = vpop.trf.xlu0
      %v2974 = vpop.trf.xlu0
      %v2975 = vpop.trf.xlu0
      %v2976 = vpop.trf.xlu0
      %v2977 = vpop.trf.xlu0
      %v2978 = vpop.trf.xlu0
      %v2979 = vpop.trf.xlu0
      %v2980 = vpop.trf.xlu0
      %v2981 = vpop.trf.xlu0
      %v2982 = vpop.trf.xlu0
      %v2983 = vpop.trf.xlu0
      %2984 = vxpose.xlu0.b32.start [1/16] %v2764, 128
      %2985 = vxpose.xlu0.b32.cont [2/16] %v2766, 128
      %2986 = vxpose.xlu0.b32.cont [3/16] %v2769, 128
      %2987 = vxpose.xlu0.b32.cont [4/16] %v2771, 128
      %2988 = vxpose.xlu0.b32.cont [5/16] 0.0, 128
      %2989 = vxpose.xlu0.b32.cont [6/16] 0.0, 128
      %2990 = vxpose.xlu0.b32.cont [7/16] 0.0, 128
      %2991 = vxpose.xlu0.b32.cont [8/16] 0.0, 128
      %2992 = vxpose.xlu0.b32.cont [9/16] 0.0, 128
      %2993 = vxpose.xlu0.b32.cont [10/16] 0.0, 128
      %2994 = vxpose.xlu0.b32.cont [11/16] 0.0, 128
      %2995 = vxpose.xlu0.b32.cont [12/16] 0.0, 128
      %2996 = vxpose.xlu0.b32.cont [13/16] 0.0, 128
      %2997 = vxpose.xlu0.b32.cont [14/16] 0.0, 128
      %2998 = vxpose.xlu0.b32.cont [15/16] 0.0, 128
      %2999 = vxpose.xlu0.b32.end [16/16] 0.0, 128
      %v3000 = vpop.trf.xlu0
      %v3001 = vpop.trf.xlu0
      %v3002 = vpop.trf.xlu0
      %v3003 = vpop.trf.xlu0
      %v3004 = vpop.trf.xlu0
      %v3005 = vpop.trf.xlu0
      %v3006 = vpop.trf.xlu0
      %v3007 = vpop.trf.xlu0
      %v3008 = vpop.trf.xlu0
      %v3009 = vpop.trf.xlu0
      %v3010 = vpop.trf.xlu0
      %v3011 = vpop.trf.xlu0
      %v3012 = vpop.trf.xlu0
      %v3013 = vpop.trf.xlu0
      %v3014 = vpop.trf.xlu0
      %v3015 = vpop.trf.xlu0
      %3016 = vxpose.xlu0.b32.start [1/16] %v2783, 128
      %3017 = vxpose.xlu0.b32.cont [2/16] %v2785, 128
      %3018 = vxpose.xlu0.b32.cont [3/16] %v2788, 128
      %3019 = vxpose.xlu0.b32.cont [4/16] %v2790, 128
      %3020 = vxpose.xlu0.b32.cont [5/16] 0.0, 128
      %3021 = vxpose.xlu0.b32.cont [6/16] 0.0, 128
      %3022 = vxpose.xlu0.b32.cont [7/16] 0.0, 128
      %3023 = vxpose.xlu0.b32.cont [8/16] 0.0, 128
      %3024 = vxpose.xlu0.b32.cont [9/16] 0.0, 128
      %3025 = vxpose.xlu0.b32.cont [10/16] 0.0, 128
      %3026 = vxpose.xlu0.b32.cont [11/16] 0.0, 128
      %3027 = vxpose.xlu0.b32.cont [12/16] 0.0, 128
      %3028 = vxpose.xlu0.b32.cont [13/16] 0.0, 128
      %3029 = vxpose.xlu0.b32.cont [14/16] 0.0, 128
      %3030 = vxpose.xlu0.b32.cont [15/16] 0.0, 128
      %3031 = vxpose.xlu0.b32.end [16/16] 0.0, 128
      %v3032 = vpop.trf.xlu0
      %v3033 = vpop.trf.xlu0
      %v3034 = vpop.trf.xlu0
      %v3035 = vpop.trf.xlu0
      %v3036 = vpop.trf.xlu0
      %v3037 = vpop.trf.xlu0
      %v3038 = vpop.trf.xlu0
      %v3039 = vpop.trf.xlu0
      %v3040 = vpop.trf.xlu0
      %v3041 = vpop.trf.xlu0
      %v3042 = vpop.trf.xlu0
      %v3043 = vpop.trf.xlu0
      %v3044 = vpop.trf.xlu0
      %v3045 = vpop.trf.xlu0
      %v3046 = vpop.trf.xlu0
      %v3047 = vpop.trf.xlu0
      %3048 = vst.msk [vmem:[%s334] sm:$0xff] %vm909, %v2808
      %3049 = vst.msk [vmem:[%s334 + $0x8] sm:$0xff] %vm909, %v2809
      %3050 = vst.msk [vmem:[%s334 + $0x10] sm:$0xff] %vm909, %v2810
      %3051 = vst.msk [vmem:[%s334 + $0x18] sm:$0xff] %vm909, %v2811
      %3052 = vst.msk [vmem:[%s334 + $0x20] sm:$0xff] %vm909, %v2812
      %3053 = vst.msk [vmem:[%s334 + $0x28] sm:$0xff] %vm909, %v2813
      %3054 = vst.msk [vmem:[%s334 + $0x30] sm:$0xff] %vm909, %v2814
      %3055 = vst.msk [vmem:[%s334 + $0x38] sm:$0xff] %vm909, %v2815
      %3056 = vst.msk [vmem:[%s334 + $0x40] sm:$0xff] %vm909, %v2816
      %3057 = vst.msk [vmem:[%s334 + $0x48] sm:$0xff] %vm909, %v2817
      %3058 = vst.msk [vmem:[%s334 + $0x50] sm:$0xff] %vm909, %v2818
      %3059 = vst.msk [vmem:[%s334 + $0x58] sm:$0xff] %vm909, %v2819
      %3060 = vst.msk [vmem:[%s334 + $0x60] sm:$0xff] %vm909, %v2820
      %3061 = vst.msk [vmem:[%s334 + $0x68] sm:$0xff] %vm909, %v2821
      %3062 = vst.msk [vmem:[%s334 + $0x70] sm:$0xff] %vm909, %v2822
      %3063 = vst.msk [vmem:[%s334 + $0x78] sm:$0xff] %vm909, %v2823
      %3064 = vst.msk [vmem:[%s334 + $0x80] sm:$0xff] %vm909, %v2840
      %3065 = vst.msk [vmem:[%s334 + $0x88] sm:$0xff] %vm909, %v2841
      %3066 = vst.msk [vmem:[%s334 + $0x90] sm:$0xff] %vm909, %v2842
      %3067 = vst.msk [vmem:[%s334 + $0x98] sm:$0xff] %vm909, %v2843
      %3068 = vst.msk [vmem:[%s334 + $0xa0] sm:$0xff] %vm909, %v2844
      %3069 = vst.msk [vmem:[%s334 + $0xa8] sm:$0xff] %vm909, %v2845
      %3070 = vst.msk [vmem:[%s334 + $0xb0] sm:$0xff] %vm909, %v2846
      %3071 = vst.msk [vmem:[%s334 + $0xb8] sm:$0xff] %vm909, %v2847
      %3072 = vst.msk [vmem:[%s334 + $0xc0] sm:$0xff] %vm909, %v2848
      %3073 = vst.msk [vmem:[%s334 + $0xc8] sm:$0xff] %vm909, %v2849
      %3074 = vst.msk [vmem:[%s334 + $0xd0] sm:$0xff] %vm909, %v2850
      %3075 = vst.msk [vmem:[%s334 + $0xd8] sm:$0xff] %vm909, %v2851
      %3076 = vst.msk [vmem:[%s334 + $0xe0] sm:$0xff] %vm909, %v2852
      %3077 = vst.msk [vmem:[%s334 + $0xe8] sm:$0xff] %vm909, %v2853
      %3078 = vst.msk [vmem:[%s334 + $0xf0] sm:$0xff] %vm909, %v2854
      %3079 = vst.msk [vmem:[%s334 + $0xf8] sm:$0xff] %vm909, %v2855
      %3080 = vst.msk [vmem:[%s334 + $0x100] sm:$0xff] %vm909, %v2872
      %3081 = vst.msk [vmem:[%s334 + $0x108] sm:$0xff] %vm909, %v2873
      %3082 = vst.msk [vmem:[%s334 + $0x110] sm:$0xff] %vm909, %v2874
      %3083 = vst.msk [vmem:[%s334 + $0x118] sm:$0xff] %vm909, %v2875
      %3084 = vst.msk [vmem:[%s334 + $0x120] sm:$0xff] %vm909, %v2876
      %3085 = vst.msk [vmem:[%s334 + $0x128] sm:$0xff] %vm909, %v2877
      %3086 = vst.msk [vmem:[%s334 + $0x130] sm:$0xff] %vm909, %v2878
      %3087 = vst.msk [vmem:[%s334 + $0x138] sm:$0xff] %vm909, %v2879
      %3088 = vst.msk [vmem:[%s334 + $0x140] sm:$0xff] %vm909, %v2880
      %3089 = vst.msk [vmem:[%s334 + $0x148] sm:$0xff] %vm909, %v2881
      %3090 = vst.msk [vmem:[%s334 + $0x150] sm:$0xff] %vm909, %v2882
      %3091 = vst.msk [vmem:[%s334 + $0x158] sm:$0xff] %vm909, %v2883
      %3092 = vst.msk [vmem:[%s334 + $0x160] sm:$0xff] %vm909, %v2884
      %3093 = vst.msk [vmem:[%s334 + $0x168] sm:$0xff] %vm909, %v2885
      %3094 = vst.msk [vmem:[%s334 + $0x170] sm:$0xff] %vm909, %v2886
      %3095 = vst.msk [vmem:[%s334 + $0x178] sm:$0xff] %vm909, %v2887
      %3096 = vst.msk [vmem:[%s334 + $0x180] sm:$0xff] %vm909, %v2904
      %3097 = vst.msk [vmem:[%s334 + $0x188] sm:$0xff] %vm909, %v2905
      %3098 = vst.msk [vmem:[%s334 + $0x190] sm:$0xff] %vm909, %v2906
      %3099 = vst.msk [vmem:[%s334 + $0x198] sm:$0xff] %vm909, %v2907
      %3100 = vst.msk [vmem:[%s334 + $0x1a0] sm:$0xff] %vm909, %v2908
      %3101 = vst.msk [vmem:[%s334 + $0x1a8] sm:$0xff] %vm909, %v2909
      %3102 = vst.msk [vmem:[%s334 + $0x1b0] sm:$0xff] %vm909, %v2910
      %3103 = vst.msk [vmem:[%s334 + $0x1b8] sm:$0xff] %vm909, %v2911
      %3104 = vst.msk [vmem:[%s334 + $0x1c0] sm:$0xff] %vm909, %v2912
      %3105 = vst.msk [vmem:[%s334 + $0x1c8] sm:$0xff] %vm909, %v2913
      %3106 = vst.msk [vmem:[%s334 + $0x1d0] sm:$0xff] %vm909, %v2914
      %3107 = vst.msk [vmem:[%s334 + $0x1d8] sm:$0xff] %vm909, %v2915
      %3108 = vst.msk [vmem:[%s334 + $0x1e0] sm:$0xff] %vm909, %v2916
      %3109 = vst.msk [vmem:[%s334 + $0x1e8] sm:$0xff] %vm909, %v2917
      %3110 = vst.msk [vmem:[%s334 + $0x1f0] sm:$0xff] %vm909, %v2918
      %3111 = vst.msk [vmem:[%s334 + $0x1f8] sm:$0xff] %vm909, %v2919
      %3112 = vst.msk [vmem:[%s334 + $0x200] sm:$0xff] %vm909, %v2936
      %3113 = vst.msk [vmem:[%s334 + $0x208] sm:$0xff] %vm909, %v2937
      %3114 = vst.msk [vmem:[%s334 + $0x210] sm:$0xff] %vm909, %v2938
      %3115 = vst.msk [vmem:[%s334 + $0x218] sm:$0xff] %vm909, %v2939
      %3116 = vst.msk [vmem:[%s334 + $0x220] sm:$0xff] %vm909, %v2940
      %3117 = vst.msk [vmem:[%s334 + $0x228] sm:$0xff] %vm909, %v2941
      %3118 = vst.msk [vmem:[%s334 + $0x230] sm:$0xff] %vm909, %v2942
      %3119 = vst.msk [vmem:[%s334 + $0x238] sm:$0xff] %vm909, %v2943
      %3120 = vst.msk [vmem:[%s334 + $0x240] sm:$0xff] %vm909, %v2944
      %3121 = vst.msk [vmem:[%s334 + $0x248] sm:$0xff] %vm909, %v2945
      %3122 = vst.msk [vmem:[%s334 + $0x250] sm:$0xff] %vm909, %v2946
      %3123 = vst.msk [vmem:[%s334 + $0x258] sm:$0xff] %vm909, %v2947
      %3124 = vst.msk [vmem:[%s334 + $0x260] sm:$0xff] %vm909, %v2948
      %3125 = vst.msk [vmem:[%s334 + $0x268] sm:$0xff] %vm909, %v2949
      %3126 = vst.msk [vmem:[%s334 + $0x270] sm:$0xff] %vm909, %v2950
      %3127 = vst.msk [vmem:[%s334 + $0x278] sm:$0xff] %vm909, %v2951
      %3128 = vst.msk [vmem:[%s334 + $0x280] sm:$0xff] %vm909, %v2968
      %3129 = vst.msk [vmem:[%s334 + $0x288] sm:$0xff] %vm909, %v2969
      %3130 = vst.msk [vmem:[%s334 + $0x290] sm:$0xff] %vm909, %v2970
      %3131 = vst.msk [vmem:[%s334 + $0x298] sm:$0xff] %vm909, %v2971
      %3132 = vst.msk [vmem:[%s334 + $0x2a0] sm:$0xff] %vm909, %v2972
      %3133 = vst.msk [vmem:[%s334 + $0x2a8] sm:$0xff] %vm909, %v2973
      %3134 = vst.msk [vmem:[%s334 + $0x2b0] sm:$0xff] %vm909, %v2974
      %3135 = vst.msk [vmem:[%s334 + $0x2b8] sm:$0xff] %vm909, %v2975
      %3136 = vst.msk [vmem:[%s334 + $0x2c0] sm:$0xff] %vm909, %v2976
      %3137 = vst.msk [vmem:[%s334 + $0x2c8] sm:$0xff] %vm909, %v2977
      %3138 = vst.msk [vmem:[%s334 + $0x2d0] sm:$0xff] %vm909, %v2978
      %3139 = vst.msk [vmem:[%s334 + $0x2d8] sm:$0xff] %vm909, %v2979
      %3140 = vst.msk [vmem:[%s334 + $0x2e0] sm:$0xff] %vm909, %v2980
      %3141 = vst.msk [vmem:[%s334 + $0x2e8] sm:$0xff] %vm909, %v2981
      %3142 = vst.msk [vmem:[%s334 + $0x2f0] sm:$0xff] %vm909, %v2982
      %3143 = vst.msk [vmem:[%s334 + $0x2f8] sm:$0xff] %vm909, %v2983
      %3144 = vst.msk [vmem:[%s334 + $0x300] sm:$0xff] %vm909, %v3000
      %3145 = vst.msk [vmem:[%s334 + $0x308] sm:$0xff] %vm909, %v3001
      %3146 = vst.msk [vmem:[%s334 + $0x310] sm:$0xff] %vm909, %v3002
      %3147 = vst.msk [vmem:[%s334 + $0x318] sm:$0xff] %vm909, %v3003
      %3148 = vst.msk [vmem:[%s334 + $0x320] sm:$0xff] %vm909, %v3004
      %3149 = vst.msk [vmem:[%s334 + $0x328] sm:$0xff] %vm909, %v3005
      %3150 = vst.msk [vmem:[%s334 + $0x330] sm:$0xff] %vm909, %v3006
      %3151 = vst.msk [vmem:[%s334 + $0x338] sm:$0xff] %vm909, %v3007
      %3152 = vst.msk [vmem:[%s334 + $0x340] sm:$0xff] %vm909, %v3008
      %3153 = vst.msk [vmem:[%s334 + $0x348] sm:$0xff] %vm909, %v3009
      %3154 = vst.msk [vmem:[%s334 + $0x350] sm:$0xff] %vm909, %v3010
      %3155 = vst.msk [vmem:[%s334 + $0x358] sm:$0xff] %vm909, %v3011
      %3156 = vst.msk [vmem:[%s334 + $0x360] sm:$0xff] %vm909, %v3012
      %3157 = vst.msk [vmem:[%s334 + $0x368] sm:$0xff] %vm909, %v3013
      %3158 = vst.msk [vmem:[%s334 + $0x370] sm:$0xff] %vm909, %v3014
      %3159 = vst.msk [vmem:[%s334 + $0x378] sm:$0xff] %vm909, %v3015
      %3160 = vst.msk [vmem:[%s334 + $0x380] sm:$0xff] %vm909, %v3032
      %3161 = vst.msk [vmem:[%s334 + $0x388] sm:$0xff] %vm909, %v3033
      %3162 = vst.msk [vmem:[%s334 + $0x390] sm:$0xff] %vm909, %v3034
      %3163 = vst.msk [vmem:[%s334 + $0x398] sm:$0xff] %vm909, %v3035
      %3164 = vst.msk [vmem:[%s334 + $0x3a0] sm:$0xff] %vm909, %v3036
      %3165 = vst.msk [vmem:[%s334 + $0x3a8] sm:$0xff] %vm909, %v3037
      %3166 = vst.msk [vmem:[%s334 + $0x3b0] sm:$0xff] %vm909, %v3038
      %3167 = vst.msk [vmem:[%s334 + $0x3b8] sm:$0xff] %vm909, %v3039
      %3168 = vst.msk [vmem:[%s334 + $0x3c0] sm:$0xff] %vm909, %v3040
      %3169 = vst.msk [vmem:[%s334 + $0x3c8] sm:$0xff] %vm909, %v3041
      %3170 = vst.msk [vmem:[%s334 + $0x3d0] sm:$0xff] %vm909, %v3042
      %3171 = vst.msk [vmem:[%s334 + $0x3d8] sm:$0xff] %vm909, %v3043
      %3172 = vst.msk [vmem:[%s334 + $0x3e0] sm:$0xff] %vm909, %v3044
      %3173 = vst.msk [vmem:[%s334 + $0x3e8] sm:$0xff] %vm909, %v3045
      %3174 = vst.msk [vmem:[%s334 + $0x3f0] sm:$0xff] %vm909, %v3046
      %3175 = vst.msk [vmem:[%s334 + $0x3f8] sm:$0xff] %vm909, %v3047
      %s3176 = smul.u32 128, %s20
      %p3177 = scmp.lt.s32.totalorder %s3176, 255
      %s3178 = scalar_select %p3177, %s3176, 255
      %s3179 = smul.addr %s3178, 8
      %s3180 = scalar_lea.vmem %s9, %s3179
      // Predicated region
      $region57: #{tpu_custom_call.1} parent=55 // pred_check
        %p3181 = pneg %p232
      $region58: #{tpu_custom_call.1} parent=55 // pred_check_branch
        %3183 = sbr.rel (%p3181) target = $region60
      $region59: #{tpu_custom_call.1} parent=55 // pred_region
        %s3184 = smul.u32 128, %s20
      $region60: #{tpu_custom_call.1} parent=55 // pred_fallthru
        _
    $region56: #{tpu_custom_call.1} parent=5 // pred_fallthru
      _
    %p3185 = scmp.le.s32.totalorder 2, %s15
    // Predicated region
    $region61: #{tpu_custom_call.1} parent=5 // pred_check
      %p3186 = pneg %p3185
    $region62: #{tpu_custom_call.1} parent=5 // pred_check_branch
      %3188 = sbr.rel (%p3186) target = $region64
    $region63: #{tpu_custom_call.1} parent=5 // pred_region
      %s3189 = ssub.s32 %s15, 2
      // Predicated region
      $region65: #{tpu_custom_call.1} parent=63 // pred_check
        %p3190 = pneg %p238
      $region66: #{tpu_custom_call.1} parent=63 // pred_check_branch
        %3192 = sbr.rel (%p3190) target = $region68
      $region67: #{tpu_custom_call.1} parent=63 // pred_region
        %s3193 = smul.u32 128, %s21
        %p3194 = scmp.lt.s32.totalorder %s3193, 255
        %s3195 = scalar_select %p3194, %s3193, 255
        %s3196 = smul.addr %s3195, 8
        %s3197 = scalar_lea.vmem %s9, %s3196
      $region68: #{tpu_custom_call.1} parent=63 // pred_fallthru
        _
    $region64: #{tpu_custom_call.1} parent=5 // pred_fallthru
      _
  $region6: #{tpu_custom_call.1} parent=0 // loop_footer
    %s19 = sadd.s32 1, %s15
  $region7: #{tpu_custom_call.1} parent=0 // loop_footer_branch
    %14 = sbr.rel target = $region3
  $region8: #{tpu_custom_call.1} parent=0 // loop_exit
    _

</llo_original>
